<compile_context>
chip_gen: v6e
topology: v6e:2x2x1
jax: 0.10.0
libtpu: 0.0.40
codegen_flags: <defaults>
</compile_context>

<pallas_src>
import functools

import jax
import jax.numpy as jnp
from jax import lax
from jax.experimental import pallas as pl
from jax.experimental.pallas import tpu as pltpu

EPS = 1e-3
_VMEM = pl.BlockSpec(memory_space=pltpu.MemorySpace.VMEM)


# ------------------------------ fused kernel --------------------------------

def _branch_sep_kernel(xph_ref, dw1_ref, pw1_ref, g1_ref, b1_ref,
                       dw2_ref, pw2_ref, g2_ref, b2_ref,
                       o_ref, y_pad,
                       *, k, s, p, ho, wo, ho2, wo2, mxu_bf16):
    """Fused: ReLU -> dw(k,s) -> 1x1 + BN + ReLU -> dw(k,1) -> 1x1 + BN.

    xph_ref : (s*s, N, Lh, Lw, Cin)  polyphase-padded input (VMEM, one DMA)
    dw*_ref : (k*k, Cin)             depthwise taps (kh-major)
    pw1_ref : (Cin, Cin), pw2_ref : (Cin, Cout)
    g*/b*   : (1, C)                 BN affine
    y_pad   : VMEM scratch (N, ho+2p, wo+2p, Cin) for the intermediate
    """
    n = xph_ref.shape[1]
    cin = xph_ref.shape[-1]
    cout = o_ref.shape[-1]

    def pointwise(a, w_ref):
        w = w_ref[...]
        if mxu_bf16:
            # v6e/v7x: native bf16 MXU, f32 accumulation.
            return jnp.dot(a.astype(jnp.bfloat16), w.astype(jnp.bfloat16),
                           preferred_element_type=jnp.float32)
        return jnp.dot(a, w, preferred_element_type=jnp.float32)

    def batchnorm(y, g_ref, b_ref):
        # one-pass batch statistics (biased var), matches torch train() BN
        mu = jnp.mean(y, axis=0, keepdims=True)
        var = jnp.mean(y * y, axis=0, keepdims=True) - mu * mu
        return (y - mu) * (g_ref[...] * lax.rsqrt(var + EPS)) + b_ref[...]

    # ---- stage 1: ReLU -> depthwise k x k, stride s (polyphase windows) -----
    dw1 = dw1_ref[...]                                   # (k*k, Cin), one load
    acc = jnp.zeros((n, ho, wo, cin), jnp.float32)
    for kh in range(k):
        for kw in range(k):
            phase = (kh % s) * s + (kw % s)
            win = xph_ref[phase, :, pl.ds(kh // s, ho), pl.ds(kw // s, wo), :]
            # ReLU folded per tap (zero padding is ReLU-invariant); VPU slack.
            acc = acc + jnp.maximum(win, 0.0) * dw1[kh * k + kw]

    # ---- stage 1: pointwise 1x1 (MXU) + BN(batch stats) + ReLU --------------
    y = pointwise(acc.reshape(n * ho * wo, cin), pw1_ref)
    y = jnp.maximum(batchnorm(y, g1_ref, b1_ref), 0.0)

    # ---- intermediate stays in VMEM, zero-padded for the second conv --------
    y_pad[...] = jnp.zeros(y_pad.shape, jnp.float32)
    y_pad[:, pl.ds(p, ho), pl.ds(p, wo), :] = y.reshape(n, ho, wo, cin)

    # ---- stage 2: depthwise k x k, stride 1 ---------------------------------
    dw2 = dw2_ref[...]
    acc2 = jnp.zeros((n, ho2, wo2, cin), jnp.float32)
    for kh in range(k):
        for kw in range(k):
            win = y_pad[:, pl.ds(kh, ho2), pl.ds(kw, wo2), :]
            acc2 = acc2 + win * dw2[kh * k + kw]

    # ---- stage 2: pointwise 1x1 + BN ----------------------------------------
    z = pointwise(acc2.reshape(n * ho2 * wo2, cin), pw2_ref)
    z = batchnorm(z, g2_ref, b2_ref)
    o_ref[...] = z.reshape(n, ho2, wo2, cout)


# ------------------------------ wrapper (glue) -------------------------------

@functools.partial(jax.jit, static_argnames=("kernel_size", "stride", "padding",
                                             "specific", "mxu_bf16"))
def branch_separables(x, params, *, kernel_size, stride, padding,
                      specific=False, mxu_bf16=False):
    """NHWC forward of BranchSeparables.  x: (N, H, W, Cin) float32."""
    n, h, w, cin = x.shape
    k, s, p = kernel_size, stride, padding
    cout = params["pw2"].shape[1]

    # Output extent of separable_1 and the effective (asymmetric) padding that
    # folds the 'specific' ZeroPad2d((1,0,1,0)) + crop[1:,1:] analytically.
    if specific:
        ho = (h + 1 + 2 * p - k) // s + 1 - 1
        wo = (w + 1 + 2 * p - k) // s + 1 - 1
        pad_t = pad_l = p + 1 - s
    else:
        ho = (h + 2 * p - k) // s + 1
        wo = (w + 2 * p - k) // s + 1
        pad_t = pad_l = p
    assert pad_t >= 0 and ho > 0 and wo > 0

    # Polyphase layout: pad H/W to s*Lh / s*Lw and split into s*s unit-stride
    # phases so the kernel never needs strided loads (total bytes == input).
    lh = max((k - 1) // s + ho, -(-(pad_t + h) // s))
    lw = max((k - 1) // s + wo, -(-(pad_l + w) // s))
    pad_b = s * lh - pad_t - h
    pad_r = s * lw - pad_l - w
    xp = jnp.pad(x, ((0, 0), (pad_t, pad_b), (pad_l, pad_r), (0, 0)))
    xph = xp.reshape(n, lh, s, lw, s, cin)
    xph = jnp.transpose(xph, (2, 4, 0, 1, 3, 5)).reshape(s * s, n, lh, lw, cin)

    # separable_2 output extent (stride 1, padding p)
    ho2 = ho + 2 * p - k + 1
    wo2 = wo + 2 * p - k + 1

    kern = functools.partial(_branch_sep_kernel, k=k, s=s, p=p,
                             ho=ho, wo=wo, ho2=ho2, wo2=wo2, mxu_bf16=mxu_bf16)
    return pl.pallas_call(
        kern,
        out_shape=jax.ShapeDtypeStruct((n, ho2, wo2, cout), jnp.float32),
        in_specs=[_VMEM] * 9,
        out_specs=_VMEM,
        scratch_shapes=[pltpu.VMEM((n, ho + 2 * p, wo + 2 * p, cin), jnp.float32)],
    )(xph, params["dw1"], params["pw1"], params["g1"], params["b1"],
      params["dw2"], params["pw2"], params["g2"], params["b2"])


# --------------------- pure-JAX reference (torch semantics) ------------------

def _reference(x, params, *, kernel_size, stride, padding, specific):
    k, s, p = kernel_size, stride, padding
    cin = x.shape[-1]
    dn = ("NHWC", "HWIO", "NHWC")
    hp = lax.Precision.HIGHEST

    def depthwise(a, w_flat, strides):
        w = w_flat.reshape(k, k, cin)[:, :, None, :]          # HWIO, I=1 (grouped)
        return lax.conv_general_dilated(a, w, strides, ((p, p), (p, p)),
                                        dimension_numbers=dn,
                                        feature_group_count=cin, precision=hp)

    def bn(a, g, b):
        mu = jnp.mean(a, axis=(0, 1, 2), keepdims=True)
        var = jnp.var(a, axis=(0, 1, 2), keepdims=True)
        return (a - mu) * lax.rsqrt(var + EPS) * g.reshape(1, 1, 1, -1) \
            + b.reshape(1, 1, 1, -1)

    y = jnp.maximum(x, 0.0)
    if specific:
        y = jnp.pad(y, ((0, 0), (1, 0), (1, 0), (0, 0)))       # ZeroPad2d((1,0,1,0))
    y = depthwise(y, params["dw1"], (s, s))
    if specific:
        y = y[:, 1:, 1:, :]
    y = jnp.einsum("nhwc,cd->nhwd", y, params["pw1"], precision=hp)
    y = jnp.maximum(bn(y, params["g1"], params["b1"]), 0.0)
    z = depthwise(y, params["dw2"], (1, 1))
    z = jnp.einsum("nhwc,cd->nhwd", z, params["pw2"], precision=hp)
    return bn(z, params["g2"], params["b2"])


# ------------------------- deterministic parameters --------------------------

def init_params(key, cin, cout, k):
    ks = jax.random.split(key, 8)
    return dict(
        dw1=0.2 * jax.random.normal(ks[0], (k * k, cin), jnp.float32),
        pw1=0.2 * jax.random.normal(ks[1], (cin, cin), jnp.float32),
        g1=1.0 + 0.1 * jax.random.normal(ks[2], (1, cin), jnp.float32),
        b1=0.1 * jax.random.normal(ks[3], (1, cin), jnp.float32),
        dw2=0.2 * jax.random.normal(ks[4], (k * k, cin), jnp.float32),
        pw2=0.2 * jax.random.normal(ks[5], (cin, cout), jnp.float32),
        g2=1.0 + 0.1 * jax.random.normal(ks[6], (1, cout), jnp.float32),
        b2=0.1 * jax.random.normal(ks[7], (1, cout), jnp.float32),
    )


# ----------------------------------- main ------------------------------------

if __name__ == "__main__":
    key = jax.random.PRNGKey(0)
    kx, kp1, kp2 = jax.random.split(key, 3)

    N, H, W = 2, 16, 16
    configs = [
        # NASNet reduction-cell usage: name='specific', stride 2
        dict(cin=8, cout=8, k=5, s=2, p=2, specific=True, pkey=kp1),
        # plain stride-1 usage
        dict(cin=8, cout=16, k=3, s=1, p=1, specific=False, pkey=kp2),
    ]

    for cfg in configs:
        x = jax.random.normal(kx, (N, H, W, cfg["cin"]), jnp.float32)  # NHWC
        params = init_params(cfg["pkey"], cfg["cin"], cfg["cout"], cfg["k"])

        out = branch_separables(x, params, kernel_size=cfg["k"], stride=cfg["s"],
                                padding=cfg["p"], specific=cfg["specific"])
        out = jax.block_until_ready(out)

        ref = _reference(x, params, kernel_size=cfg["k"], stride=cfg["s"],
                         padding=cfg["p"], specific=cfg["specific"])
        assert out.shape == ref.shape, (out.shape, ref.shape)
        assert bool(jnp.all(jnp.isfinite(out)))
        err = float(jnp.max(jnp.abs(out - ref)))
        assert err < 5e-2, f"max abs err vs reference: {err}"

    print("KERNEL_OK")
</pallas_src>

<mosaic_0001>
module attributes {stable_mosaic.version = 11 : i64} {
  func.func @_branch_sep_kernel(%arg0: memref<4x2x10x10x8xf32, #tpu.memory_space<vmem>>, %arg1: memref<25x8xf32, #tpu.memory_space<vmem>>, %arg2: memref<8x8xf32, #tpu.memory_space<vmem>>, %arg3: memref<1x8xf32, #tpu.memory_space<vmem>>, %arg4: memref<1x8xf32, #tpu.memory_space<vmem>>, %arg5: memref<25x8xf32, #tpu.memory_space<vmem>>, %arg6: memref<8x8xf32, #tpu.memory_space<vmem>>, %arg7: memref<1x8xf32, #tpu.memory_space<vmem>>, %arg8: memref<1x8xf32, #tpu.memory_space<vmem>>, %arg9: memref<2x8x8x8xf32, #tpu.memory_space<vmem>>, %arg10: memref<2x12x12x8xf32, #tpu.memory_space<vmem>>) attributes {dimension_semantics = [], scalar_prefetch = 0 : i64, scratch_operands = 1 : i64, tpu.core_type = #tpu.core_type<tc>} {
    %c0 = arith.constant 0 : index
    %c0_0 = arith.constant 0 : index
    %0 = vector.load %arg1[%c0, %c0_0] : memref<25x8xf32, #tpu.memory_space<vmem>>, vector<25x8xf32>
    %cst = arith.constant 0.000000e+00 : f32
    %1 = vector.broadcast %cst : f32 to vector<2x8x8x8xf32>
    %c0_1 = arith.constant 0 : index
    %c0_2 = arith.constant 0 : index
    %c0_3 = arith.constant 0 : index
    %c0_4 = arith.constant 0 : index
    %c0_5 = arith.constant 0 : index
    %2 = vector.load %arg0[%c0_1, %c0_2, %c0_3, %c0_4, %c0_5] : memref<4x2x10x10x8xf32, #tpu.memory_space<vmem>>, vector<1x2x8x8x8xf32>
    %3 = vector.shape_cast %2 : vector<1x2x8x8x8xf32> to vector<2x8x8x8xf32>
    %cst_6 = arith.constant 0.000000e+00 : f32
    %4 = vector.broadcast %cst_6 : f32 to vector<2x8x8x8xf32>
    %5 = arith.maximumf %3, %4 : vector<2x8x8x8xf32>
    %6 = vector.extract_strided_slice %0 {offsets = [0, 0], sizes = [1, 8], strides = [1, 1]} : vector<25x8xf32> to vector<1x8xf32>
    %7 = vector.shape_cast %6 : vector<1x8xf32> to vector<8xf32>
    %8 = vector.shape_cast %7 : vector<8xf32> to vector<1x1x1x8xf32>
    %9 = vector.broadcast %8 : vector<1x1x1x8xf32> to vector<2x8x8x8xf32>
    %10 = arith.mulf %5, %9 : vector<2x8x8x8xf32>
    %11 = arith.addf %1, %10 : vector<2x8x8x8xf32>
    %c1 = arith.constant 1 : index
    %c0_7 = arith.constant 0 : index
    %c0_8 = arith.constant 0 : index
    %c0_9 = arith.constant 0 : index
    %c0_10 = arith.constant 0 : index
    %12 = vector.load %arg0[%c1, %c0_7, %c0_8, %c0_9, %c0_10] : memref<4x2x10x10x8xf32, #tpu.memory_space<vmem>>, vector<1x2x8x8x8xf32>
    %13 = vector.shape_cast %12 : vector<1x2x8x8x8xf32> to vector<2x8x8x8xf32>
    %cst_11 = arith.constant 0.000000e+00 : f32
    %14 = vector.broadcast %cst_11 : f32 to vector<2x8x8x8xf32>
    %15 = arith.maximumf %13, %14 : vector<2x8x8x8xf32>
    %16 = vector.extract_strided_slice %0 {offsets = [1, 0], sizes = [1, 8], strides = [1, 1]} : vector<25x8xf32> to vector<1x8xf32>
    %17 = vector.shape_cast %16 : vector<1x8xf32> to vector<8xf32>
    %18 = vector.shape_cast %17 : vector<8xf32> to vector<1x1x1x8xf32>
    %19 = vector.broadcast %18 : vector<1x1x1x8xf32> to vector<2x8x8x8xf32>
    %20 = arith.mulf %15, %19 : vector<2x8x8x8xf32>
    %21 = arith.addf %11, %20 : vector<2x8x8x8xf32>
    %c0_12 = arith.constant 0 : index
    %c0_13 = arith.constant 0 : index
    %c0_14 = arith.constant 0 : index
    %c1_15 = arith.constant 1 : index
    %c0_16 = arith.constant 0 : index
    %22 = vector.load %arg0[%c0_12, %c0_13, %c0_14, %c1_15, %c0_16] : memref<4x2x10x10x8xf32, #tpu.memory_space<vmem>>, vector<1x2x8x8x8xf32>
    %23 = vector.shape_cast %22 : vector<1x2x8x8x8xf32> to vector<2x8x8x8xf32>
    %cst_17 = arith.constant 0.000000e+00 : f32
    %24 = vector.broadcast %cst_17 : f32 to vector<2x8x8x8xf32>
    %25 = arith.maximumf %23, %24 : vector<2x8x8x8xf32>
    %26 = vector.extract_strided_slice %0 {offsets = [2, 0], sizes = [1, 8], strides = [1, 1]} : vector<25x8xf32> to vector<1x8xf32>
    %27 = vector.shape_cast %26 : vector<1x8xf32> to vector<8xf32>
    %28 = vector.shape_cast %27 : vector<8xf32> to vector<1x1x1x8xf32>
    %29 = vector.broadcast %28 : vector<1x1x1x8xf32> to vector<2x8x8x8xf32>
    %30 = arith.mulf %25, %29 : vector<2x8x8x8xf32>
    %31 = arith.addf %21, %30 : vector<2x8x8x8xf32>
    %c1_18 = arith.constant 1 : index
    %c0_19 = arith.constant 0 : index
    %c0_20 = arith.constant 0 : index
    %c1_21 = arith.constant 1 : index
    %c0_22 = arith.constant 0 : index
    %32 = vector.load %arg0[%c1_18, %c0_19, %c0_20, %c1_21, %c0_22] : memref<4x2x10x10x8xf32, #tpu.memory_space<vmem>>, vector<1x2x8x8x8xf32>
    %33 = vector.shape_cast %32 : vector<1x2x8x8x8xf32> to vector<2x8x8x8xf32>
    %cst_23 = arith.constant 0.000000e+00 : f32
    %34 = vector.broadcast %cst_23 : f32 to vector<2x8x8x8xf32>
    %35 = arith.maximumf %33, %34 : vector<2x8x8x8xf32>
    %36 = vector.extract_strided_slice %0 {offsets = [3, 0], sizes = [1, 8], strides = [1, 1]} : vector<25x8xf32> to vector<1x8xf32>
    %37 = vector.shape_cast %36 : vector<1x8xf32> to vector<8xf32>
    %38 = vector.shape_cast %37 : vector<8xf32> to vector<1x1x1x8xf32>
    %39 = vector.broadcast %38 : vector<1x1x1x8xf32> to vector<2x8x8x8xf32>
    %40 = arith.mulf %35, %39 : vector<2x8x8x8xf32>
    %41 = arith.addf %31, %40 : vector<2x8x8x8xf32>
    %c0_24 = arith.constant 0 : index
    %c0_25 = arith.constant 0 : index
    %c0_26 = arith.constant 0 : index
    %c2 = arith.constant 2 : index
    %c0_27 = arith.constant 0 : index
    %42 = vector.load %arg0[%c0_24, %c0_25, %c0_26, %c2, %c0_27] : memref<4x2x10x10x8xf32, #tpu.memory_space<vmem>>, vector<1x2x8x8x8xf32>
    %43 = vector.shape_cast %42 : vector<1x2x8x8x8xf32> to vector<2x8x8x8xf32>
    %cst_28 = arith.constant 0.000000e+00 : f32
    %44 = vector.broadcast %cst_28 : f32 to vector<2x8x8x8xf32>
    %45 = arith.maximumf %43, %44 : vector<2x8x8x8xf32>
    %46 = vector.extract_strided_slice %0 {offsets = [4, 0], sizes = [1, 8], strides = [1, 1]} : vector<25x8xf32> to vector<1x8xf32>
    %47 = vector.shape_cast %46 : vector<1x8xf32> to vector<8xf32>
    %48 = vector.shape_cast %47 : vector<8xf32> to vector<1x1x1x8xf32>
    %49 = vector.broadcast %48 : vector<1x1x1x8xf32> to vector<2x8x8x8xf32>
    %50 = arith.mulf %45, %49 : vector<2x8x8x8xf32>
    %51 = arith.addf %41, %50 : vector<2x8x8x8xf32>
    %c2_29 = arith.constant 2 : index
    %c0_30 = arith.constant 0 : index
    %c0_31 = arith.constant 0 : index
    %c0_32 = arith.constant 0 : index
    %c0_33 = arith.constant 0 : index
    %52 = vector.load %arg0[%c2_29, %c0_30, %c0_31, %c0_32, %c0_33] : memref<4x2x10x10x8xf32, #tpu.memory_space<vmem>>, vector<1x2x8x8x8xf32>
    %53 = vector.shape_cast %52 : vector<1x2x8x8x8xf32> to vector<2x8x8x8xf32>
    %cst_34 = arith.constant 0.000000e+00 : f32
    %54 = vector.broadcast %cst_34 : f32 to vector<2x8x8x8xf32>
    %55 = arith.maximumf %53, %54 : vector<2x8x8x8xf32>
    %56 = vector.extract_strided_slice %0 {offsets = [5, 0], sizes = [1, 8], strides = [1, 1]} : vector<25x8xf32> to vector<1x8xf32>
    %57 = vector.shape_cast %56 : vector<1x8xf32> to vector<8xf32>
    %58 = vector.shape_cast %57 : vector<8xf32> to vector<1x1x1x8xf32>
    %59 = vector.broadcast %58 : vector<1x1x1x8xf32> to vector<2x8x8x8xf32>
    %60 = arith.mulf %55, %59 : vector<2x8x8x8xf32>
    %61 = arith.addf %51, %60 : vector<2x8x8x8xf32>
    %c3 = arith.constant 3 : index
    %c0_35 = arith.constant 0 : index
    %c0_36 = arith.constant 0 : index
    %c0_37 = arith.constant 0 : index
    %c0_38 = arith.constant 0 : index
    %62 = vector.load %arg0[%c3, %c0_35, %c0_36, %c0_37, %c0_38] : memref<4x2x10x10x8xf32, #tpu.memory_space<vmem>>, vector<1x2x8x8x8xf32>
    %63 = vector.shape_cast %62 : vector<1x2x8x8x8xf32> to vector<2x8x8x8xf32>
    %cst_39 = arith.constant 0.000000e+00 : f32
    %64 = vector.broadcast %cst_39 : f32 to vector<2x8x8x8xf32>
    %65 = arith.maximumf %63, %64 : vector<2x8x8x8xf32>
    %66 = vector.extract_strided_slice %0 {offsets = [6, 0], sizes = [1, 8], strides = [1, 1]} : vector<25x8xf32> to vector<1x8xf32>
    %67 = vector.shape_cast %66 : vector<1x8xf32> to vector<8xf32>
    %68 = vector.shape_cast %67 : vector<8xf32> to vector<1x1x1x8xf32>
    %69 = vector.broadcast %68 : vector<1x1x1x8xf32> to vector<2x8x8x8xf32>
    %70 = arith.mulf %65, %69 : vector<2x8x8x8xf32>
    %71 = arith.addf %61, %70 : vector<2x8x8x8xf32>
    %c2_40 = arith.constant 2 : index
    %c0_41 = arith.constant 0 : index
    %c0_42 = arith.constant 0 : index
    %c1_43 = arith.constant 1 : index
    %c0_44 = arith.constant 0 : index
    %72 = vector.load %arg0[%c2_40, %c0_41, %c0_42, %c1_43, %c0_44] : memref<4x2x10x10x8xf32, #tpu.memory_space<vmem>>, vector<1x2x8x8x8xf32>
    %73 = vector.shape_cast %72 : vector<1x2x8x8x8xf32> to vector<2x8x8x8xf32>
    %cst_45 = arith.constant 0.000000e+00 : f32
    %74 = vector.broadcast %cst_45 : f32 to vector<2x8x8x8xf32>
    %75 = arith.maximumf %73, %74 : vector<2x8x8x8xf32>
    %76 = vector.extract_strided_slice %0 {offsets = [7, 0], sizes = [1, 8], strides = [1, 1]} : vector<25x8xf32> to vector<1x8xf32>
    %77 = vector.shape_cast %76 : vector<1x8xf32> to vector<8xf32>
    %78 = vector.shape_cast %77 : vector<8xf32> to vector<1x1x1x8xf32>
    %79 = vector.broadcast %78 : vector<1x1x1x8xf32> to vector<2x8x8x8xf32>
    %80 = arith.mulf %75, %79 : vector<2x8x8x8xf32>
    %81 = arith.addf %71, %80 : vector<2x8x8x8xf32>
    %c3_46 = arith.constant 3 : index
    %c0_47 = arith.constant 0 : index
    %c0_48 = arith.constant 0 : index
    %c1_49 = arith.constant 1 : index
    %c0_50 = arith.constant 0 : index
    %82 = vector.load %arg0[%c3_46, %c0_47, %c0_48, %c1_49, %c0_50] : memref<4x2x10x10x8xf32, #tpu.memory_space<vmem>>, vector<1x2x8x8x8xf32>
    %83 = vector.shape_cast %82 : vector<1x2x8x8x8xf32> to vector<2x8x8x8xf32>
    %cst_51 = arith.constant 0.000000e+00 : f32
    %84 = vector.broadcast %cst_51 : f32 to vector<2x8x8x8xf32>
    %85 = arith.maximumf %83, %84 : vector<2x8x8x8xf32>
    %86 = vector.extract_strided_slice %0 {offsets = [8, 0], sizes = [1, 8], strides = [1, 1]} : vector<25x8xf32> to vector<1x8xf32>
    %87 = vector.shape_cast %86 : vector<1x8xf32> to vector<8xf32>
    %88 = vector.shape_cast %87 : vector<8xf32> to vector<1x1x1x8xf32>
    %89 = vector.broadcast %88 : vector<1x1x1x8xf32> to vector<2x8x8x8xf32>
    %90 = arith.mulf %85, %89 : vector<2x8x8x8xf32>
    %91 = arith.addf %81, %90 : vector<2x8x8x8xf32>
    %c2_52 = arith.constant 2 : index
    %c0_53 = arith.constant 0 : index
    %c0_54 = arith.constant 0 : index
    %c2_55 = arith.constant 2 : index
    %c0_56 = arith.constant 0 : index
    %92 = vector.load %arg0[%c2_52, %c0_53, %c0_54, %c2_55, %c0_56] : memref<4x2x10x10x8xf32, #tpu.memory_space<vmem>>, vector<1x2x8x8x8xf32>
    %93 = vector.shape_cast %92 : vector<1x2x8x8x8xf32> to vector<2x8x8x8xf32>
    %cst_57 = arith.constant 0.000000e+00 : f32
    %94 = vector.broadcast %cst_57 : f32 to vector<2x8x8x8xf32>
    %95 = arith.maximumf %93, %94 : vector<2x8x8x8xf32>
    %96 = vector.extract_strided_slice %0 {offsets = [9, 0], sizes = [1, 8], strides = [1, 1]} : vector<25x8xf32> to vector<1x8xf32>
    %97 = vector.shape_cast %96 : vector<1x8xf32> to vector<8xf32>
    %98 = vector.shape_cast %97 : vector<8xf32> to vector<1x1x1x8xf32>
    %99 = vector.broadcast %98 : vector<1x1x1x8xf32> to vector<2x8x8x8xf32>
    %100 = arith.mulf %95, %99 : vector<2x8x8x8xf32>
    %101 = arith.addf %91, %100 : vector<2x8x8x8xf32>
    %c0_58 = arith.constant 0 : index
    %c0_59 = arith.constant 0 : index
    %c1_60 = arith.constant 1 : index
    %c0_61 = arith.constant 0 : index
    %c0_62 = arith.constant 0 : index
    %102 = vector.load %arg0[%c0_58, %c0_59, %c1_60, %c0_61, %c0_62] : memref<4x2x10x10x8xf32, #tpu.memory_space<vmem>>, vector<1x2x8x8x8xf32>
    %103 = vector.shape_cast %102 : vector<1x2x8x8x8xf32> to vector<2x8x8x8xf32>
    %cst_63 = arith.constant 0.000000e+00 : f32
    %104 = vector.broadcast %cst_63 : f32 to vector<2x8x8x8xf32>
    %105 = arith.maximumf %103, %104 : vector<2x8x8x8xf32>
    %106 = vector.extract_strided_slice %0 {offsets = [10, 0], sizes = [1, 8], strides = [1, 1]} : vector<25x8xf32> to vector<1x8xf32>
    %107 = vector.shape_cast %106 : vector<1x8xf32> to vector<8xf32>
    %108 = vector.shape_cast %107 : vector<8xf32> to vector<1x1x1x8xf32>
    %109 = vector.broadcast %108 : vector<1x1x1x8xf32> to vector<2x8x8x8xf32>
    %110 = arith.mulf %105, %109 : vector<2x8x8x8xf32>
    %111 = arith.addf %101, %110 : vector<2x8x8x8xf32>
    %c1_64 = arith.constant 1 : index
    %c0_65 = arith.constant 0 : index
    %c1_66 = arith.constant 1 : index
    %c0_67 = arith.constant 0 : index
    %c0_68 = arith.constant 0 : index
    %112 = vector.load %arg0[%c1_64, %c0_65, %c1_66, %c0_67, %c0_68] : memref<4x2x10x10x8xf32, #tpu.memory_space<vmem>>, vector<1x2x8x8x8xf32>
    %113 = vector.shape_cast %112 : vector<1x2x8x8x8xf32> to vector<2x8x8x8xf32>
    %cst_69 = arith.constant 0.000000e+00 : f32
    %114 = vector.broadcast %cst_69 : f32 to vector<2x8x8x8xf32>
    %115 = arith.maximumf %113, %114 : vector<2x8x8x8xf32>
    %116 = vector.extract_strided_slice %0 {offsets = [11, 0], sizes = [1, 8], strides = [1, 1]} : vector<25x8xf32> to vector<1x8xf32>
    %117 = vector.shape_cast %116 : vector<1x8xf32> to vector<8xf32>
    %118 = vector.shape_cast %117 : vector<8xf32> to vector<1x1x1x8xf32>
    %119 = vector.broadcast %118 : vector<1x1x1x8xf32> to vector<2x8x8x8xf32>
    %120 = arith.mulf %115, %119 : vector<2x8x8x8xf32>
    %121 = arith.addf %111, %120 : vector<2x8x8x8xf32>
    %c0_70 = arith.constant 0 : index
    %c0_71 = arith.constant 0 : index
    %c1_72 = arith.constant 1 : index
    %c1_73 = arith.constant 1 : index
    %c0_74 = arith.constant 0 : index
    %122 = vector.load %arg0[%c0_70, %c0_71, %c1_72, %c1_73, %c0_74] : memref<4x2x10x10x8xf32, #tpu.memory_space<vmem>>, vector<1x2x8x8x8xf32>
    %123 = vector.shape_cast %122 : vector<1x2x8x8x8xf32> to vector<2x8x8x8xf32>
    %cst_75 = arith.constant 0.000000e+00 : f32
    %124 = vector.broadcast %cst_75 : f32 to vector<2x8x8x8xf32>
    %125 = arith.maximumf %123, %124 : vector<2x8x8x8xf32>
    %126 = vector.extract_strided_slice %0 {offsets = [12, 0], sizes = [1, 8], strides = [1, 1]} : vector<25x8xf32> to vector<1x8xf32>
    %127 = vector.shape_cast %126 : vector<1x8xf32> to vector<8xf32>
    %128 = vector.shape_cast %127 : vector<8xf32> to vector<1x1x1x8xf32>
    %129 = vector.broadcast %128 : vector<1x1x1x8xf32> to vector<2x8x8x8xf32>
    %130 = arith.mulf %125, %129 : vector<2x8x8x8xf32>
    %131 = arith.addf %121, %130 : vector<2x8x8x8xf32>
    %c1_76 = arith.constant 1 : index
    %c0_77 = arith.constant 0 : index
    %c1_78 = arith.constant 1 : index
    %c1_79 = arith.constant 1 : index
    %c0_80 = arith.constant 0 : index
    %132 = vector.load %arg0[%c1_76, %c0_77, %c1_78, %c1_79, %c0_80] : memref<4x2x10x10x8xf32, #tpu.memory_space<vmem>>, vector<1x2x8x8x8xf32>
    %133 = vector.shape_cast %132 : vector<1x2x8x8x8xf32> to vector<2x8x8x8xf32>
    %cst_81 = arith.constant 0.000000e+00 : f32
    %134 = vector.broadcast %cst_81 : f32 to vector<2x8x8x8xf32>
    %135 = arith.maximumf %133, %134 : vector<2x8x8x8xf32>
    %136 = vector.extract_strided_slice %0 {offsets = [13, 0], sizes = [1, 8], strides = [1, 1]} : vector<25x8xf32> to vector<1x8xf32>
    %137 = vector.shape_cast %136 : vector<1x8xf32> to vector<8xf32>
    %138 = vector.shape_cast %137 : vector<8xf32> to vector<1x1x1x8xf32>
    %139 = vector.broadcast %138 : vector<1x1x1x8xf32> to vector<2x8x8x8xf32>
    %140 = arith.mulf %135, %139 : vector<2x8x8x8xf32>
    %141 = arith.addf %131, %140 : vector<2x8x8x8xf32>
    %c0_82 = arith.constant 0 : index
    %c0_83 = arith.constant 0 : index
    %c1_84 = arith.constant 1 : index
    %c2_85 = arith.constant 2 : index
    %c0_86 = arith.constant 0 : index
    %142 = vector.load %arg0[%c0_82, %c0_83, %c1_84, %c2_85, %c0_86] : memref<4x2x10x10x8xf32, #tpu.memory_space<vmem>>, vector<1x2x8x8x8xf32>
    %143 = vector.shape_cast %142 : vector<1x2x8x8x8xf32> to vector<2x8x8x8xf32>
    %cst_87 = arith.constant 0.000000e+00 : f32
    %144 = vector.broadcast %cst_87 : f32 to vector<2x8x8x8xf32>
    %145 = arith.maximumf %143, %144 : vector<2x8x8x8xf32>
    %146 = vector.extract_strided_slice %0 {offsets = [14, 0], sizes = [1, 8], strides = [1, 1]} : vector<25x8xf32> to vector<1x8xf32>
    %147 = vector.shape_cast %146 : vector<1x8xf32> to vector<8xf32>
    %148 = vector.shape_cast %147 : vector<8xf32> to vector<1x1x1x8xf32>
    %149 = vector.broadcast %148 : vector<1x1x1x8xf32> to vector<2x8x8x8xf32>
    %150 = arith.mulf %145, %149 : vector<2x8x8x8xf32>
    %151 = arith.addf %141, %150 : vector<2x8x8x8xf32>
    %c2_88 = arith.constant 2 : index
    %c0_89 = arith.constant 0 : index
    %c1_90 = arith.constant 1 : index
    %c0_91 = arith.constant 0 : index
    %c0_92 = arith.constant 0 : index
    %152 = vector.load %arg0[%c2_88, %c0_89, %c1_90, %c0_91, %c0_92] : memref<4x2x10x10x8xf32, #tpu.memory_space<vmem>>, vector<1x2x8x8x8xf32>
    %153 = vector.shape_cast %152 : vector<1x2x8x8x8xf32> to vector<2x8x8x8xf32>
    %cst_93 = arith.constant 0.000000e+00 : f32
    %154 = vector.broadcast %cst_93 : f32 to vector<2x8x8x8xf32>
    %155 = arith.maximumf %153, %154 : vector<2x8x8x8xf32>
    %156 = vector.extract_strided_slice %0 {offsets = [15, 0], sizes = [1, 8], strides = [1, 1]} : vector<25x8xf32> to vector<1x8xf32>
    %157 = vector.shape_cast %156 : vector<1x8xf32> to vector<8xf32>
    %158 = vector.shape_cast %157 : vector<8xf32> to vector<1x1x1x8xf32>
    %159 = vector.broadcast %158 : vector<1x1x1x8xf32> to vector<2x8x8x8xf32>
    %160 = arith.mulf %155, %159 : vector<2x8x8x8xf32>
    %161 = arith.addf %151, %160 : vector<2x8x8x8xf32>
    %c3_94 = arith.constant 3 : index
    %c0_95 = arith.constant 0 : index
    %c1_96 = arith.constant 1 : index
    %c0_97 = arith.constant 0 : index
    %c0_98 = arith.constant 0 : index
    %162 = vector.load %arg0[%c3_94, %c0_95, %c1_96, %c0_97, %c0_98] : memref<4x2x10x10x8xf32, #tpu.memory_space<vmem>>, vector<1x2x8x8x8xf32>
    %163 = vector.shape_cast %162 : vector<1x2x8x8x8xf32> to vector<2x8x8x8xf32>
    %cst_99 = arith.constant 0.000000e+00 : f32
    %164 = vector.broadcast %cst_99 : f32 to vector<2x8x8x8xf32>
    %165 = arith.maximumf %163, %164 : vector<2x8x8x8xf32>
    %166 = vector.extract_strided_slice %0 {offsets = [16, 0], sizes = [1, 8], strides = [1, 1]} : vector<25x8xf32> to vector<1x8xf32>
    %167 = vector.shape_cast %166 : vector<1x8xf32> to vector<8xf32>
    %168 = vector.shape_cast %167 : vector<8xf32> to vector<1x1x1x8xf32>
    %169 = vector.broadcast %168 : vector<1x1x1x8xf32> to vector<2x8x8x8xf32>
    %170 = arith.mulf %165, %169 : vector<2x8x8x8xf32>
    %171 = arith.addf %161, %170 : vector<2x8x8x8xf32>
    %c2_100 = arith.constant 2 : index
    %c0_101 = arith.constant 0 : index
    %c1_102 = arith.constant 1 : index
    %c1_103 = arith.constant 1 : index
    %c0_104 = arith.constant 0 : index
    %172 = vector.load %arg0[%c2_100, %c0_101, %c1_102, %c1_103, %c0_104] : memref<4x2x10x10x8xf32, #tpu.memory_space<vmem>>, vector<1x2x8x8x8xf32>
    %173 = vector.shape_cast %172 : vector<1x2x8x8x8xf32> to vector<2x8x8x8xf32>
    %cst_105 = arith.constant 0.000000e+00 : f32
    %174 = vector.broadcast %cst_105 : f32 to vector<2x8x8x8xf32>
    %175 = arith.maximumf %173, %174 : vector<2x8x8x8xf32>
    %176 = vector.extract_strided_slice %0 {offsets = [17, 0], sizes = [1, 8], strides = [1, 1]} : vector<25x8xf32> to vector<1x8xf32>
    %177 = vector.shape_cast %176 : vector<1x8xf32> to vector<8xf32>
    %178 = vector.shape_cast %177 : vector<8xf32> to vector<1x1x1x8xf32>
    %179 = vector.broadcast %178 : vector<1x1x1x8xf32> to vector<2x8x8x8xf32>
    %180 = arith.mulf %175, %179 : vector<2x8x8x8xf32>
    %181 = arith.addf %171, %180 : vector<2x8x8x8xf32>
    %c3_106 = arith.constant 3 : index
    %c0_107 = arith.constant 0 : index
    %c1_108 = arith.constant 1 : index
    %c1_109 = arith.constant 1 : index
    %c0_110 = arith.constant 0 : index
    %182 = vector.load %arg0[%c3_106, %c0_107, %c1_108, %c1_109, %c0_110] : memref<4x2x10x10x8xf32, #tpu.memory_space<vmem>>, vector<1x2x8x8x8xf32>
    %183 = vector.shape_cast %182 : vector<1x2x8x8x8xf32> to vector<2x8x8x8xf32>
    %cst_111 = arith.constant 0.000000e+00 : f32
    %184 = vector.broadcast %cst_111 : f32 to vector<2x8x8x8xf32>
    %185 = arith.maximumf %183, %184 : vector<2x8x8x8xf32>
    %186 = vector.extract_strided_slice %0 {offsets = [18, 0], sizes = [1, 8], strides = [1, 1]} : vector<25x8xf32> to vector<1x8xf32>
    %187 = vector.shape_cast %186 : vector<1x8xf32> to vector<8xf32>
    %188 = vector.shape_cast %187 : vector<8xf32> to vector<1x1x1x8xf32>
    %189 = vector.broadcast %188 : vector<1x1x1x8xf32> to vector<2x8x8x8xf32>
    %190 = arith.mulf %185, %189 : vector<2x8x8x8xf32>
    %191 = arith.addf %181, %190 : vector<2x8x8x8xf32>
    %c2_112 = arith.constant 2 : index
    %c0_113 = arith.constant 0 : index
    %c1_114 = arith.constant 1 : index
    %c2_115 = arith.constant 2 : index
    %c0_116 = arith.constant 0 : index
    %192 = vector.load %arg0[%c2_112, %c0_113, %c1_114, %c2_115, %c0_116] : memref<4x2x10x10x8xf32, #tpu.memory_space<vmem>>, vector<1x2x8x8x8xf32>
    %193 = vector.shape_cast %192 : vector<1x2x8x8x8xf32> to vector<2x8x8x8xf32>
    %cst_117 = arith.constant 0.000000e+00 : f32
    %194 = vector.broadcast %cst_117 : f32 to vector<2x8x8x8xf32>
    %195 = arith.maximumf %193, %194 : vector<2x8x8x8xf32>
    %196 = vector.extract_strided_slice %0 {offsets = [19, 0], sizes = [1, 8], strides = [1, 1]} : vector<25x8xf32> to vector<1x8xf32>
    %197 = vector.shape_cast %196 : vector<1x8xf32> to vector<8xf32>
    %198 = vector.shape_cast %197 : vector<8xf32> to vector<1x1x1x8xf32>
    %199 = vector.broadcast %198 : vector<1x1x1x8xf32> to vector<2x8x8x8xf32>
    %200 = arith.mulf %195, %199 : vector<2x8x8x8xf32>
    %201 = arith.addf %191, %200 : vector<2x8x8x8xf32>
    %c0_118 = arith.constant 0 : index
    %c0_119 = arith.constant 0 : index
    %c2_120 = arith.constant 2 : index
    %c0_121 = arith.constant 0 : index
    %c0_122 = arith.constant 0 : index
    %202 = vector.load %arg0[%c0_118, %c0_119, %c2_120, %c0_121, %c0_122] : memref<4x2x10x10x8xf32, #tpu.memory_space<vmem>>, vector<1x2x8x8x8xf32>
    %203 = vector.shape_cast %202 : vector<1x2x8x8x8xf32> to vector<2x8x8x8xf32>
    %cst_123 = arith.constant 0.000000e+00 : f32
    %204 = vector.broadcast %cst_123 : f32 to vector<2x8x8x8xf32>
    %205 = arith.maximumf %203, %204 : vector<2x8x8x8xf32>
    %206 = vector.extract_strided_slice %0 {offsets = [20, 0], sizes = [1, 8], strides = [1, 1]} : vector<25x8xf32> to vector<1x8xf32>
    %207 = vector.shape_cast %206 : vector<1x8xf32> to vector<8xf32>
    %208 = vector.shape_cast %207 : vector<8xf32> to vector<1x1x1x8xf32>
    %209 = vector.broadcast %208 : vector<1x1x1x8xf32> to vector<2x8x8x8xf32>
    %210 = arith.mulf %205, %209 : vector<2x8x8x8xf32>
    %211 = arith.addf %201, %210 : vector<2x8x8x8xf32>
    %c1_124 = arith.constant 1 : index
    %c0_125 = arith.constant 0 : index
    %c2_126 = arith.constant 2 : index
    %c0_127 = arith.constant 0 : index
    %c0_128 = arith.constant 0 : index
    %212 = vector.load %arg0[%c1_124, %c0_125, %c2_126, %c0_127, %c0_128] : memref<4x2x10x10x8xf32, #tpu.memory_space<vmem>>, vector<1x2x8x8x8xf32>
    %213 = vector.shape_cast %212 : vector<1x2x8x8x8xf32> to vector<2x8x8x8xf32>
    %cst_129 = arith.constant 0.000000e+00 : f32
    %214 = vector.broadcast %cst_129 : f32 to vector<2x8x8x8xf32>
    %215 = arith.maximumf %213, %214 : vector<2x8x8x8xf32>
    %216 = vector.extract_strided_slice %0 {offsets = [21, 0], sizes = [1, 8], strides = [1, 1]} : vector<25x8xf32> to vector<1x8xf32>
    %217 = vector.shape_cast %216 : vector<1x8xf32> to vector<8xf32>
    %218 = vector.shape_cast %217 : vector<8xf32> to vector<1x1x1x8xf32>
    %219 = vector.broadcast %218 : vector<1x1x1x8xf32> to vector<2x8x8x8xf32>
    %220 = arith.mulf %215, %219 : vector<2x8x8x8xf32>
    %221 = arith.addf %211, %220 : vector<2x8x8x8xf32>
    %c0_130 = arith.constant 0 : index
    %c0_131 = arith.constant 0 : index
    %c2_132 = arith.constant 2 : index
    %c1_133 = arith.constant 1 : index
    %c0_134 = arith.constant 0 : index
    %222 = vector.load %arg0[%c0_130, %c0_131, %c2_132, %c1_133, %c0_134] : memref<4x2x10x10x8xf32, #tpu.memory_space<vmem>>, vector<1x2x8x8x8xf32>
    %223 = vector.shape_cast %222 : vector<1x2x8x8x8xf32> to vector<2x8x8x8xf32>
    %cst_135 = arith.constant 0.000000e+00 : f32
    %224 = vector.broadcast %cst_135 : f32 to vector<2x8x8x8xf32>
    %225 = arith.maximumf %223, %224 : vector<2x8x8x8xf32>
    %226 = vector.extract_strided_slice %0 {offsets = [22, 0], sizes = [1, 8], strides = [1, 1]} : vector<25x8xf32> to vector<1x8xf32>
    %227 = vector.shape_cast %226 : vector<1x8xf32> to vector<8xf32>
    %228 = vector.shape_cast %227 : vector<8xf32> to vector<1x1x1x8xf32>
    %229 = vector.broadcast %228 : vector<1x1x1x8xf32> to vector<2x8x8x8xf32>
    %230 = arith.mulf %225, %229 : vector<2x8x8x8xf32>
    %231 = arith.addf %221, %230 : vector<2x8x8x8xf32>
    %c1_136 = arith.constant 1 : index
    %c0_137 = arith.constant 0 : index
    %c2_138 = arith.constant 2 : index
    %c1_139 = arith.constant 1 : index
    %c0_140 = arith.constant 0 : index
    %232 = vector.load %arg0[%c1_136, %c0_137, %c2_138, %c1_139, %c0_140] : memref<4x2x10x10x8xf32, #tpu.memory_space<vmem>>, vector<1x2x8x8x8xf32>
    %233 = vector.shape_cast %232 : vector<1x2x8x8x8xf32> to vector<2x8x8x8xf32>
    %cst_141 = arith.constant 0.000000e+00 : f32
    %234 = vector.broadcast %cst_141 : f32 to vector<2x8x8x8xf32>
    %235 = arith.maximumf %233, %234 : vector<2x8x8x8xf32>
    %236 = vector.extract_strided_slice %0 {offsets = [23, 0], sizes = [1, 8], strides = [1, 1]} : vector<25x8xf32> to vector<1x8xf32>
    %237 = vector.shape_cast %236 : vector<1x8xf32> to vector<8xf32>
    %238 = vector.shape_cast %237 : vector<8xf32> to vector<1x1x1x8xf32>
    %239 = vector.broadcast %238 : vector<1x1x1x8xf32> to vector<2x8x8x8xf32>
    %240 = arith.mulf %235, %239 : vector<2x8x8x8xf32>
    %241 = arith.addf %231, %240 : vector<2x8x8x8xf32>
    %c0_142 = arith.constant 0 : index
    %c0_143 = arith.constant 0 : index
    %c2_144 = arith.constant 2 : index
    %c2_145 = arith.constant 2 : index
    %c0_146 = arith.constant 0 : index
    %242 = vector.load %arg0[%c0_142, %c0_143, %c2_144, %c2_145, %c0_146] : memref<4x2x10x10x8xf32, #tpu.memory_space<vmem>>, vector<1x2x8x8x8xf32>
    %243 = vector.shape_cast %242 : vector<1x2x8x8x8xf32> to vector<2x8x8x8xf32>
    %cst_147 = arith.constant 0.000000e+00 : f32
    %244 = vector.broadcast %cst_147 : f32 to vector<2x8x8x8xf32>
    %245 = arith.maximumf %243, %244 : vector<2x8x8x8xf32>
    %246 = vector.extract_strided_slice %0 {offsets = [24, 0], sizes = [1, 8], strides = [1, 1]} : vector<25x8xf32> to vector<1x8xf32>
    %247 = vector.shape_cast %246 : vector<1x8xf32> to vector<8xf32>
    %248 = vector.shape_cast %247 : vector<8xf32> to vector<1x1x1x8xf32>
    %249 = vector.broadcast %248 : vector<1x1x1x8xf32> to vector<2x8x8x8xf32>
    %250 = arith.mulf %245, %249 : vector<2x8x8x8xf32>
    %251 = arith.addf %241, %250 : vector<2x8x8x8xf32>
    %252 = vector.shape_cast %251 : vector<2x8x8x8xf32> to vector<128x8xf32>
    %c0_148 = arith.constant 0 : index
    %c0_149 = arith.constant 0 : index
    %253 = vector.load %arg2[%c0_148, %c0_149] : memref<8x8xf32, #tpu.memory_space<vmem>>, vector<8x8xf32>
    %cst_150 = arith.constant dense<0.000000e+00> : vector<128x8xf32>
    %254 = tpu.matmul %252, %253, %cst_150 {dimension_numbers = #tpu.dot_dimension_numbers<[1], [0], [0], [1], [0, 0, 1, 1], [], []>} : vector<128x8xf32>, vector<8x8xf32>, vector<128x8xf32> -> vector<128x8xf32>
    %cst_151 = arith.constant dense<0.000000e+00> : vector<8xf32>
    %255 = vector.multi_reduction <add>, %254, %cst_151 [0] : vector<128x8xf32> to vector<8xf32>
    %256 = vector.shape_cast %255 : vector<8xf32> to vector<1x8xf32>
    %cst_152 = arith.constant 1.280000e+02 : f32
    %257 = vector.broadcast %cst_152 : f32 to vector<1x8xf32>
    %258 = arith.divf %256, %257 : vector<1x8xf32>
    %259 = arith.mulf %254, %254 : vector<128x8xf32>
    %cst_153 = arith.constant dense<0.000000e+00> : vector<8xf32>
    %260 = vector.multi_reduction <add>, %259, %cst_153 [0] : vector<128x8xf32> to vector<8xf32>
    %261 = vector.shape_cast %260 : vector<8xf32> to vector<1x8xf32>
    %cst_154 = arith.constant 1.280000e+02 : f32
    %262 = vector.broadcast %cst_154 : f32 to vector<1x8xf32>
    %263 = arith.divf %261, %262 : vector<1x8xf32>
    %264 = arith.mulf %258, %258 : vector<1x8xf32>
    %265 = arith.subf %263, %264 : vector<1x8xf32>
    %266 = vector.broadcast %258 : vector<1x8xf32> to vector<128x8xf32>
    %267 = arith.subf %254, %266 : vector<128x8xf32>
    %c0_155 = arith.constant 0 : index
    %c0_156 = arith.constant 0 : index
    %268 = vector.load %arg3[%c0_155, %c0_156] : memref<1x8xf32, #tpu.memory_space<vmem>>, vector<1x8xf32>
    %cst_157 = arith.constant 1.000000e-03 : f32
    %269 = vector.broadcast %cst_157 : f32 to vector<1x8xf32>
    %270 = arith.addf %265, %269 : vector<1x8xf32>
    %271 = math.rsqrt %270 : vector<1x8xf32>
    %272 = arith.mulf %268, %271 : vector<1x8xf32>
    %273 = vector.broadcast %272 : vector<1x8xf32> to vector<128x8xf32>
    %274 = arith.mulf %267, %273 : vector<128x8xf32>
    %c0_158 = arith.constant 0 : index
    %c0_159 = arith.constant 0 : index
    %275 = vector.load %arg4[%c0_158, %c0_159] : memref<1x8xf32, #tpu.memory_space<vmem>>, vector<1x8xf32>
    %276 = vector.broadcast %275 : vector<1x8xf32> to vector<128x8xf32>
    %277 = arith.addf %274, %276 : vector<128x8xf32>
    %cst_160 = arith.constant 0.000000e+00 : f32
    %278 = vector.broadcast %cst_160 : f32 to vector<128x8xf32>
    %279 = arith.maximumf %277, %278 : vector<128x8xf32>
    %cst_161 = arith.constant 0.000000e+00 : f32
    %280 = vector.broadcast %cst_161 : f32 to vector<2x12x12x8xf32>
    %c0_162 = arith.constant 0 : index
    %c0_163 = arith.constant 0 : index
    %c0_164 = arith.constant 0 : index
    %c0_165 = arith.constant 0 : index
    %281 = vector.load %arg10[%c0_162, %c0_163, %c0_164, %c0_165] : memref<2x12x12x8xf32, #tpu.memory_space<vmem>>, vector<2x12x12x8xf32>
    tpu.vector_store %arg10[%c0_162, %c0_163, %c0_164, %c0_165], %280 {strides = array<i32>} : memref<2x12x12x8xf32, #tpu.memory_space<vmem>>, vector<2x12x12x8xf32>,
    %282 = vector.shape_cast %279 : vector<128x8xf32> to vector<2x8x8x8xf32>
    %c0_166 = arith.constant 0 : index
    %c2_167 = arith.constant 2 : index
    %c2_168 = arith.constant 2 : index
    %c0_169 = arith.constant 0 : index
    %283 = vector.load %arg10[%c0_166, %c2_167, %c2_168, %c0_169] : memref<2x12x12x8xf32, #tpu.memory_space<vmem>>, vector<2x8x8x8xf32>
    tpu.vector_store %arg10[%c0_166, %c2_167, %c2_168, %c0_169], %282 {strides = array<i32>} : memref<2x12x12x8xf32, #tpu.memory_space<vmem>>, vector<2x8x8x8xf32>,
    %c0_170 = arith.constant 0 : index
    %c0_171 = arith.constant 0 : index
    %284 = vector.load %arg5[%c0_170, %c0_171] : memref<25x8xf32, #tpu.memory_space<vmem>>, vector<25x8xf32>
    %cst_172 = arith.constant 0.000000e+00 : f32
    %285 = vector.broadcast %cst_172 : f32 to vector<2x8x8x8xf32>
    %c0_173 = arith.constant 0 : index
    %c0_174 = arith.constant 0 : index
    %c0_175 = arith.constant 0 : index
    %c0_176 = arith.constant 0 : index
    %286 = vector.load %arg10[%c0_173, %c0_174, %c0_175, %c0_176] : memref<2x12x12x8xf32, #tpu.memory_space<vmem>>, vector<2x8x8x8xf32>
    %287 = vector.extract_strided_slice %284 {offsets = [0, 0], sizes = [1, 8], strides = [1, 1]} : vector<25x8xf32> to vector<1x8xf32>
    %288 = vector.shape_cast %287 : vector<1x8xf32> to vector<8xf32>
    %289 = vector.shape_cast %288 : vector<8xf32> to vector<1x1x1x8xf32>
    %290 = vector.broadcast %289 : vector<1x1x1x8xf32> to vector<2x8x8x8xf32>
    %291 = arith.mulf %286, %290 : vector<2x8x8x8xf32>
    %292 = arith.addf %285, %291 : vector<2x8x8x8xf32>
    %c0_177 = arith.constant 0 : index
    %c0_178 = arith.constant 0 : index
    %c1_179 = arith.constant 1 : index
    %c0_180 = arith.constant 0 : index
    %293 = vector.load %arg10[%c0_177, %c0_178, %c1_179, %c0_180] : memref<2x12x12x8xf32, #tpu.memory_space<vmem>>, vector<2x8x8x8xf32>
    %294 = vector.extract_strided_slice %284 {offsets = [1, 0], sizes = [1, 8], strides = [1, 1]} : vector<25x8xf32> to vector<1x8xf32>
    %295 = vector.shape_cast %294 : vector<1x8xf32> to vector<8xf32>
    %296 = vector.shape_cast %295 : vector<8xf32> to vector<1x1x1x8xf32>
    %297 = vector.broadcast %296 : vector<1x1x1x8xf32> to vector<2x8x8x8xf32>
    %298 = arith.mulf %293, %297 : vector<2x8x8x8xf32>
    %299 = arith.addf %292, %298 : vector<2x8x8x8xf32>
    %c0_181 = arith.constant 0 : index
    %c0_182 = arith.constant 0 : index
    %c2_183 = arith.constant 2 : index
    %c0_184 = arith.constant 0 : index
    %300 = vector.load %arg10[%c0_181, %c0_182, %c2_183, %c0_184] : memref<2x12x12x8xf32, #tpu.memory_space<vmem>>, vector<2x8x8x8xf32>
    %301 = vector.extract_strided_slice %284 {offsets = [2, 0], sizes = [1, 8], strides = [1, 1]} : vector<25x8xf32> to vector<1x8xf32>
    %302 = vector.shape_cast %301 : vector<1x8xf32> to vector<8xf32>
    %303 = vector.shape_cast %302 : vector<8xf32> to vector<1x1x1x8xf32>
    %304 = vector.broadcast %303 : vector<1x1x1x8xf32> to vector<2x8x8x8xf32>
    %305 = arith.mulf %300, %304 : vector<2x8x8x8xf32>
    %306 = arith.addf %299, %305 : vector<2x8x8x8xf32>
    %c0_185 = arith.constant 0 : index
    %c0_186 = arith.constant 0 : index
    %c3_187 = arith.constant 3 : index
    %c0_188 = arith.constant 0 : index
    %307 = vector.load %arg10[%c0_185, %c0_186, %c3_187, %c0_188] : memref<2x12x12x8xf32, #tpu.memory_space<vmem>>, vector<2x8x8x8xf32>
    %308 = vector.extract_strided_slice %284 {offsets = [3, 0], sizes = [1, 8], strides = [1, 1]} : vector<25x8xf32> to vector<1x8xf32>
    %309 = vector.shape_cast %308 : vector<1x8xf32> to vector<8xf32>
    %310 = vector.shape_cast %309 : vector<8xf32> to vector<1x1x1x8xf32>
    %311 = vector.broadcast %310 : vector<1x1x1x8xf32> to vector<2x8x8x8xf32>
    %312 = arith.mulf %307, %311 : vector<2x8x8x8xf32>
    %313 = arith.addf %306, %312 : vector<2x8x8x8xf32>
    %c0_189 = arith.constant 0 : index
    %c0_190 = arith.constant 0 : index
    %c4 = arith.constant 4 : index
    %c0_191 = arith.constant 0 : index
    %314 = vector.load %arg10[%c0_189, %c0_190, %c4, %c0_191] : memref<2x12x12x8xf32, #tpu.memory_space<vmem>>, vector<2x8x8x8xf32>
    %315 = vector.extract_strided_slice %284 {offsets = [4, 0], sizes = [1, 8], strides = [1, 1]} : vector<25x8xf32> to vector<1x8xf32>
    %316 = vector.shape_cast %315 : vector<1x8xf32> to vector<8xf32>
    %317 = vector.shape_cast %316 : vector<8xf32> to vector<1x1x1x8xf32>
    %318 = vector.broadcast %317 : vector<1x1x1x8xf32> to vector<2x8x8x8xf32>
    %319 = arith.mulf %314, %318 : vector<2x8x8x8xf32>
    %320 = arith.addf %313, %319 : vector<2x8x8x8xf32>
    %c0_192 = arith.constant 0 : index
    %c1_193 = arith.constant 1 : index
    %c0_194 = arith.constant 0 : index
    %c0_195 = arith.constant 0 : index
    %321 = vector.load %arg10[%c0_192, %c1_193, %c0_194, %c0_195] : memref<2x12x12x8xf32, #tpu.memory_space<vmem>>, vector<2x8x8x8xf32>
    %322 = vector.extract_strided_slice %284 {offsets = [5, 0], sizes = [1, 8], strides = [1, 1]} : vector<25x8xf32> to vector<1x8xf32>
    %323 = vector.shape_cast %322 : vector<1x8xf32> to vector<8xf32>
    %324 = vector.shape_cast %323 : vector<8xf32> to vector<1x1x1x8xf32>
    %325 = vector.broadcast %324 : vector<1x1x1x8xf32> to vector<2x8x8x8xf32>
    %326 = arith.mulf %321, %325 : vector<2x8x8x8xf32>
    %327 = arith.addf %320, %326 : vector<2x8x8x8xf32>
    %c0_196 = arith.constant 0 : index
    %c1_197 = arith.constant 1 : index
    %c1_198 = arith.constant 1 : index
    %c0_199 = arith.constant 0 : index
    %328 = vector.load %arg10[%c0_196, %c1_197, %c1_198, %c0_199] : memref<2x12x12x8xf32, #tpu.memory_space<vmem>>, vector<2x8x8x8xf32>
    %329 = vector.extract_strided_slice %284 {offsets = [6, 0], sizes = [1, 8], strides = [1, 1]} : vector<25x8xf32> to vector<1x8xf32>
    %330 = vector.shape_cast %329 : vector<1x8xf32> to vector<8xf32>
    %331 = vector.shape_cast %330 : vector<8xf32> to vector<1x1x1x8xf32>
    %332 = vector.broadcast %331 : vector<1x1x1x8xf32> to vector<2x8x8x8xf32>
    %333 = arith.mulf %328, %332 : vector<2x8x8x8xf32>
    %334 = arith.addf %327, %333 : vector<2x8x8x8xf32>
    %c0_200 = arith.constant 0 : index
    %c1_201 = arith.constant 1 : index
    %c2_202 = arith.constant 2 : index
    %c0_203 = arith.constant 0 : index
    %335 = vector.load %arg10[%c0_200, %c1_201, %c2_202, %c0_203] : memref<2x12x12x8xf32, #tpu.memory_space<vmem>>, vector<2x8x8x8xf32>
    %336 = vector.extract_strided_slice %284 {offsets = [7, 0], sizes = [1, 8], strides = [1, 1]} : vector<25x8xf32> to vector<1x8xf32>
    %337 = vector.shape_cast %336 : vector<1x8xf32> to vector<8xf32>
    %338 = vector.shape_cast %337 : vector<8xf32> to vector<1x1x1x8xf32>
    %339 = vector.broadcast %338 : vector<1x1x1x8xf32> to vector<2x8x8x8xf32>
    %340 = arith.mulf %335, %339 : vector<2x8x8x8xf32>
    %341 = arith.addf %334, %340 : vector<2x8x8x8xf32>
    %c0_204 = arith.constant 0 : index
    %c1_205 = arith.constant 1 : index
    %c3_206 = arith.constant 3 : index
    %c0_207 = arith.constant 0 : index
    %342 = vector.load %arg10[%c0_204, %c1_205, %c3_206, %c0_207] : memref<2x12x12x8xf32, #tpu.memory_space<vmem>>, vector<2x8x8x8xf32>
    %343 = vector.extract_strided_slice %284 {offsets = [8, 0], sizes = [1, 8], strides = [1, 1]} : vector<25x8xf32> to vector<1x8xf32>
    %344 = vector.shape_cast %343 : vector<1x8xf32> to vector<8xf32>
    %345 = vector.shape_cast %344 : vector<8xf32> to vector<1x1x1x8xf32>
    %346 = vector.broadcast %345 : vector<1x1x1x8xf32> to vector<2x8x8x8xf32>
    %347 = arith.mulf %342, %346 : vector<2x8x8x8xf32>
    %348 = arith.addf %341, %347 : vector<2x8x8x8xf32>
    %c0_208 = arith.constant 0 : index
    %c1_209 = arith.constant 1 : index
    %c4_210 = arith.constant 4 : index
    %c0_211 = arith.constant 0 : index
    %349 = vector.load %arg10[%c0_208, %c1_209, %c4_210, %c0_211] : memref<2x12x12x8xf32, #tpu.memory_space<vmem>>, vector<2x8x8x8xf32>
    %350 = vector.extract_strided_slice %284 {offsets = [9, 0], sizes = [1, 8], strides = [1, 1]} : vector<25x8xf32> to vector<1x8xf32>
    %351 = vector.shape_cast %350 : vector<1x8xf32> to vector<8xf32>
    %352 = vector.shape_cast %351 : vector<8xf32> to vector<1x1x1x8xf32>
    %353 = vector.broadcast %352 : vector<1x1x1x8xf32> to vector<2x8x8x8xf32>
    %354 = arith.mulf %349, %353 : vector<2x8x8x8xf32>
    %355 = arith.addf %348, %354 : vector<2x8x8x8xf32>
    %c0_212 = arith.constant 0 : index
    %c2_213 = arith.constant 2 : index
    %c0_214 = arith.constant 0 : index
    %c0_215 = arith.constant 0 : index
    %356 = vector.load %arg10[%c0_212, %c2_213, %c0_214, %c0_215] : memref<2x12x12x8xf32, #tpu.memory_space<vmem>>, vector<2x8x8x8xf32>
    %357 = vector.extract_strided_slice %284 {offsets = [10, 0], sizes = [1, 8], strides = [1, 1]} : vector<25x8xf32> to vector<1x8xf32>
    %358 = vector.shape_cast %357 : vector<1x8xf32> to vector<8xf32>
    %359 = vector.shape_cast %358 : vector<8xf32> to vector<1x1x1x8xf32>
    %360 = vector.broadcast %359 : vector<1x1x1x8xf32> to vector<2x8x8x8xf32>
    %361 = arith.mulf %356, %360 : vector<2x8x8x8xf32>
    %362 = arith.addf %355, %361 : vector<2x8x8x8xf32>
    %c0_216 = arith.constant 0 : index
    %c2_217 = arith.constant 2 : index
    %c1_218 = arith.constant 1 : index
    %c0_219 = arith.constant 0 : index
    %363 = vector.load %arg10[%c0_216, %c2_217, %c1_218, %c0_219] : memref<2x12x12x8xf32, #tpu.memory_space<vmem>>, vector<2x8x8x8xf32>
    %364 = vector.extract_strided_slice %284 {offsets = [11, 0], sizes = [1, 8], strides = [1, 1]} : vector<25x8xf32> to vector<1x8xf32>
    %365 = vector.shape_cast %364 : vector<1x8xf32> to vector<8xf32>
    %366 = vector.shape_cast %365 : vector<8xf32> to vector<1x1x1x8xf32>
    %367 = vector.broadcast %366 : vector<1x1x1x8xf32> to vector<2x8x8x8xf32>
    %368 = arith.mulf %363, %367 : vector<2x8x8x8xf32>
    %369 = arith.addf %362, %368 : vector<2x8x8x8xf32>
    %c0_220 = arith.constant 0 : index
    %c2_221 = arith.constant 2 : index
    %c2_222 = arith.constant 2 : index
    %c0_223 = arith.constant 0 : index
    %370 = vector.load %arg10[%c0_220, %c2_221, %c2_222, %c0_223] : memref<2x12x12x8xf32, #tpu.memory_space<vmem>>, vector<2x8x8x8xf32>
    %371 = vector.extract_strided_slice %284 {offsets = [12, 0], sizes = [1, 8], strides = [1, 1]} : vector<25x8xf32> to vector<1x8xf32>
    %372 = vector.shape_cast %371 : vector<1x8xf32> to vector<8xf32>
    %373 = vector.shape_cast %372 : vector<8xf32> to vector<1x1x1x8xf32>
    %374 = vector.broadcast %373 : vector<1x1x1x8xf32> to vector<2x8x8x8xf32>
    %375 = arith.mulf %370, %374 : vector<2x8x8x8xf32>
    %376 = arith.addf %369, %375 : vector<2x8x8x8xf32>
    %c0_224 = arith.constant 0 : index
    %c2_225 = arith.constant 2 : index
    %c3_226 = arith.constant 3 : index
    %c0_227 = arith.constant 0 : index
    %377 = vector.load %arg10[%c0_224, %c2_225, %c3_226, %c0_227] : memref<2x12x12x8xf32, #tpu.memory_space<vmem>>, vector<2x8x8x8xf32>
    %378 = vector.extract_strided_slice %284 {offsets = [13, 0], sizes = [1, 8], strides = [1, 1]} : vector<25x8xf32> to vector<1x8xf32>
    %379 = vector.shape_cast %378 : vector<1x8xf32> to vector<8xf32>
    %380 = vector.shape_cast %379 : vector<8xf32> to vector<1x1x1x8xf32>
    %381 = vector.broadcast %380 : vector<1x1x1x8xf32> to vector<2x8x8x8xf32>
    %382 = arith.mulf %377, %381 : vector<2x8x8x8xf32>
    %383 = arith.addf %376, %382 : vector<2x8x8x8xf32>
    %c0_228 = arith.constant 0 : index
    %c2_229 = arith.constant 2 : index
    %c4_230 = arith.constant 4 : index
    %c0_231 = arith.constant 0 : index
    %384 = vector.load %arg10[%c0_228, %c2_229, %c4_230, %c0_231] : memref<2x12x12x8xf32, #tpu.memory_space<vmem>>, vector<2x8x8x8xf32>
    %385 = vector.extract_strided_slice %284 {offsets = [14, 0], sizes = [1, 8], strides = [1, 1]} : vector<25x8xf32> to vector<1x8xf32>
    %386 = vector.shape_cast %385 : vector<1x8xf32> to vector<8xf32>
    %387 = vector.shape_cast %386 : vector<8xf32> to vector<1x1x1x8xf32>
    %388 = vector.broadcast %387 : vector<1x1x1x8xf32> to vector<2x8x8x8xf32>
    %389 = arith.mulf %384, %388 : vector<2x8x8x8xf32>
    %390 = arith.addf %383, %389 : vector<2x8x8x8xf32>
    %c0_232 = arith.constant 0 : index
    %c3_233 = arith.constant 3 : index
    %c0_234 = arith.constant 0 : index
    %c0_235 = arith.constant 0 : index
    %391 = vector.load %arg10[%c0_232, %c3_233, %c0_234, %c0_235] : memref<2x12x12x8xf32, #tpu.memory_space<vmem>>, vector<2x8x8x8xf32>
    %392 = vector.extract_strided_slice %284 {offsets = [15, 0], sizes = [1, 8], strides = [1, 1]} : vector<25x8xf32> to vector<1x8xf32>
    %393 = vector.shape_cast %392 : vector<1x8xf32> to vector<8xf32>
    %394 = vector.shape_cast %393 : vector<8xf32> to vector<1x1x1x8xf32>
    %395 = vector.broadcast %394 : vector<1x1x1x8xf32> to vector<2x8x8x8xf32>
    %396 = arith.mulf %391, %395 : vector<2x8x8x8xf32>
    %397 = arith.addf %390, %396 : vector<2x8x8x8xf32>
    %c0_236 = arith.constant 0 : index
    %c3_237 = arith.constant 3 : index
    %c1_238 = arith.constant 1 : index
    %c0_239 = arith.constant 0 : index
    %398 = vector.load %arg10[%c0_236, %c3_237, %c1_238, %c0_239] : memref<2x12x12x8xf32, #tpu.memory_space<vmem>>, vector<2x8x8x8xf32>
    %399 = vector.extract_strided_slice %284 {offsets = [16, 0], sizes = [1, 8], strides = [1, 1]} : vector<25x8xf32> to vector<1x8xf32>
    %400 = vector.shape_cast %399 : vector<1x8xf32> to vector<8xf32>
    %401 = vector.shape_cast %400 : vector<8xf32> to vector<1x1x1x8xf32>
    %402 = vector.broadcast %401 : vector<1x1x1x8xf32> to vector<2x8x8x8xf32>
    %403 = arith.mulf %398, %402 : vector<2x8x8x8xf32>
    %404 = arith.addf %397, %403 : vector<2x8x8x8xf32>
    %c0_240 = arith.constant 0 : index
    %c3_241 = arith.constant 3 : index
    %c2_242 = arith.constant 2 : index
    %c0_243 = arith.constant 0 : index
    %405 = vector.load %arg10[%c0_240, %c3_241, %c2_242, %c0_243] : memref<2x12x12x8xf32, #tpu.memory_space<vmem>>, vector<2x8x8x8xf32>
    %406 = vector.extract_strided_slice %284 {offsets = [17, 0], sizes = [1, 8], strides = [1, 1]} : vector<25x8xf32> to vector<1x8xf32>
    %407 = vector.shape_cast %406 : vector<1x8xf32> to vector<8xf32>
    %408 = vector.shape_cast %407 : vector<8xf32> to vector<1x1x1x8xf32>
    %409 = vector.broadcast %408 : vector<1x1x1x8xf32> to vector<2x8x8x8xf32>
    %410 = arith.mulf %405, %409 : vector<2x8x8x8xf32>
    %411 = arith.addf %404, %410 : vector<2x8x8x8xf32>
    %c0_244 = arith.constant 0 : index
    %c3_245 = arith.constant 3 : index
    %c3_246 = arith.constant 3 : index
    %c0_247 = arith.constant 0 : index
    %412 = vector.load %arg10[%c0_244, %c3_245, %c3_246, %c0_247] : memref<2x12x12x8xf32, #tpu.memory_space<vmem>>, vector<2x8x8x8xf32>
    %413 = vector.extract_strided_slice %284 {offsets = [18, 0], sizes = [1, 8], strides = [1, 1]} : vector<25x8xf32> to vector<1x8xf32>
    %414 = vector.shape_cast %413 : vector<1x8xf32> to vector<8xf32>
    %415 = vector.shape_cast %414 : vector<8xf32> to vector<1x1x1x8xf32>
    %416 = vector.broadcast %415 : vector<1x1x1x8xf32> to vector<2x8x8x8xf32>
    %417 = arith.mulf %412, %416 : vector<2x8x8x8xf32>
    %418 = arith.addf %411, %417 : vector<2x8x8x8xf32>
    %c0_248 = arith.constant 0 : index
    %c3_249 = arith.constant 3 : index
    %c4_250 = arith.constant 4 : index
    %c0_251 = arith.constant 0 : index
    %419 = vector.load %arg10[%c0_248, %c3_249, %c4_250, %c0_251] : memref<2x12x12x8xf32, #tpu.memory_space<vmem>>, vector<2x8x8x8xf32>
    %420 = vector.extract_strided_slice %284 {offsets = [19, 0], sizes = [1, 8], strides = [1, 1]} : vector<25x8xf32> to vector<1x8xf32>
    %421 = vector.shape_cast %420 : vector<1x8xf32> to vector<8xf32>
    %422 = vector.shape_cast %421 : vector<8xf32> to vector<1x1x1x8xf32>
    %423 = vector.broadcast %422 : vector<1x1x1x8xf32> to vector<2x8x8x8xf32>
    %424 = arith.mulf %419, %423 : vector<2x8x8x8xf32>
    %425 = arith.addf %418, %424 : vector<2x8x8x8xf32>
    %c0_252 = arith.constant 0 : index
    %c4_253 = arith.constant 4 : index
    %c0_254 = arith.constant 0 : index
    %c0_255 = arith.constant 0 : index
    %426 = vector.load %arg10[%c0_252, %c4_253, %c0_254, %c0_255] : memref<2x12x12x8xf32, #tpu.memory_space<vmem>>, vector<2x8x8x8xf32>
    %427 = vector.extract_strided_slice %284 {offsets = [20, 0], sizes = [1, 8], strides = [1, 1]} : vector<25x8xf32> to vector<1x8xf32>
    %428 = vector.shape_cast %427 : vector<1x8xf32> to vector<8xf32>
    %429 = vector.shape_cast %428 : vector<8xf32> to vector<1x1x1x8xf32>
    %430 = vector.broadcast %429 : vector<1x1x1x8xf32> to vector<2x8x8x8xf32>
    %431 = arith.mulf %426, %430 : vector<2x8x8x8xf32>
    %432 = arith.addf %425, %431 : vector<2x8x8x8xf32>
    %c0_256 = arith.constant 0 : index
    %c4_257 = arith.constant 4 : index
    %c1_258 = arith.constant 1 : index
    %c0_259 = arith.constant 0 : index
    %433 = vector.load %arg10[%c0_256, %c4_257, %c1_258, %c0_259] : memref<2x12x12x8xf32, #tpu.memory_space<vmem>>, vector<2x8x8x8xf32>
    %434 = vector.extract_strided_slice %284 {offsets = [21, 0], sizes = [1, 8], strides = [1, 1]} : vector<25x8xf32> to vector<1x8xf32>
    %435 = vector.shape_cast %434 : vector<1x8xf32> to vector<8xf32>
    %436 = vector.shape_cast %435 : vector<8xf32> to vector<1x1x1x8xf32>
    %437 = vector.broadcast %436 : vector<1x1x1x8xf32> to vector<2x8x8x8xf32>
    %438 = arith.mulf %433, %437 : vector<2x8x8x8xf32>
    %439 = arith.addf %432, %438 : vector<2x8x8x8xf32>
    %c0_260 = arith.constant 0 : index
    %c4_261 = arith.constant 4 : index
    %c2_262 = arith.constant 2 : index
    %c0_263 = arith.constant 0 : index
    %440 = vector.load %arg10[%c0_260, %c4_261, %c2_262, %c0_263] : memref<2x12x12x8xf32, #tpu.memory_space<vmem>>, vector<2x8x8x8xf32>
    %441 = vector.extract_strided_slice %284 {offsets = [22, 0], sizes = [1, 8], strides = [1, 1]} : vector<25x8xf32> to vector<1x8xf32>
    %442 = vector.shape_cast %441 : vector<1x8xf32> to vector<8xf32>
    %443 = vector.shape_cast %442 : vector<8xf32> to vector<1x1x1x8xf32>
    %444 = vector.broadcast %443 : vector<1x1x1x8xf32> to vector<2x8x8x8xf32>
    %445 = arith.mulf %440, %444 : vector<2x8x8x8xf32>
    %446 = arith.addf %439, %445 : vector<2x8x8x8xf32>
    %c0_264 = arith.constant 0 : index
    %c4_265 = arith.constant 4 : index
    %c3_266 = arith.constant 3 : index
    %c0_267 = arith.constant 0 : index
    %447 = vector.load %arg10[%c0_264, %c4_265, %c3_266, %c0_267] : memref<2x12x12x8xf32, #tpu.memory_space<vmem>>, vector<2x8x8x8xf32>
    %448 = vector.extract_strided_slice %284 {offsets = [23, 0], sizes = [1, 8], strides = [1, 1]} : vector<25x8xf32> to vector<1x8xf32>
    %449 = vector.shape_cast %448 : vector<1x8xf32> to vector<8xf32>
    %450 = vector.shape_cast %449 : vector<8xf32> to vector<1x1x1x8xf32>
    %451 = vector.broadcast %450 : vector<1x1x1x8xf32> to vector<2x8x8x8xf32>
    %452 = arith.mulf %447, %451 : vector<2x8x8x8xf32>
    %453 = arith.addf %446, %452 : vector<2x8x8x8xf32>
    %c0_268 = arith.constant 0 : index
    %c4_269 = arith.constant 4 : index
    %c4_270 = arith.constant 4 : index
    %c0_271 = arith.constant 0 : index
    %454 = vector.load %arg10[%c0_268, %c4_269, %c4_270, %c0_271] : memref<2x12x12x8xf32, #tpu.memory_space<vmem>>, vector<2x8x8x8xf32>
    %455 = vector.extract_strided_slice %284 {offsets = [24, 0], sizes = [1, 8], strides = [1, 1]} : vector<25x8xf32> to vector<1x8xf32>
    %456 = vector.shape_cast %455 : vector<1x8xf32> to vector<8xf32>
    %457 = vector.shape_cast %456 : vector<8xf32> to vector<1x1x1x8xf32>
    %458 = vector.broadcast %457 : vector<1x1x1x8xf32> to vector<2x8x8x8xf32>
    %459 = arith.mulf %454, %458 : vector<2x8x8x8xf32>
    %460 = arith.addf %453, %459 : vector<2x8x8x8xf32>
    %461 = vector.shape_cast %460 : vector<2x8x8x8xf32> to vector<128x8xf32>
    %c0_272 = arith.constant 0 : index
    %c0_273 = arith.constant 0 : index
    %462 = vector.load %arg6[%c0_272, %c0_273] : memref<8x8xf32, #tpu.memory_space<vmem>>, vector<8x8xf32>
    %cst_274 = arith.constant dense<0.000000e+00> : vector<128x8xf32>
    %463 = tpu.matmul %461, %462, %cst_274 {dimension_numbers = #tpu.dot_dimension_numbers<[1], [0], [0], [1], [0, 0, 1, 1], [], []>} : vector<128x8xf32>, vector<8x8xf32>, vector<128x8xf32> -> vector<128x8xf32>
    %cst_275 = arith.constant dense<0.000000e+00> : vector<8xf32>
    %464 = vector.multi_reduction <add>, %463, %cst_275 [0] : vector<128x8xf32> to vector<8xf32>
    %465 = vector.shape_cast %464 : vector<8xf32> to vector<1x8xf32>
    %cst_276 = arith.constant 1.280000e+02 : f32
    %466 = vector.broadcast %cst_276 : f32 to vector<1x8xf32>
    %467 = arith.divf %465, %466 : vector<1x8xf32>
    %468 = arith.mulf %463, %463 : vector<128x8xf32>
    %cst_277 = arith.constant dense<0.000000e+00> : vector<8xf32>
    %469 = vector.multi_reduction <add>, %468, %cst_277 [0] : vector<128x8xf32> to vector<8xf32>
    %470 = vector.shape_cast %469 : vector<8xf32> to vector<1x8xf32>
    %cst_278 = arith.constant 1.280000e+02 : f32
    %471 = vector.broadcast %cst_278 : f32 to vector<1x8xf32>
    %472 = arith.divf %470, %471 : vector<1x8xf32>
    %473 = arith.mulf %467, %467 : vector<1x8xf32>
    %474 = arith.subf %472, %473 : vector<1x8xf32>
    %475 = vector.broadcast %467 : vector<1x8xf32> to vector<128x8xf32>
    %476 = arith.subf %463, %475 : vector<128x8xf32>
    %c0_279 = arith.constant 0 : index
    %c0_280 = arith.constant 0 : index
    %477 = vector.load %arg7[%c0_279, %c0_280] : memref<1x8xf32, #tpu.memory_space<vmem>>, vector<1x8xf32>
    %cst_281 = arith.constant 1.000000e-03 : f32
    %478 = vector.broadcast %cst_281 : f32 to vector<1x8xf32>
    %479 = arith.addf %474, %478 : vector<1x8xf32>
    %480 = math.rsqrt %479 : vector<1x8xf32>
    %481 = arith.mulf %477, %480 : vector<1x8xf32>
    %482 = vector.broadcast %481 : vector<1x8xf32> to vector<128x8xf32>
    %483 = arith.mulf %476, %482 : vector<128x8xf32>
    %c0_282 = arith.constant 0 : index
    %c0_283 = arith.constant 0 : index
    %484 = vector.load %arg8[%c0_282, %c0_283] : memref<1x8xf32, #tpu.memory_space<vmem>>, vector<1x8xf32>
    %485 = vector.broadcast %484 : vector<1x8xf32> to vector<128x8xf32>
    %486 = arith.addf %483, %485 : vector<128x8xf32>
    %487 = vector.shape_cast %486 : vector<128x8xf32> to vector<2x8x8x8xf32>
    %c0_284 = arith.constant 0 : index
    %c0_285 = arith.constant 0 : index
    %c0_286 = arith.constant 0 : index
    %c0_287 = arith.constant 0 : index
    %488 = vector.load %arg9[%c0_284, %c0_285, %c0_286, %c0_287] : memref<2x8x8x8xf32, #tpu.memory_space<vmem>>, vector<2x8x8x8xf32>
    tpu.vector_store %arg9[%c0_284, %c0_285, %c0_286, %c0_287], %487 {strides = array<i32>} : memref<2x8x8x8xf32, #tpu.memory_space<vmem>>, vector<2x8x8x8xf32>,
    return
  }
}

</mosaic_0001>

<llo_original>
// kernel: branch_separables.1
$region0: #{branch_separables.1}
  #allocation0 [shape = 'u32[]', space=smem, size = 0x4, offset = 0x4, fixed_abs, tag = 'smem constant byte address 0x4 - core index']
  #allocation1 [shape = 'u32[144,128]{1,0:T(1,128)}', space=vmem, size = 0x12000, scoped, tag = 'internal scratch']
  #allocation2 [shape = 'f32[2,12,12,8]{3,2,1,0:T(8,128)}', space=vmem, size = 0x30000, scoped, tag = 'scratch operand']
  %s0 = inlined_call_operand.vmem [shape: f32[4,2,10,10,8], index: 0, kind: input, shape index: {}]
  %s1 = inlined_call_operand.vmem [shape: f32[25,8], index: 1, kind: input, shape index: {}]
  %s2 = inlined_call_operand.vmem [shape: f32[8,8], index: 2, kind: input, shape index: {}]
  %s3 = inlined_call_operand.vmem [shape: f32[1,8], index: 3, kind: input, shape index: {}]
  %s4 = inlined_call_operand.vmem [shape: f32[1,8], index: 4, kind: input, shape index: {}]
  %s5 = inlined_call_operand.vmem [shape: f32[25,8], index: 5, kind: input, shape index: {}]
  %s6 = inlined_call_operand.vmem [shape: f32[8,8], index: 6, kind: input, shape index: {}]
  %s7 = inlined_call_operand.vmem [shape: f32[1,8], index: 7, kind: input, shape index: {}]
  %s8 = inlined_call_operand.vmem [shape: f32[1,8], index: 8, kind: input, shape index: {}]
  %s9 = inlined_call_operand.hbm [shape: f32[2,8,8,8], index: 9, kind: output, shape index: {}]
  %s10 = sld [smem:[#allocation0]]
  $region46: #{branch_separables.1} parent=0
    _
  %s12 = ssub.s32 1, %s10
  %s13 = scalar_select 0, %s12, %s10
  $region1: #{branch_separables.1} parent=0
    #allocation3 [shape = 'u8[65536]{0}', space=vmem, size = 0x10000, scoped, tag = 'output window, operand 0, single buffered']
    #allocation4 [shape = 's32[1]{0}', space=sflag, size = 0x4, scoped, tag = 'scoped memory for branch_separables.1']
    %14 = vsyncpa [#allocation4], 0
    // Predicated region
    $region2: #{branch_separables.1} parent=1 // pred_check
      _
    $region3: #{branch_separables.1} parent=1 // pred_check_branch
      %16 = sbr.rel (0) target = $region5
    $region4: #{branch_separables.1} parent=1 // pred_region
      _
    $region5: #{branch_separables.1} parent=1 // pred_fallthru
      _
    // Predicated region
    $region6: #{branch_separables.1} parent=1 // pred_check
      _
    $region7: #{branch_separables.1} parent=1 // pred_check_branch
      %18 = sbr.rel (0) target = $region9
    $region8: #{branch_separables.1} parent=1 // pred_region
      _
    $region9: #{branch_separables.1} parent=1 // pred_fallthru
      _
    // Predicated region
    $region10: #{branch_separables.1} parent=1 // pred_check
      _
    $region11: #{branch_separables.1} parent=1 // pred_check_branch
      %20 = sbr.rel (0) target = $region13
    $region12: #{branch_separables.1} parent=1 // pred_region
      _
    $region13: #{branch_separables.1} parent=1 // pred_fallthru
      _
    // Predicated region
    $region14: #{branch_separables.1} parent=1 // pred_check
      _
    $region15: #{branch_separables.1} parent=1 // pred_check_branch
      %22 = sbr.rel (0) target = $region17
    $region16: #{branch_separables.1} parent=1 // pred_region
      _
    $region17: #{branch_separables.1} parent=1 // pred_fallthru
      _
    // Predicated region
    $region18: #{branch_separables.1} parent=1 // pred_check
      _
    $region19: #{branch_separables.1} parent=1 // pred_check_branch
      %24 = sbr.rel (0) target = $region21
    $region20: #{branch_separables.1} parent=1 // pred_region
      _
    $region21: #{branch_separables.1} parent=1 // pred_fallthru
      _
    // Predicated region
    $region22: #{branch_separables.1} parent=1 // pred_check
      _
    $region23: #{branch_separables.1} parent=1 // pred_check_branch
      %26 = sbr.rel (0) target = $region25
    $region24: #{branch_separables.1} parent=1 // pred_region
      _
    $region25: #{branch_separables.1} parent=1 // pred_fallthru
      _
    // Predicated region
    $region26: #{branch_separables.1} parent=1 // pred_check
      _
    $region27: #{branch_separables.1} parent=1 // pred_check_branch
      %28 = sbr.rel (0) target = $region29
    $region28: #{branch_separables.1} parent=1 // pred_region
      _
    $region29: #{branch_separables.1} parent=1 // pred_fallthru
      _
    // Predicated region
    $region30: #{branch_separables.1} parent=1 // pred_check
      _
    $region31: #{branch_separables.1} parent=1 // pred_check_branch
      %30 = sbr.rel (0) target = $region33
    $region32: #{branch_separables.1} parent=1 // pred_region
      _
    $region33: #{branch_separables.1} parent=1 // pred_fallthru
      _
    // Predicated region
    $region34: #{branch_separables.1} parent=1 // pred_check
      _
    $region35: #{branch_separables.1} parent=1 // pred_check_branch
      %32 = sbr.rel (0) target = $region37
    $region36: #{branch_separables.1} parent=1 // pred_region
      _
    $region37: #{branch_separables.1} parent=1 // pred_fallthru
      _
    %v33 = vld [vmem:[%s1] sm:$0xff]
    %v34 = vld [vmem:[%s1 + $0x8] sm:$0xff]
    %v35 = vld [vmem:[%s1 + $0x10] sm:$0xff]
    %v36 = vld [vmem:[%s1 + $0x18] sm:$0x1]
    %v37 = vld [vmem:[%s0] sm:$0xff]
    %v38 = vld [vmem:[%s0 + $0x10] sm:$0xff]
    %v39 = vld [vmem:[%s0 + $0x20] sm:$0xff]
    %v40 = vld [vmem:[%s0 + $0x30] sm:$0xff]
    %v41 = vld [vmem:[%s0 + $0x40] sm:$0xff]
    %v42 = vld [vmem:[%s0 + $0x50] sm:$0xff]
    %v43 = vld [vmem:[%s0 + $0x60] sm:$0xff]
    %v44 = vld [vmem:[%s0 + $0x70] sm:$0xff]
    %v45 = vld [vmem:[%s0 + $0xa0] sm:$0xff]
    %v46 = vld [vmem:[%s0 + $0xb0] sm:$0xff]
    %v47 = vld [vmem:[%s0 + $0xc0] sm:$0xff]
    %v48 = vld [vmem:[%s0 + $0xd0] sm:$0xff]
    %v49 = vld [vmem:[%s0 + $0xe0] sm:$0xff]
    %v50 = vld [vmem:[%s0 + $0xf0] sm:$0xff]
    %v51 = vld [vmem:[%s0 + $0x100] sm:$0xff]
    %v52 = vld [vmem:[%s0 + $0x110] sm:$0xff]
    %v53 = vmax.f32 %v37, 0.0
    %v54 = vmax.f32 %v38, 0.0
    %v55 = vmax.f32 %v39, 0.0
    %v56 = vmax.f32 %v40, 0.0
    %v57 = vmax.f32 %v41, 0.0
    %v58 = vmax.f32 %v42, 0.0
    %v59 = vmax.f32 %v43, 0.0
    %v60 = vmax.f32 %v44, 0.0
    %v61 = vmax.f32 %v45, 0.0
    %v62 = vmax.f32 %v46, 0.0
    %v63 = vmax.f32 %v47, 0.0
    %v64 = vmax.f32 %v48, 0.0
    %v65 = vmax.f32 %v49, 0.0
    %v66 = vmax.f32 %v50, 0.0
    %v67 = vmax.f32 %v51, 0.0
    %v68 = vmax.f32 %v52, 0.0
    %v69 = vlaneseq
    %v70 = vshrl.u32 %v69, 7
    %v71 = vsub.s32 0, %v70
    %v72 = vrot.slane %v33, %v71
    %v73 = vmul.f32 %v53, %v72
    %v74 = vmul.f32 %v54, %v72
    %v75 = vmul.f32 %v55, %v72
    %v76 = vmul.f32 %v56, %v72
    %v77 = vmul.f32 %v57, %v72
    %v78 = vmul.f32 %v58, %v72
    %v79 = vmul.f32 %v59, %v72
    %v80 = vmul.f32 %v60, %v72
    %v81 = vmul.f32 %v61, %v72
    %v82 = vmul.f32 %v62, %v72
    %v83 = vmul.f32 %v63, %v72
    %v84 = vmul.f32 %v64, %v72
    %v85 = vmul.f32 %v65, %v72
    %v86 = vmul.f32 %v66, %v72
    %v87 = vmul.f32 %v67, %v72
    %v88 = vmul.f32 %v68, %v72
    %v89 = vadd.f32 %v73, 0.0
    %v90 = vadd.f32 %v74, 0.0
    %v91 = vadd.f32 %v75, 0.0
    %v92 = vadd.f32 %v76, 0.0
    %v93 = vadd.f32 %v77, 0.0
    %v94 = vadd.f32 %v78, 0.0
    %v95 = vadd.f32 %v79, 0.0
    %v96 = vadd.f32 %v80, 0.0
    %v97 = vadd.f32 %v81, 0.0
    %v98 = vadd.f32 %v82, 0.0
    %v99 = vadd.f32 %v83, 0.0
    %v100 = vadd.f32 %v84, 0.0
    %v101 = vadd.f32 %v85, 0.0
    %v102 = vadd.f32 %v86, 0.0
    %v103 = vadd.f32 %v87, 0.0
    %v104 = vadd.f32 %v88, 0.0
    %s105 = scalar_lea.vmem %s0, 320
    %v106 = vld [vmem:[%s105] sm:$0xff]
    %v107 = vld [vmem:[%s105 + $0x10] sm:$0xff]
    %v108 = vld [vmem:[%s105 + $0x20] sm:$0xff]
    %v109 = vld [vmem:[%s105 + $0x30] sm:$0xff]
    %v110 = vld [vmem:[%s105 + $0x40] sm:$0xff]
    %v111 = vld [vmem:[%s105 + $0x50] sm:$0xff]
    %v112 = vld [vmem:[%s105 + $0x60] sm:$0xff]
    %v113 = vld [vmem:[%s105 + $0x70] sm:$0xff]
    %v114 = vld [vmem:[%s105 + $0xa0] sm:$0xff]
    %v115 = vld [vmem:[%s105 + $0xb0] sm:$0xff]
    %v116 = vld [vmem:[%s105 + $0xc0] sm:$0xff]
    %v117 = vld [vmem:[%s105 + $0xd0] sm:$0xff]
    %v118 = vld [vmem:[%s105 + $0xe0] sm:$0xff]
    %v119 = vld [vmem:[%s105 + $0xf0] sm:$0xff]
    %v120 = vld [vmem:[%s105 + $0x100] sm:$0xff]
    %v121 = vld [vmem:[%s105 + $0x110] sm:$0xff]
    %v122 = vmax.f32 %v106, 0.0
    %v123 = vmax.f32 %v107, 0.0
    %v124 = vmax.f32 %v108, 0.0
    %v125 = vmax.f32 %v109, 0.0
    %v126 = vmax.f32 %v110, 0.0
    %v127 = vmax.f32 %v111, 0.0
    %v128 = vmax.f32 %v112, 0.0
    %v129 = vmax.f32 %v113, 0.0
    %v130 = vmax.f32 %v114, 0.0
    %v131 = vmax.f32 %v115, 0.0
    %v132 = vmax.f32 %v116, 0.0
    %v133 = vmax.f32 %v117, 0.0
    %v134 = vmax.f32 %v118, 0.0
    %v135 = vmax.f32 %v119, 0.0
    %v136 = vmax.f32 %v120, 0.0
    %v137 = vmax.f32 %v121, 0.0
    %v138 = vlaneseq
    %v139 = vshrl.u32 %v138, 7
    %v140 = vsub.s32 1, %v139
    %v141 = vrot.slane %v33, %v140
    %v142 = vmul.f32 %v122, %v141
    %v143 = vmul.f32 %v123, %v141
    %v144 = vmul.f32 %v124, %v141
    %v145 = vmul.f32 %v125, %v141
    %v146 = vmul.f32 %v126, %v141
    %v147 = vmul.f32 %v127, %v141
    %v148 = vmul.f32 %v128, %v141
    %v149 = vmul.f32 %v129, %v141
    %v150 = vmul.f32 %v130, %v141
    %v151 = vmul.f32 %v131, %v141
    %v152 = vmul.f32 %v132, %v141
    %v153 = vmul.f32 %v133, %v141
    %v154 = vmul.f32 %v134, %v141
    %v155 = vmul.f32 %v135, %v141
    %v156 = vmul.f32 %v136, %v141
    %v157 = vmul.f32 %v137, %v141
    %v158 = vadd.f32 %v89, %v142
    %v159 = vadd.f32 %v90, %v143
    %v160 = vadd.f32 %v91, %v144
    %v161 = vadd.f32 %v92, %v145
    %v162 = vadd.f32 %v93, %v146
    %v163 = vadd.f32 %v94, %v147
    %v164 = vadd.f32 %v95, %v148
    %v165 = vadd.f32 %v96, %v149
    %v166 = vadd.f32 %v97, %v150
    %v167 = vadd.f32 %v98, %v151
    %v168 = vadd.f32 %v99, %v152
    %v169 = vadd.f32 %v100, %v153
    %v170 = vadd.f32 %v101, %v154
    %v171 = vadd.f32 %v102, %v155
    %v172 = vadd.f32 %v103, %v156
    %v173 = vadd.f32 %v104, %v157
    %v174 = vld [vmem:[%s0 + $0x1] sm:$0xff]
    %v175 = vld [vmem:[%s0 + $0x11] sm:$0xff]
    %v176 = vld [vmem:[%s0 + $0x21] sm:$0xff]
    %v177 = vld [vmem:[%s0 + $0x31] sm:$0xff]
    %v178 = vld [vmem:[%s0 + $0x41] sm:$0xff]
    %v179 = vld [vmem:[%s0 + $0x51] sm:$0xff]
    %v180 = vld [vmem:[%s0 + $0x61] sm:$0xff]
    %v181 = vld [vmem:[%s0 + $0x71] sm:$0xff]
    %v182 = vld [vmem:[%s0 + $0xa1] sm:$0xff]
    %v183 = vld [vmem:[%s0 + $0xb1] sm:$0xff]
    %v184 = vld [vmem:[%s0 + $0xc1] sm:$0xff]
    %v185 = vld [vmem:[%s0 + $0xd1] sm:$0xff]
    %v186 = vld [vmem:[%s0 + $0xe1] sm:$0xff]
    %v187 = vld [vmem:[%s0 + $0xf1] sm:$0xff]
    %v188 = vld [vmem:[%s0 + $0x101] sm:$0xff]
    %v189 = vld [vmem:[%s0 + $0x111] sm:$0xff]
    %v190 = vmax.f32 %v174, 0.0
    %v191 = vmax.f32 %v175, 0.0
    %v192 = vmax.f32 %v176, 0.0
    %v193 = vmax.f32 %v177, 0.0
    %v194 = vmax.f32 %v178, 0.0
    %v195 = vmax.f32 %v179, 0.0
    %v196 = vmax.f32 %v180, 0.0
    %v197 = vmax.f32 %v181, 0.0
    %v198 = vmax.f32 %v182, 0.0
    %v199 = vmax.f32 %v183, 0.0
    %v200 = vmax.f32 %v184, 0.0
    %v201 = vmax.f32 %v185, 0.0
    %v202 = vmax.f32 %v186, 0.0
    %v203 = vmax.f32 %v187, 0.0
    %v204 = vmax.f32 %v188, 0.0
    %v205 = vmax.f32 %v189, 0.0
    %v206 = vlaneseq
    %v207 = vshrl.u32 %v206, 7
    %v208 = vsub.s32 2, %v207
    %v209 = vrot.slane %v33, %v208
    %v210 = vmul.f32 %v190, %v209
    %v211 = vmul.f32 %v191, %v209
    %v212 = vmul.f32 %v192, %v209
    %v213 = vmul.f32 %v193, %v209
    %v214 = vmul.f32 %v194, %v209
    %v215 = vmul.f32 %v195, %v209
    %v216 = vmul.f32 %v196, %v209
    %v217 = vmul.f32 %v197, %v209
    %v218 = vmul.f32 %v198, %v209
    %v219 = vmul.f32 %v199, %v209
    %v220 = vmul.f32 %v200, %v209
    %v221 = vmul.f32 %v201, %v209
    %v222 = vmul.f32 %v202, %v209
    %v223 = vmul.f32 %v203, %v209
    %v224 = vmul.f32 %v204, %v209
    %v225 = vmul.f32 %v205, %v209
    %v226 = vadd.f32 %v158, %v210
    %v227 = vadd.f32 %v159, %v211
    %v228 = vadd.f32 %v160, %v212
    %v229 = vadd.f32 %v161, %v213
    %v230 = vadd.f32 %v162, %v214
    %v231 = vadd.f32 %v163, %v215
    %v232 = vadd.f32 %v164, %v216
    %v233 = vadd.f32 %v165, %v217
    %v234 = vadd.f32 %v166, %v218
    %v235 = vadd.f32 %v167, %v219
    %v236 = vadd.f32 %v168, %v220
    %v237 = vadd.f32 %v169, %v221
    %v238 = vadd.f32 %v170, %v222
    %v239 = vadd.f32 %v171, %v223
    %v240 = vadd.f32 %v172, %v224
    %v241 = vadd.f32 %v173, %v225
    %v242 = vld [vmem:[%s105 + $0x1] sm:$0xff]
    %v243 = vld [vmem:[%s105 + $0x11] sm:$0xff]
    %v244 = vld [vmem:[%s105 + $0x21] sm:$0xff]
    %v245 = vld [vmem:[%s105 + $0x31] sm:$0xff]
    %v246 = vld [vmem:[%s105 + $0x41] sm:$0xff]
    %v247 = vld [vmem:[%s105 + $0x51] sm:$0xff]
    %v248 = vld [vmem:[%s105 + $0x61] sm:$0xff]
    %v249 = vld [vmem:[%s105 + $0x71] sm:$0xff]
    %v250 = vld [vmem:[%s105 + $0xa1] sm:$0xff]
    %v251 = vld [vmem:[%s105 + $0xb1] sm:$0xff]
    %v252 = vld [vmem:[%s105 + $0xc1] sm:$0xff]
    %v253 = vld [vmem:[%s105 + $0xd1] sm:$0xff]
    %v254 = vld [vmem:[%s105 + $0xe1] sm:$0xff]
    %v255 = vld [vmem:[%s105 + $0xf1] sm:$0xff]
    %v256 = vld [vmem:[%s105 + $0x101] sm:$0xff]
    %v257 = vld [vmem:[%s105 + $0x111] sm:$0xff]
    %v258 = vmax.f32 %v242, 0.0
    %v259 = vmax.f32 %v243, 0.0
    %v260 = vmax.f32 %v244, 0.0
    %v261 = vmax.f32 %v245, 0.0
    %v262 = vmax.f32 %v246, 0.0
    %v263 = vmax.f32 %v247, 0.0
    %v264 = vmax.f32 %v248, 0.0
    %v265 = vmax.f32 %v249, 0.0
    %v266 = vmax.f32 %v250, 0.0
    %v267 = vmax.f32 %v251, 0.0
    %v268 = vmax.f32 %v252, 0.0
    %v269 = vmax.f32 %v253, 0.0
    %v270 = vmax.f32 %v254, 0.0
    %v271 = vmax.f32 %v255, 0.0
    %v272 = vmax.f32 %v256, 0.0
    %v273 = vmax.f32 %v257, 0.0
    %v274 = vlaneseq
    %v275 = vshrl.u32 %v274, 7
    %v276 = vsub.s32 3, %v275
    %v277 = vrot.slane %v33, %v276
    %v278 = vmul.f32 %v258, %v277
    %v279 = vmul.f32 %v259, %v277
    %v280 = vmul.f32 %v260, %v277
    %v281 = vmul.f32 %v261, %v277
    %v282 = vmul.f32 %v262, %v277
    %v283 = vmul.f32 %v263, %v277
    %v284 = vmul.f32 %v264, %v277
    %v285 = vmul.f32 %v265, %v277
    %v286 = vmul.f32 %v266, %v277
    %v287 = vmul.f32 %v267, %v277
    %v288 = vmul.f32 %v268, %v277
    %v289 = vmul.f32 %v269, %v277
    %v290 = vmul.f32 %v270, %v277
    %v291 = vmul.f32 %v271, %v277
    %v292 = vmul.f32 %v272, %v277
    %v293 = vmul.f32 %v273, %v277
    %v294 = vadd.f32 %v226, %v278
    %v295 = vadd.f32 %v227, %v279
    %v296 = vadd.f32 %v228, %v280
    %v297 = vadd.f32 %v229, %v281
    %v298 = vadd.f32 %v230, %v282
    %v299 = vadd.f32 %v231, %v283
    %v300 = vadd.f32 %v232, %v284
    %v301 = vadd.f32 %v233, %v285
    %v302 = vadd.f32 %v234, %v286
    %v303 = vadd.f32 %v235, %v287
    %v304 = vadd.f32 %v236, %v288
    %v305 = vadd.f32 %v237, %v289
    %v306 = vadd.f32 %v238, %v290
    %v307 = vadd.f32 %v239, %v291
    %v308 = vadd.f32 %v240, %v292
    %v309 = vadd.f32 %v241, %v293
    %v310 = vld [vmem:[%s0 + $0x2] sm:$0xff]
    %v311 = vld [vmem:[%s0 + $0x12] sm:$0xff]
    %v312 = vld [vmem:[%s0 + $0x22] sm:$0xff]
    %v313 = vld [vmem:[%s0 + $0x32] sm:$0xff]
    %v314 = vld [vmem:[%s0 + $0x42] sm:$0xff]
    %v315 = vld [vmem:[%s0 + $0x52] sm:$0xff]
    %v316 = vld [vmem:[%s0 + $0x62] sm:$0xff]
    %v317 = vld [vmem:[%s0 + $0x72] sm:$0xff]
    %v318 = vld [vmem:[%s0 + $0xa2] sm:$0xff]
    %v319 = vld [vmem:[%s0 + $0xb2] sm:$0xff]
    %v320 = vld [vmem:[%s0 + $0xc2] sm:$0xff]
    %v321 = vld [vmem:[%s0 + $0xd2] sm:$0xff]
    %v322 = vld [vmem:[%s0 + $0xe2] sm:$0xff]
    %v323 = vld [vmem:[%s0 + $0xf2] sm:$0xff]
    %v324 = vld [vmem:[%s0 + $0x102] sm:$0xff]
    %v325 = vld [vmem:[%s0 + $0x112] sm:$0xff]
    %v326 = vmax.f32 %v310, 0.0
    %v327 = vmax.f32 %v311, 0.0
    %v328 = vmax.f32 %v312, 0.0
    %v329 = vmax.f32 %v313, 0.0
    %v330 = vmax.f32 %v314, 0.0
    %v331 = vmax.f32 %v315, 0.0
    %v332 = vmax.f32 %v316, 0.0
    %v333 = vmax.f32 %v317, 0.0
    %v334 = vmax.f32 %v318, 0.0
    %v335 = vmax.f32 %v319, 0.0
    %v336 = vmax.f32 %v320, 0.0
    %v337 = vmax.f32 %v321, 0.0
    %v338 = vmax.f32 %v322, 0.0
    %v339 = vmax.f32 %v323, 0.0
    %v340 = vmax.f32 %v324, 0.0
    %v341 = vmax.f32 %v325, 0.0
    %v342 = vlaneseq
    %v343 = vshrl.u32 %v342, 7
    %v344 = vsub.s32 4, %v343
    %v345 = vrot.slane %v33, %v344
    %v346 = vmul.f32 %v326, %v345
    %v347 = vmul.f32 %v327, %v345
    %v348 = vmul.f32 %v328, %v345
    %v349 = vmul.f32 %v329, %v345
    %v350 = vmul.f32 %v330, %v345
    %v351 = vmul.f32 %v331, %v345
    %v352 = vmul.f32 %v332, %v345
    %v353 = vmul.f32 %v333, %v345
    %v354 = vmul.f32 %v334, %v345
    %v355 = vmul.f32 %v335, %v345
    %v356 = vmul.f32 %v336, %v345
    %v357 = vmul.f32 %v337, %v345
    %v358 = vmul.f32 %v338, %v345
    %v359 = vmul.f32 %v339, %v345
    %v360 = vmul.f32 %v340, %v345
    %v361 = vmul.f32 %v341, %v345
    %v362 = vadd.f32 %v294, %v346
    %v363 = vadd.f32 %v295, %v347
    %v364 = vadd.f32 %v296, %v348
    %v365 = vadd.f32 %v297, %v349
    %v366 = vadd.f32 %v298, %v350
    %v367 = vadd.f32 %v299, %v351
    %v368 = vadd.f32 %v300, %v352
    %v369 = vadd.f32 %v301, %v353
    %v370 = vadd.f32 %v302, %v354
    %v371 = vadd.f32 %v303, %v355
    %v372 = vadd.f32 %v304, %v356
    %v373 = vadd.f32 %v305, %v357
    %v374 = vadd.f32 %v306, %v358
    %v375 = vadd.f32 %v307, %v359
    %v376 = vadd.f32 %v308, %v360
    %v377 = vadd.f32 %v309, %v361
    %s378 = scalar_lea.vmem %s0, 640
    %v379 = vld [vmem:[%s378] sm:$0xff]
    %v380 = vld [vmem:[%s378 + $0x10] sm:$0xff]
    %v381 = vld [vmem:[%s378 + $0x20] sm:$0xff]
    %v382 = vld [vmem:[%s378 + $0x30] sm:$0xff]
    %v383 = vld [vmem:[%s378 + $0x40] sm:$0xff]
    %v384 = vld [vmem:[%s378 + $0x50] sm:$0xff]
    %v385 = vld [vmem:[%s378 + $0x60] sm:$0xff]
    %v386 = vld [vmem:[%s378 + $0x70] sm:$0xff]
    %v387 = vld [vmem:[%s378 + $0xa0] sm:$0xff]
    %v388 = vld [vmem:[%s378 + $0xb0] sm:$0xff]
    %v389 = vld [vmem:[%s378 + $0xc0] sm:$0xff]
    %v390 = vld [vmem:[%s378 + $0xd0] sm:$0xff]
    %v391 = vld [vmem:[%s378 + $0xe0] sm:$0xff]
    %v392 = vld [vmem:[%s378 + $0xf0] sm:$0xff]
    %v393 = vld [vmem:[%s378 + $0x100] sm:$0xff]
    %v394 = vld [vmem:[%s378 + $0x110] sm:$0xff]
    %v395 = vmax.f32 %v379, 0.0
    %v396 = vmax.f32 %v380, 0.0
    %v397 = vmax.f32 %v381, 0.0
    %v398 = vmax.f32 %v382, 0.0
    %v399 = vmax.f32 %v383, 0.0
    %v400 = vmax.f32 %v384, 0.0
    %v401 = vmax.f32 %v385, 0.0
    %v402 = vmax.f32 %v386, 0.0
    %v403 = vmax.f32 %v387, 0.0
    %v404 = vmax.f32 %v388, 0.0
    %v405 = vmax.f32 %v389, 0.0
    %v406 = vmax.f32 %v390, 0.0
    %v407 = vmax.f32 %v391, 0.0
    %v408 = vmax.f32 %v392, 0.0
    %v409 = vmax.f32 %v393, 0.0
    %v410 = vmax.f32 %v394, 0.0
    %v411 = vlaneseq
    %v412 = vshrl.u32 %v411, 7
    %v413 = vsub.s32 5, %v412
    %v414 = vrot.slane %v33, %v413
    %v415 = vmul.f32 %v395, %v414
    %v416 = vmul.f32 %v396, %v414
    %v417 = vmul.f32 %v397, %v414
    %v418 = vmul.f32 %v398, %v414
    %v419 = vmul.f32 %v399, %v414
    %v420 = vmul.f32 %v400, %v414
    %v421 = vmul.f32 %v401, %v414
    %v422 = vmul.f32 %v402, %v414
    %v423 = vmul.f32 %v403, %v414
    %v424 = vmul.f32 %v404, %v414
    %v425 = vmul.f32 %v405, %v414
    %v426 = vmul.f32 %v406, %v414
    %v427 = vmul.f32 %v407, %v414
    %v428 = vmul.f32 %v408, %v414
    %v429 = vmul.f32 %v409, %v414
    %v430 = vmul.f32 %v410, %v414
    %v431 = vadd.f32 %v362, %v415
    %v432 = vadd.f32 %v363, %v416
    %v433 = vadd.f32 %v364, %v417
    %v434 = vadd.f32 %v365, %v418
    %v435 = vadd.f32 %v366, %v419
    %v436 = vadd.f32 %v367, %v420
    %v437 = vadd.f32 %v368, %v421
    %v438 = vadd.f32 %v369, %v422
    %v439 = vadd.f32 %v370, %v423
    %v440 = vadd.f32 %v371, %v424
    %v441 = vadd.f32 %v372, %v425
    %v442 = vadd.f32 %v373, %v426
    %v443 = vadd.f32 %v374, %v427
    %v444 = vadd.f32 %v375, %v428
    %v445 = vadd.f32 %v376, %v429
    %v446 = vadd.f32 %v377, %v430
    %s447 = scalar_lea.vmem %s0, 960
    %v448 = vld [vmem:[%s447] sm:$0xff]
    %v449 = vld [vmem:[%s447 + $0x10] sm:$0xff]
    %v450 = vld [vmem:[%s447 + $0x20] sm:$0xff]
    %v451 = vld [vmem:[%s447 + $0x30] sm:$0xff]
    %v452 = vld [vmem:[%s447 + $0x40] sm:$0xff]
    %v453 = vld [vmem:[%s447 + $0x50] sm:$0xff]
    %v454 = vld [vmem:[%s447 + $0x60] sm:$0xff]
    %v455 = vld [vmem:[%s447 + $0x70] sm:$0xff]
    %v456 = vld [vmem:[%s447 + $0xa0] sm:$0xff]
    %v457 = vld [vmem:[%s447 + $0xb0] sm:$0xff]
    %v458 = vld [vmem:[%s447 + $0xc0] sm:$0xff]
    %v459 = vld [vmem:[%s447 + $0xd0] sm:$0xff]
    %v460 = vld [vmem:[%s447 + $0xe0] sm:$0xff]
    %v461 = vld [vmem:[%s447 + $0xf0] sm:$0xff]
    %v462 = vld [vmem:[%s447 + $0x100] sm:$0xff]
    %v463 = vld [vmem:[%s447 + $0x110] sm:$0xff]
    %v464 = vmax.f32 %v448, 0.0
    %v465 = vmax.f32 %v449, 0.0
    %v466 = vmax.f32 %v450, 0.0
    %v467 = vmax.f32 %v451, 0.0
    %v468 = vmax.f32 %v452, 0.0
    %v469 = vmax.f32 %v453, 0.0
    %v470 = vmax.f32 %v454, 0.0
    %v471 = vmax.f32 %v455, 0.0
    %v472 = vmax.f32 %v456, 0.0
    %v473 = vmax.f32 %v457, 0.0
    %v474 = vmax.f32 %v458, 0.0
    %v475 = vmax.f32 %v459, 0.0
    %v476 = vmax.f32 %v460, 0.0
    %v477 = vmax.f32 %v461, 0.0
    %v478 = vmax.f32 %v462, 0.0
    %v479 = vmax.f32 %v463, 0.0
    %v480 = vlaneseq
    %v481 = vshrl.u32 %v480, 7
    %v482 = vsub.s32 6, %v481
    %v483 = vrot.slane %v33, %v482
    %v484 = vmul.f32 %v464, %v483
    %v485 = vmul.f32 %v465, %v483
    %v486 = vmul.f32 %v466, %v483
    %v487 = vmul.f32 %v467, %v483
    %v488 = vmul.f32 %v468, %v483
    %v489 = vmul.f32 %v469, %v483
    %v490 = vmul.f32 %v470, %v483
    %v491 = vmul.f32 %v471, %v483
    %v492 = vmul.f32 %v472, %v483
    %v493 = vmul.f32 %v473, %v483
    %v494 = vmul.f32 %v474, %v483
    %v495 = vmul.f32 %v475, %v483
    %v496 = vmul.f32 %v476, %v483
    %v497 = vmul.f32 %v477, %v483
    %v498 = vmul.f32 %v478, %v483
    %v499 = vmul.f32 %v479, %v483
    %v500 = vadd.f32 %v431, %v484
    %v501 = vadd.f32 %v432, %v485
    %v502 = vadd.f32 %v433, %v486
    %v503 = vadd.f32 %v434, %v487
    %v504 = vadd.f32 %v435, %v488
    %v505 = vadd.f32 %v436, %v489
    %v506 = vadd.f32 %v437, %v490
    %v507 = vadd.f32 %v438, %v491
    %v508 = vadd.f32 %v439, %v492
    %v509 = vadd.f32 %v440, %v493
    %v510 = vadd.f32 %v441, %v494
    %v511 = vadd.f32 %v442, %v495
    %v512 = vadd.f32 %v443, %v496
    %v513 = vadd.f32 %v444, %v497
    %v514 = vadd.f32 %v445, %v498
    %v515 = vadd.f32 %v446, %v499
    %v516 = vld [vmem:[%s378 + $0x1] sm:$0xff]
    %v517 = vld [vmem:[%s378 + $0x11] sm:$0xff]
    %v518 = vld [vmem:[%s378 + $0x21] sm:$0xff]
    %v519 = vld [vmem:[%s378 + $0x31] sm:$0xff]
    %v520 = vld [vmem:[%s378 + $0x41] sm:$0xff]
    %v521 = vld [vmem:[%s378 + $0x51] sm:$0xff]
    %v522 = vld [vmem:[%s378 + $0x61] sm:$0xff]
    %v523 = vld [vmem:[%s378 + $0x71] sm:$0xff]
    %v524 = vld [vmem:[%s378 + $0xa1] sm:$0xff]
    %v525 = vld [vmem:[%s378 + $0xb1] sm:$0xff]
    %v526 = vld [vmem:[%s378 + $0xc1] sm:$0xff]
    %v527 = vld [vmem:[%s378 + $0xd1] sm:$0xff]
    %v528 = vld [vmem:[%s378 + $0xe1] sm:$0xff]
    %v529 = vld [vmem:[%s378 + $0xf1] sm:$0xff]
    %v530 = vld [vmem:[%s378 + $0x101] sm:$0xff]
    %v531 = vld [vmem:[%s378 + $0x111] sm:$0xff]
    %v532 = vmax.f32 %v516, 0.0
    %v533 = vmax.f32 %v517, 0.0
    %v534 = vmax.f32 %v518, 0.0
    %v535 = vmax.f32 %v519, 0.0
    %v536 = vmax.f32 %v520, 0.0
    %v537 = vmax.f32 %v521, 0.0
    %v538 = vmax.f32 %v522, 0.0
    %v539 = vmax.f32 %v523, 0.0
    %v540 = vmax.f32 %v524, 0.0
    %v541 = vmax.f32 %v525, 0.0
    %v542 = vmax.f32 %v526, 0.0
    %v543 = vmax.f32 %v527, 0.0
    %v544 = vmax.f32 %v528, 0.0
    %v545 = vmax.f32 %v529, 0.0
    %v546 = vmax.f32 %v530, 0.0
    %v547 = vmax.f32 %v531, 0.0
    %v548 = vlaneseq
    %v549 = vshrl.u32 %v548, 7
    %v550 = vsub.s32 7, %v549
    %v551 = vrot.slane %v33, %v550
    %v552 = vmul.f32 %v532, %v551
    %v553 = vmul.f32 %v533, %v551
    %v554 = vmul.f32 %v534, %v551
    %v555 = vmul.f32 %v535, %v551
    %v556 = vmul.f32 %v536, %v551
    %v557 = vmul.f32 %v537, %v551
    %v558 = vmul.f32 %v538, %v551
    %v559 = vmul.f32 %v539, %v551
    %v560 = vmul.f32 %v540, %v551
    %v561 = vmul.f32 %v541, %v551
    %v562 = vmul.f32 %v542, %v551
    %v563 = vmul.f32 %v543, %v551
    %v564 = vmul.f32 %v544, %v551
    %v565 = vmul.f32 %v545, %v551
    %v566 = vmul.f32 %v546, %v551
    %v567 = vmul.f32 %v547, %v551
    %v568 = vadd.f32 %v500, %v552
    %v569 = vadd.f32 %v501, %v553
    %v570 = vadd.f32 %v502, %v554
    %v571 = vadd.f32 %v503, %v555
    %v572 = vadd.f32 %v504, %v556
    %v573 = vadd.f32 %v505, %v557
    %v574 = vadd.f32 %v506, %v558
    %v575 = vadd.f32 %v507, %v559
    %v576 = vadd.f32 %v508, %v560
    %v577 = vadd.f32 %v509, %v561
    %v578 = vadd.f32 %v510, %v562
    %v579 = vadd.f32 %v511, %v563
    %v580 = vadd.f32 %v512, %v564
    %v581 = vadd.f32 %v513, %v565
    %v582 = vadd.f32 %v514, %v566
    %v583 = vadd.f32 %v515, %v567
    %v584 = vld [vmem:[%s447 + $0x1] sm:$0xff]
    %v585 = vld [vmem:[%s447 + $0x11] sm:$0xff]
    %v586 = vld [vmem:[%s447 + $0x21] sm:$0xff]
    %v587 = vld [vmem:[%s447 + $0x31] sm:$0xff]
    %v588 = vld [vmem:[%s447 + $0x41] sm:$0xff]
    %v589 = vld [vmem:[%s447 + $0x51] sm:$0xff]
    %v590 = vld [vmem:[%s447 + $0x61] sm:$0xff]
    %v591 = vld [vmem:[%s447 + $0x71] sm:$0xff]
    %v592 = vld [vmem:[%s447 + $0xa1] sm:$0xff]
    %v593 = vld [vmem:[%s447 + $0xb1] sm:$0xff]
    %v594 = vld [vmem:[%s447 + $0xc1] sm:$0xff]
    %v595 = vld [vmem:[%s447 + $0xd1] sm:$0xff]
    %v596 = vld [vmem:[%s447 + $0xe1] sm:$0xff]
    %v597 = vld [vmem:[%s447 + $0xf1] sm:$0xff]
    %v598 = vld [vmem:[%s447 + $0x101] sm:$0xff]
    %v599 = vld [vmem:[%s447 + $0x111] sm:$0xff]
    %v600 = vmax.f32 %v584, 0.0
    %v601 = vmax.f32 %v585, 0.0
    %v602 = vmax.f32 %v586, 0.0
    %v603 = vmax.f32 %v587, 0.0
    %v604 = vmax.f32 %v588, 0.0
    %v605 = vmax.f32 %v589, 0.0
    %v606 = vmax.f32 %v590, 0.0
    %v607 = vmax.f32 %v591, 0.0
    %v608 = vmax.f32 %v592, 0.0
    %v609 = vmax.f32 %v593, 0.0
    %v610 = vmax.f32 %v594, 0.0
    %v611 = vmax.f32 %v595, 0.0
    %v612 = vmax.f32 %v596, 0.0
    %v613 = vmax.f32 %v597, 0.0
    %v614 = vmax.f32 %v598, 0.0
    %v615 = vmax.f32 %v599, 0.0
    %v616 = vlaneseq
    %v617 = vshrl.u32 %v616, 7
    %v618 = vsub.s32 0, %v617
    %v619 = vrot.slane %v34, %v618
    %v620 = vmul.f32 %v600, %v619
    %v621 = vmul.f32 %v601, %v619
    %v622 = vmul.f32 %v602, %v619
    %v623 = vmul.f32 %v603, %v619
    %v624 = vmul.f32 %v604, %v619
    %v625 = vmul.f32 %v605, %v619
    %v626 = vmul.f32 %v606, %v619
    %v627 = vmul.f32 %v607, %v619
    %v628 = vmul.f32 %v608, %v619
    %v629 = vmul.f32 %v609, %v619
    %v630 = vmul.f32 %v610, %v619
    %v631 = vmul.f32 %v611, %v619
    %v632 = vmul.f32 %v612, %v619
    %v633 = vmul.f32 %v613, %v619
    %v634 = vmul.f32 %v614, %v619
    %v635 = vmul.f32 %v615, %v619
    %v636 = vadd.f32 %v568, %v620
    %v637 = vadd.f32 %v569, %v621
    %v638 = vadd.f32 %v570, %v622
    %v639 = vadd.f32 %v571, %v623
    %v640 = vadd.f32 %v572, %v624
    %v641 = vadd.f32 %v573, %v625
    %v642 = vadd.f32 %v574, %v626
    %v643 = vadd.f32 %v575, %v627
    %v644 = vadd.f32 %v576, %v628
    %v645 = vadd.f32 %v577, %v629
    %v646 = vadd.f32 %v578, %v630
    %v647 = vadd.f32 %v579, %v631
    %v648 = vadd.f32 %v580, %v632
    %v649 = vadd.f32 %v581, %v633
    %v650 = vadd.f32 %v582, %v634
    %v651 = vadd.f32 %v583, %v635
    %v652 = vld [vmem:[%s378 + $0x2] sm:$0xff]
    %v653 = vld [vmem:[%s378 + $0x12] sm:$0xff]
    %v654 = vld [vmem:[%s378 + $0x22] sm:$0xff]
    %v655 = vld [vmem:[%s378 + $0x32] sm:$0xff]
    %v656 = vld [vmem:[%s378 + $0x42] sm:$0xff]
    %v657 = vld [vmem:[%s378 + $0x52] sm:$0xff]
    %v658 = vld [vmem:[%s378 + $0x62] sm:$0xff]
    %v659 = vld [vmem:[%s378 + $0x72] sm:$0xff]
    %v660 = vld [vmem:[%s378 + $0xa2] sm:$0xff]
    %v661 = vld [vmem:[%s378 + $0xb2] sm:$0xff]
    %v662 = vld [vmem:[%s378 + $0xc2] sm:$0xff]
    %v663 = vld [vmem:[%s378 + $0xd2] sm:$0xff]
    %v664 = vld [vmem:[%s378 + $0xe2] sm:$0xff]
    %v665 = vld [vmem:[%s378 + $0xf2] sm:$0xff]
    %v666 = vld [vmem:[%s378 + $0x102] sm:$0xff]
    %v667 = vld [vmem:[%s378 + $0x112] sm:$0xff]
    %v668 = vmax.f32 %v652, 0.0
    %v669 = vmax.f32 %v653, 0.0
    %v670 = vmax.f32 %v654, 0.0
    %v671 = vmax.f32 %v655, 0.0
    %v672 = vmax.f32 %v656, 0.0
    %v673 = vmax.f32 %v657, 0.0
    %v674 = vmax.f32 %v658, 0.0
    %v675 = vmax.f32 %v659, 0.0
    %v676 = vmax.f32 %v660, 0.0
    %v677 = vmax.f32 %v661, 0.0
    %v678 = vmax.f32 %v662, 0.0
    %v679 = vmax.f32 %v663, 0.0
    %v680 = vmax.f32 %v664, 0.0
    %v681 = vmax.f32 %v665, 0.0
    %v682 = vmax.f32 %v666, 0.0
    %v683 = vmax.f32 %v667, 0.0
    %v684 = vlaneseq
    %v685 = vshrl.u32 %v684, 7
    %v686 = vsub.s32 1, %v685
    %v687 = vrot.slane %v34, %v686
    %v688 = vmul.f32 %v668, %v687
    %v689 = vmul.f32 %v669, %v687
    %v690 = vmul.f32 %v670, %v687
    %v691 = vmul.f32 %v671, %v687
    %v692 = vmul.f32 %v672, %v687
    %v693 = vmul.f32 %v673, %v687
    %v694 = vmul.f32 %v674, %v687
    %v695 = vmul.f32 %v675, %v687
    %v696 = vmul.f32 %v676, %v687
    %v697 = vmul.f32 %v677, %v687
    %v698 = vmul.f32 %v678, %v687
    %v699 = vmul.f32 %v679, %v687
    %v700 = vmul.f32 %v680, %v687
    %v701 = vmul.f32 %v681, %v687
    %v702 = vmul.f32 %v682, %v687
    %v703 = vmul.f32 %v683, %v687
    %v704 = vadd.f32 %v636, %v688
    %v705 = vadd.f32 %v637, %v689
    %v706 = vadd.f32 %v638, %v690
    %v707 = vadd.f32 %v639, %v691
    %v708 = vadd.f32 %v640, %v692
    %v709 = vadd.f32 %v641, %v693
    %v710 = vadd.f32 %v642, %v694
    %v711 = vadd.f32 %v643, %v695
    %v712 = vadd.f32 %v644, %v696
    %v713 = vadd.f32 %v645, %v697
    %v714 = vadd.f32 %v646, %v698
    %v715 = vadd.f32 %v647, %v699
    %v716 = vadd.f32 %v648, %v700
    %v717 = vadd.f32 %v649, %v701
    %v718 = vadd.f32 %v650, %v702
    %v719 = vadd.f32 %v651, %v703
    %s720 = scalar_lea.vmem %s0, 16
    %v721 = vld [vmem:[%s720] sm:$0xff]
    %v722 = vld [vmem:[%s720 + $0x10] sm:$0xff]
    %v723 = vld [vmem:[%s720 + $0x20] sm:$0xff]
    %v724 = vld [vmem:[%s720 + $0x30] sm:$0xff]
    %v725 = vld [vmem:[%s720 + $0x40] sm:$0xff]
    %v726 = vld [vmem:[%s720 + $0x50] sm:$0xff]
    %v727 = vld [vmem:[%s720 + $0x60] sm:$0xff]
    %v728 = vld [vmem:[%s720 + $0x70] sm:$0xff]
    %v729 = vld [vmem:[%s720 + $0xa0] sm:$0xff]
    %v730 = vld [vmem:[%s720 + $0xb0] sm:$0xff]
    %v731 = vld [vmem:[%s720 + $0xc0] sm:$0xff]
    %v732 = vld [vmem:[%s720 + $0xd0] sm:$0xff]
    %v733 = vld [vmem:[%s720 + $0xe0] sm:$0xff]
    %v734 = vld [vmem:[%s720 + $0xf0] sm:$0xff]
    %v735 = vld [vmem:[%s720 + $0x100] sm:$0xff]
    %v736 = vld [vmem:[%s720 + $0x110] sm:$0xff]
    %v737 = vmax.f32 %v721, 0.0
    %v738 = vmax.f32 %v722, 0.0
    %v739 = vmax.f32 %v723, 0.0
    %v740 = vmax.f32 %v724, 0.0
    %v741 = vmax.f32 %v725, 0.0
    %v742 = vmax.f32 %v726, 0.0
    %v743 = vmax.f32 %v727, 0.0
    %v744 = vmax.f32 %v728, 0.0
    %v745 = vmax.f32 %v729, 0.0
    %v746 = vmax.f32 %v730, 0.0
    %v747 = vmax.f32 %v731, 0.0
    %v748 = vmax.f32 %v732, 0.0
    %v749 = vmax.f32 %v733, 0.0
    %v750 = vmax.f32 %v734, 0.0
    %v751 = vmax.f32 %v735, 0.0
    %v752 = vmax.f32 %v736, 0.0
    %v753 = vlaneseq
    %v754 = vshrl.u32 %v753, 7
    %v755 = vsub.s32 2, %v754
    %v756 = vrot.slane %v34, %v755
    %v757 = vmul.f32 %v737, %v756
    %v758 = vmul.f32 %v738, %v756
    %v759 = vmul.f32 %v739, %v756
    %v760 = vmul.f32 %v740, %v756
    %v761 = vmul.f32 %v741, %v756
    %v762 = vmul.f32 %v742, %v756
    %v763 = vmul.f32 %v743, %v756
    %v764 = vmul.f32 %v744, %v756
    %v765 = vmul.f32 %v745, %v756
    %v766 = vmul.f32 %v746, %v756
    %v767 = vmul.f32 %v747, %v756
    %v768 = vmul.f32 %v748, %v756
    %v769 = vmul.f32 %v749, %v756
    %v770 = vmul.f32 %v750, %v756
    %v771 = vmul.f32 %v751, %v756
    %v772 = vmul.f32 %v752, %v756
    %v773 = vadd.f32 %v704, %v757
    %v774 = vadd.f32 %v705, %v758
    %v775 = vadd.f32 %v706, %v759
    %v776 = vadd.f32 %v707, %v760
    %v777 = vadd.f32 %v708, %v761
    %v778 = vadd.f32 %v709, %v762
    %v779 = vadd.f32 %v710, %v763
    %v780 = vadd.f32 %v711, %v764
    %v781 = vadd.f32 %v712, %v765
    %v782 = vadd.f32 %v713, %v766
    %v783 = vadd.f32 %v714, %v767
    %v784 = vadd.f32 %v715, %v768
    %v785 = vadd.f32 %v716, %v769
    %v786 = vadd.f32 %v717, %v770
    %v787 = vadd.f32 %v718, %v771
    %v788 = vadd.f32 %v719, %v772
    %s789 = scalar_lea.vmem %s0, 336
    %v790 = vld [vmem:[%s789] sm:$0xff]
    %v791 = vld [vmem:[%s789 + $0x10] sm:$0xff]
    %v792 = vld [vmem:[%s789 + $0x20] sm:$0xff]
    %v793 = vld [vmem:[%s789 + $0x30] sm:$0xff]
    %v794 = vld [vmem:[%s789 + $0x40] sm:$0xff]
    %v795 = vld [vmem:[%s789 + $0x50] sm:$0xff]
    %v796 = vld [vmem:[%s789 + $0x60] sm:$0xff]
    %v797 = vld [vmem:[%s789 + $0x70] sm:$0xff]
    %v798 = vld [vmem:[%s789 + $0xa0] sm:$0xff]
    %v799 = vld [vmem:[%s789 + $0xb0] sm:$0xff]
    %v800 = vld [vmem:[%s789 + $0xc0] sm:$0xff]
    %v801 = vld [vmem:[%s789 + $0xd0] sm:$0xff]
    %v802 = vld [vmem:[%s789 + $0xe0] sm:$0xff]
    %v803 = vld [vmem:[%s789 + $0xf0] sm:$0xff]
    %v804 = vld [vmem:[%s789 + $0x100] sm:$0xff]
    %v805 = vld [vmem:[%s789 + $0x110] sm:$0xff]
    %v806 = vmax.f32 %v790, 0.0
    %v807 = vmax.f32 %v791, 0.0
    %v808 = vmax.f32 %v792, 0.0
    %v809 = vmax.f32 %v793, 0.0
    %v810 = vmax.f32 %v794, 0.0
    %v811 = vmax.f32 %v795, 0.0
    %v812 = vmax.f32 %v796, 0.0
    %v813 = vmax.f32 %v797, 0.0
    %v814 = vmax.f32 %v798, 0.0
    %v815 = vmax.f32 %v799, 0.0
    %v816 = vmax.f32 %v800, 0.0
    %v817 = vmax.f32 %v801, 0.0
    %v818 = vmax.f32 %v802, 0.0
    %v819 = vmax.f32 %v803, 0.0
    %v820 = vmax.f32 %v804, 0.0
    %v821 = vmax.f32 %v805, 0.0
    %v822 = vlaneseq
    %v823 = vshrl.u32 %v822, 7
    %v824 = vsub.s32 3, %v823
    %v825 = vrot.slane %v34, %v824
    %v826 = vmul.f32 %v806, %v825
    %v827 = vmul.f32 %v807, %v825
    %v828 = vmul.f32 %v808, %v825
    %v829 = vmul.f32 %v809, %v825
    %v830 = vmul.f32 %v810, %v825
    %v831 = vmul.f32 %v811, %v825
    %v832 = vmul.f32 %v812, %v825
    %v833 = vmul.f32 %v813, %v825
    %v834 = vmul.f32 %v814, %v825
    %v835 = vmul.f32 %v815, %v825
    %v836 = vmul.f32 %v816, %v825
    %v837 = vmul.f32 %v817, %v825
    %v838 = vmul.f32 %v818, %v825
    %v839 = vmul.f32 %v819, %v825
    %v840 = vmul.f32 %v820, %v825
    %v841 = vmul.f32 %v821, %v825
    %v842 = vadd.f32 %v773, %v826
    %v843 = vadd.f32 %v774, %v827
    %v844 = vadd.f32 %v775, %v828
    %v845 = vadd.f32 %v776, %v829
    %v846 = vadd.f32 %v777, %v830
    %v847 = vadd.f32 %v778, %v831
    %v848 = vadd.f32 %v779, %v832
    %v849 = vadd.f32 %v780, %v833
    %v850 = vadd.f32 %v781, %v834
    %v851 = vadd.f32 %v782, %v835
    %v852 = vadd.f32 %v783, %v836
    %v853 = vadd.f32 %v784, %v837
    %v854 = vadd.f32 %v785, %v838
    %v855 = vadd.f32 %v786, %v839
    %v856 = vadd.f32 %v787, %v840
    %v857 = vadd.f32 %v788, %v841
    %v858 = vld [vmem:[%s720 + $0x1] sm:$0xff]
    %v859 = vld [vmem:[%s720 + $0x11] sm:$0xff]
    %v860 = vld [vmem:[%s720 + $0x21] sm:$0xff]
    %v861 = vld [vmem:[%s720 + $0x31] sm:$0xff]
    %v862 = vld [vmem:[%s720 + $0x41] sm:$0xff]
    %v863 = vld [vmem:[%s720 + $0x51] sm:$0xff]
    %v864 = vld [vmem:[%s720 + $0x61] sm:$0xff]
    %v865 = vld [vmem:[%s720 + $0x71] sm:$0xff]
    %v866 = vld [vmem:[%s720 + $0xa1] sm:$0xff]
    %v867 = vld [vmem:[%s720 + $0xb1] sm:$0xff]
    %v868 = vld [vmem:[%s720 + $0xc1] sm:$0xff]
    %v869 = vld [vmem:[%s720 + $0xd1] sm:$0xff]
    %v870 = vld [vmem:[%s720 + $0xe1] sm:$0xff]
    %v871 = vld [vmem:[%s720 + $0xf1] sm:$0xff]
    %v872 = vld [vmem:[%s720 + $0x101] sm:$0xff]
    %v873 = vld [vmem:[%s720 + $0x111] sm:$0xff]
    %v874 = vmax.f32 %v858, 0.0
    %v875 = vmax.f32 %v859, 0.0
    %v876 = vmax.f32 %v860, 0.0
    %v877 = vmax.f32 %v861, 0.0
    %v878 = vmax.f32 %v862, 0.0
    %v879 = vmax.f32 %v863, 0.0
    %v880 = vmax.f32 %v864, 0.0
    %v881 = vmax.f32 %v865, 0.0
    %v882 = vmax.f32 %v866, 0.0
    %v883 = vmax.f32 %v867, 0.0
    %v884 = vmax.f32 %v868, 0.0
    %v885 = vmax.f32 %v869, 0.0
    %v886 = vmax.f32 %v870, 0.0
    %v887 = vmax.f32 %v871, 0.0
    %v888 = vmax.f32 %v872, 0.0
    %v889 = vmax.f32 %v873, 0.0
    %v890 = vlaneseq
    %v891 = vshrl.u32 %v890, 7
    %v892 = vsub.s32 4, %v891
    %v893 = vrot.slane %v34, %v892
    %v894 = vmul.f32 %v874, %v893
    %v895 = vmul.f32 %v875, %v893
    %v896 = vmul.f32 %v876, %v893
    %v897 = vmul.f32 %v877, %v893
    %v898 = vmul.f32 %v878, %v893
    %v899 = vmul.f32 %v879, %v893
    %v900 = vmul.f32 %v880, %v893
    %v901 = vmul.f32 %v881, %v893
    %v902 = vmul.f32 %v882, %v893
    %v903 = vmul.f32 %v883, %v893
    %v904 = vmul.f32 %v884, %v893
    %v905 = vmul.f32 %v885, %v893
    %v906 = vmul.f32 %v886, %v893
    %v907 = vmul.f32 %v887, %v893
    %v908 = vmul.f32 %v888, %v893
    %v909 = vmul.f32 %v889, %v893
    %v910 = vadd.f32 %v842, %v894
    %v911 = vadd.f32 %v843, %v895
    %v912 = vadd.f32 %v844, %v896
    %v913 = vadd.f32 %v845, %v897
    %v914 = vadd.f32 %v846, %v898
    %v915 = vadd.f32 %v847, %v899
    %v916 = vadd.f32 %v848, %v900
    %v917 = vadd.f32 %v849, %v901
    %v918 = vadd.f32 %v850, %v902
    %v919 = vadd.f32 %v851, %v903
    %v920 = vadd.f32 %v852, %v904
    %v921 = vadd.f32 %v853, %v905
    %v922 = vadd.f32 %v854, %v906
    %v923 = vadd.f32 %v855, %v907
    %v924 = vadd.f32 %v856, %v908
    %v925 = vadd.f32 %v857, %v909
    %v926 = vld [vmem:[%s789 + $0x1] sm:$0xff]
    %v927 = vld [vmem:[%s789 + $0x11] sm:$0xff]
    %v928 = vld [vmem:[%s789 + $0x21] sm:$0xff]
    %v929 = vld [vmem:[%s789 + $0x31] sm:$0xff]
    %v930 = vld [vmem:[%s789 + $0x41] sm:$0xff]
    %v931 = vld [vmem:[%s789 + $0x51] sm:$0xff]
    %v932 = vld [vmem:[%s789 + $0x61] sm:$0xff]
    %v933 = vld [vmem:[%s789 + $0x71] sm:$0xff]
    %v934 = vld [vmem:[%s789 + $0xa1] sm:$0xff]
    %v935 = vld [vmem:[%s789 + $0xb1] sm:$0xff]
    %v936 = vld [vmem:[%s789 + $0xc1] sm:$0xff]
    %v937 = vld [vmem:[%s789 + $0xd1] sm:$0xff]
    %v938 = vld [vmem:[%s789 + $0xe1] sm:$0xff]
    %v939 = vld [vmem:[%s789 + $0xf1] sm:$0xff]
    %v940 = vld [vmem:[%s789 + $0x101] sm:$0xff]
    %v941 = vld [vmem:[%s789 + $0x111] sm:$0xff]
    %v942 = vmax.f32 %v926, 0.0
    %v943 = vmax.f32 %v927, 0.0
    %v944 = vmax.f32 %v928, 0.0
    %v945 = vmax.f32 %v929, 0.0
    %v946 = vmax.f32 %v930, 0.0
    %v947 = vmax.f32 %v931, 0.0
    %v948 = vmax.f32 %v932, 0.0
    %v949 = vmax.f32 %v933, 0.0
    %v950 = vmax.f32 %v934, 0.0
    %v951 = vmax.f32 %v935, 0.0
    %v952 = vmax.f32 %v936, 0.0
    %v953 = vmax.f32 %v937, 0.0
    %v954 = vmax.f32 %v938, 0.0
    %v955 = vmax.f32 %v939, 0.0
    %v956 = vmax.f32 %v940, 0.0
    %v957 = vmax.f32 %v941, 0.0
    %v958 = vlaneseq
    %v959 = vshrl.u32 %v958, 7
    %v960 = vsub.s32 5, %v959
    %v961 = vrot.slane %v34, %v960
    %v962 = vmul.f32 %v942, %v961
    %v963 = vmul.f32 %v943, %v961
    %v964 = vmul.f32 %v944, %v961
    %v965 = vmul.f32 %v945, %v961
    %v966 = vmul.f32 %v946, %v961
    %v967 = vmul.f32 %v947, %v961
    %v968 = vmul.f32 %v948, %v961
    %v969 = vmul.f32 %v949, %v961
    %v970 = vmul.f32 %v950, %v961
    %v971 = vmul.f32 %v951, %v961
    %v972 = vmul.f32 %v952, %v961
    %v973 = vmul.f32 %v953, %v961
    %v974 = vmul.f32 %v954, %v961
    %v975 = vmul.f32 %v955, %v961
    %v976 = vmul.f32 %v956, %v961
    %v977 = vmul.f32 %v957, %v961
    %v978 = vadd.f32 %v910, %v962
    %v979 = vadd.f32 %v911, %v963
    %v980 = vadd.f32 %v912, %v964
    %v981 = vadd.f32 %v913, %v965
    %v982 = vadd.f32 %v914, %v966
    %v983 = vadd.f32 %v915, %v967
    %v984 = vadd.f32 %v916, %v968
    %v985 = vadd.f32 %v917, %v969
    %v986 = vadd.f32 %v918, %v970
    %v987 = vadd.f32 %v919, %v971
    %v988 = vadd.f32 %v920, %v972
    %v989 = vadd.f32 %v921, %v973
    %v990 = vadd.f32 %v922, %v974
    %v991 = vadd.f32 %v923, %v975
    %v992 = vadd.f32 %v924, %v976
    %v993 = vadd.f32 %v925, %v977
    %v994 = vld [vmem:[%s720 + $0x2] sm:$0xff]
    %v995 = vld [vmem:[%s720 + $0x12] sm:$0xff]
    %v996 = vld [vmem:[%s720 + $0x22] sm:$0xff]
    %v997 = vld [vmem:[%s720 + $0x32] sm:$0xff]
    %v998 = vld [vmem:[%s720 + $0x42] sm:$0xff]
    %v999 = vld [vmem:[%s720 + $0x52] sm:$0xff]
    %v1000 = vld [vmem:[%s720 + $0x62] sm:$0xff]
    %v1001 = vld [vmem:[%s720 + $0x72] sm:$0xff]
    %v1002 = vld [vmem:[%s720 + $0xa2] sm:$0xff]
    %v1003 = vld [vmem:[%s720 + $0xb2] sm:$0xff]
    %v1004 = vld [vmem:[%s720 + $0xc2] sm:$0xff]
    %v1005 = vld [vmem:[%s720 + $0xd2] sm:$0xff]
    %v1006 = vld [vmem:[%s720 + $0xe2] sm:$0xff]
    %v1007 = vld [vmem:[%s720 + $0xf2] sm:$0xff]
    %v1008 = vld [vmem:[%s720 + $0x102] sm:$0xff]
    %v1009 = vld [vmem:[%s720 + $0x112] sm:$0xff]
    %v1010 = vmax.f32 %v994, 0.0
    %v1011 = vmax.f32 %v995, 0.0
    %v1012 = vmax.f32 %v996, 0.0
    %v1013 = vmax.f32 %v997, 0.0
    %v1014 = vmax.f32 %v998, 0.0
    %v1015 = vmax.f32 %v999, 0.0
    %v1016 = vmax.f32 %v1000, 0.0
    %v1017 = vmax.f32 %v1001, 0.0
    %v1018 = vmax.f32 %v1002, 0.0
    %v1019 = vmax.f32 %v1003, 0.0
    %v1020 = vmax.f32 %v1004, 0.0
    %v1021 = vmax.f32 %v1005, 0.0
    %v1022 = vmax.f32 %v1006, 0.0
    %v1023 = vmax.f32 %v1007, 0.0
    %v1024 = vmax.f32 %v1008, 0.0
    %v1025 = vmax.f32 %v1009, 0.0
    %v1026 = vlaneseq
    %v1027 = vshrl.u32 %v1026, 7
    %v1028 = vsub.s32 6, %v1027
    %v1029 = vrot.slane %v34, %v1028
    %v1030 = vmul.f32 %v1010, %v1029
    %v1031 = vmul.f32 %v1011, %v1029
    %v1032 = vmul.f32 %v1012, %v1029
    %v1033 = vmul.f32 %v1013, %v1029
    %v1034 = vmul.f32 %v1014, %v1029
    %v1035 = vmul.f32 %v1015, %v1029
    %v1036 = vmul.f32 %v1016, %v1029
    %v1037 = vmul.f32 %v1017, %v1029
    %v1038 = vmul.f32 %v1018, %v1029
    %v1039 = vmul.f32 %v1019, %v1029
    %v1040 = vmul.f32 %v1020, %v1029
    %v1041 = vmul.f32 %v1021, %v1029
    %v1042 = vmul.f32 %v1022, %v1029
    %v1043 = vmul.f32 %v1023, %v1029
    %v1044 = vmul.f32 %v1024, %v1029
    %v1045 = vmul.f32 %v1025, %v1029
    %v1046 = vadd.f32 %v978, %v1030
    %v1047 = vadd.f32 %v979, %v1031
    %v1048 = vadd.f32 %v980, %v1032
    %v1049 = vadd.f32 %v981, %v1033
    %v1050 = vadd.f32 %v982, %v1034
    %v1051 = vadd.f32 %v983, %v1035
    %v1052 = vadd.f32 %v984, %v1036
    %v1053 = vadd.f32 %v985, %v1037
    %v1054 = vadd.f32 %v986, %v1038
    %v1055 = vadd.f32 %v987, %v1039
    %v1056 = vadd.f32 %v988, %v1040
    %v1057 = vadd.f32 %v989, %v1041
    %v1058 = vadd.f32 %v990, %v1042
    %v1059 = vadd.f32 %v991, %v1043
    %v1060 = vadd.f32 %v992, %v1044
    %v1061 = vadd.f32 %v993, %v1045
    %s1062 = scalar_lea.vmem %s0, 656
    %v1063 = vld [vmem:[%s1062] sm:$0xff]
    %v1064 = vld [vmem:[%s1062 + $0x10] sm:$0xff]
    %v1065 = vld [vmem:[%s1062 + $0x20] sm:$0xff]
    %v1066 = vld [vmem:[%s1062 + $0x30] sm:$0xff]
    %v1067 = vld [vmem:[%s1062 + $0x40] sm:$0xff]
    %v1068 = vld [vmem:[%s1062 + $0x50] sm:$0xff]
    %v1069 = vld [vmem:[%s1062 + $0x60] sm:$0xff]
    %v1070 = vld [vmem:[%s1062 + $0x70] sm:$0xff]
    %v1071 = vld [vmem:[%s1062 + $0xa0] sm:$0xff]
    %v1072 = vld [vmem:[%s1062 + $0xb0] sm:$0xff]
    %v1073 = vld [vmem:[%s1062 + $0xc0] sm:$0xff]
    %v1074 = vld [vmem:[%s1062 + $0xd0] sm:$0xff]
    %v1075 = vld [vmem:[%s1062 + $0xe0] sm:$0xff]
    %v1076 = vld [vmem:[%s1062 + $0xf0] sm:$0xff]
    %v1077 = vld [vmem:[%s1062 + $0x100] sm:$0xff]
    %v1078 = vld [vmem:[%s1062 + $0x110] sm:$0xff]
    %v1079 = vmax.f32 %v1063, 0.0
    %v1080 = vmax.f32 %v1064, 0.0
    %v1081 = vmax.f32 %v1065, 0.0
    %v1082 = vmax.f32 %v1066, 0.0
    %v1083 = vmax.f32 %v1067, 0.0
    %v1084 = vmax.f32 %v1068, 0.0
    %v1085 = vmax.f32 %v1069, 0.0
    %v1086 = vmax.f32 %v1070, 0.0
    %v1087 = vmax.f32 %v1071, 0.0
    %v1088 = vmax.f32 %v1072, 0.0
    %v1089 = vmax.f32 %v1073, 0.0
    %v1090 = vmax.f32 %v1074, 0.0
    %v1091 = vmax.f32 %v1075, 0.0
    %v1092 = vmax.f32 %v1076, 0.0
    %v1093 = vmax.f32 %v1077, 0.0
    %v1094 = vmax.f32 %v1078, 0.0
    %v1095 = vlaneseq
    %v1096 = vshrl.u32 %v1095, 7
    %v1097 = vsub.s32 7, %v1096
    %v1098 = vrot.slane %v34, %v1097
    %v1099 = vmul.f32 %v1079, %v1098
    %v1100 = vmul.f32 %v1080, %v1098
    %v1101 = vmul.f32 %v1081, %v1098
    %v1102 = vmul.f32 %v1082, %v1098
    %v1103 = vmul.f32 %v1083, %v1098
    %v1104 = vmul.f32 %v1084, %v1098
    %v1105 = vmul.f32 %v1085, %v1098
    %v1106 = vmul.f32 %v1086, %v1098
    %v1107 = vmul.f32 %v1087, %v1098
    %v1108 = vmul.f32 %v1088, %v1098
    %v1109 = vmul.f32 %v1089, %v1098
    %v1110 = vmul.f32 %v1090, %v1098
    %v1111 = vmul.f32 %v1091, %v1098
    %v1112 = vmul.f32 %v1092, %v1098
    %v1113 = vmul.f32 %v1093, %v1098
    %v1114 = vmul.f32 %v1094, %v1098
    %v1115 = vadd.f32 %v1046, %v1099
    %v1116 = vadd.f32 %v1047, %v1100
    %v1117 = vadd.f32 %v1048, %v1101
    %v1118 = vadd.f32 %v1049, %v1102
    %v1119 = vadd.f32 %v1050, %v1103
    %v1120 = vadd.f32 %v1051, %v1104
    %v1121 = vadd.f32 %v1052, %v1105
    %v1122 = vadd.f32 %v1053, %v1106
    %v1123 = vadd.f32 %v1054, %v1107
    %v1124 = vadd.f32 %v1055, %v1108
    %v1125 = vadd.f32 %v1056, %v1109
    %v1126 = vadd.f32 %v1057, %v1110
    %v1127 = vadd.f32 %v1058, %v1111
    %v1128 = vadd.f32 %v1059, %v1112
    %v1129 = vadd.f32 %v1060, %v1113
    %v1130 = vadd.f32 %v1061, %v1114
    %s1131 = scalar_lea.vmem %s0, 976
    %v1132 = vld [vmem:[%s1131] sm:$0xff]
    %v1133 = vld [vmem:[%s1131 + $0x10] sm:$0xff]
    %v1134 = vld [vmem:[%s1131 + $0x20] sm:$0xff]
    %v1135 = vld [vmem:[%s1131 + $0x30] sm:$0xff]
    %v1136 = vld [vmem:[%s1131 + $0x40] sm:$0xff]
    %v1137 = vld [vmem:[%s1131 + $0x50] sm:$0xff]
    %v1138 = vld [vmem:[%s1131 + $0x60] sm:$0xff]
    %v1139 = vld [vmem:[%s1131 + $0x70] sm:$0xff]
    %v1140 = vld [vmem:[%s1131 + $0xa0] sm:$0xff]
    %v1141 = vld [vmem:[%s1131 + $0xb0] sm:$0xff]
    %v1142 = vld [vmem:[%s1131 + $0xc0] sm:$0xff]
    %v1143 = vld [vmem:[%s1131 + $0xd0] sm:$0xff]
    %v1144 = vld [vmem:[%s1131 + $0xe0] sm:$0xff]
    %v1145 = vld [vmem:[%s1131 + $0xf0] sm:$0xff]
    %v1146 = vld [vmem:[%s1131 + $0x100] sm:$0xff]
    %v1147 = vld [vmem:[%s1131 + $0x110] sm:$0xff]
    %v1148 = vmax.f32 %v1132, 0.0
    %v1149 = vmax.f32 %v1133, 0.0
    %v1150 = vmax.f32 %v1134, 0.0
    %v1151 = vmax.f32 %v1135, 0.0
    %v1152 = vmax.f32 %v1136, 0.0
    %v1153 = vmax.f32 %v1137, 0.0
    %v1154 = vmax.f32 %v1138, 0.0
    %v1155 = vmax.f32 %v1139, 0.0
    %v1156 = vmax.f32 %v1140, 0.0
    %v1157 = vmax.f32 %v1141, 0.0
    %v1158 = vmax.f32 %v1142, 0.0
    %v1159 = vmax.f32 %v1143, 0.0
    %v1160 = vmax.f32 %v1144, 0.0
    %v1161 = vmax.f32 %v1145, 0.0
    %v1162 = vmax.f32 %v1146, 0.0
    %v1163 = vmax.f32 %v1147, 0.0
    %v1164 = vlaneseq
    %v1165 = vshrl.u32 %v1164, 7
    %v1166 = vsub.s32 0, %v1165
    %v1167 = vrot.slane %v35, %v1166
    %v1168 = vmul.f32 %v1148, %v1167
    %v1169 = vmul.f32 %v1149, %v1167
    %v1170 = vmul.f32 %v1150, %v1167
    %v1171 = vmul.f32 %v1151, %v1167
    %v1172 = vmul.f32 %v1152, %v1167
    %v1173 = vmul.f32 %v1153, %v1167
    %v1174 = vmul.f32 %v1154, %v1167
    %v1175 = vmul.f32 %v1155, %v1167
    %v1176 = vmul.f32 %v1156, %v1167
    %v1177 = vmul.f32 %v1157, %v1167
    %v1178 = vmul.f32 %v1158, %v1167
    %v1179 = vmul.f32 %v1159, %v1167
    %v1180 = vmul.f32 %v1160, %v1167
    %v1181 = vmul.f32 %v1161, %v1167
    %v1182 = vmul.f32 %v1162, %v1167
    %v1183 = vmul.f32 %v1163, %v1167
    %v1184 = vadd.f32 %v1115, %v1168
    %v1185 = vadd.f32 %v1116, %v1169
    %v1186 = vadd.f32 %v1117, %v1170
    %v1187 = vadd.f32 %v1118, %v1171
    %v1188 = vadd.f32 %v1119, %v1172
    %v1189 = vadd.f32 %v1120, %v1173
    %v1190 = vadd.f32 %v1121, %v1174
    %v1191 = vadd.f32 %v1122, %v1175
    %v1192 = vadd.f32 %v1123, %v1176
    %v1193 = vadd.f32 %v1124, %v1177
    %v1194 = vadd.f32 %v1125, %v1178
    %v1195 = vadd.f32 %v1126, %v1179
    %v1196 = vadd.f32 %v1127, %v1180
    %v1197 = vadd.f32 %v1128, %v1181
    %v1198 = vadd.f32 %v1129, %v1182
    %v1199 = vadd.f32 %v1130, %v1183
    %v1200 = vld [vmem:[%s1062 + $0x1] sm:$0xff]
    %v1201 = vld [vmem:[%s1062 + $0x11] sm:$0xff]
    %v1202 = vld [vmem:[%s1062 + $0x21] sm:$0xff]
    %v1203 = vld [vmem:[%s1062 + $0x31] sm:$0xff]
    %v1204 = vld [vmem:[%s1062 + $0x41] sm:$0xff]
    %v1205 = vld [vmem:[%s1062 + $0x51] sm:$0xff]
    %v1206 = vld [vmem:[%s1062 + $0x61] sm:$0xff]
    %v1207 = vld [vmem:[%s1062 + $0x71] sm:$0xff]
    %v1208 = vld [vmem:[%s1062 + $0xa1] sm:$0xff]
    %v1209 = vld [vmem:[%s1062 + $0xb1] sm:$0xff]
    %v1210 = vld [vmem:[%s1062 + $0xc1] sm:$0xff]
    %v1211 = vld [vmem:[%s1062 + $0xd1] sm:$0xff]
    %v1212 = vld [vmem:[%s1062 + $0xe1] sm:$0xff]
    %v1213 = vld [vmem:[%s1062 + $0xf1] sm:$0xff]
    %v1214 = vld [vmem:[%s1062 + $0x101] sm:$0xff]
    %v1215 = vld [vmem:[%s1062 + $0x111] sm:$0xff]
    %v1216 = vmax.f32 %v1200, 0.0
    %v1217 = vmax.f32 %v1201, 0.0
    %v1218 = vmax.f32 %v1202, 0.0
    %v1219 = vmax.f32 %v1203, 0.0
    %v1220 = vmax.f32 %v1204, 0.0
    %v1221 = vmax.f32 %v1205, 0.0
    %v1222 = vmax.f32 %v1206, 0.0
    %v1223 = vmax.f32 %v1207, 0.0
    %v1224 = vmax.f32 %v1208, 0.0
    %v1225 = vmax.f32 %v1209, 0.0
    %v1226 = vmax.f32 %v1210, 0.0
    %v1227 = vmax.f32 %v1211, 0.0
    %v1228 = vmax.f32 %v1212, 0.0
    %v1229 = vmax.f32 %v1213, 0.0
    %v1230 = vmax.f32 %v1214, 0.0
    %v1231 = vmax.f32 %v1215, 0.0
    %v1232 = vlaneseq
    %v1233 = vshrl.u32 %v1232, 7
    %v1234 = vsub.s32 1, %v1233
    %v1235 = vrot.slane %v35, %v1234
    %v1236 = vmul.f32 %v1216, %v1235
    %v1237 = vmul.f32 %v1217, %v1235
    %v1238 = vmul.f32 %v1218, %v1235
    %v1239 = vmul.f32 %v1219, %v1235
    %v1240 = vmul.f32 %v1220, %v1235
    %v1241 = vmul.f32 %v1221, %v1235
    %v1242 = vmul.f32 %v1222, %v1235
    %v1243 = vmul.f32 %v1223, %v1235
    %v1244 = vmul.f32 %v1224, %v1235
    %v1245 = vmul.f32 %v1225, %v1235
    %v1246 = vmul.f32 %v1226, %v1235
    %v1247 = vmul.f32 %v1227, %v1235
    %v1248 = vmul.f32 %v1228, %v1235
    %v1249 = vmul.f32 %v1229, %v1235
    %v1250 = vmul.f32 %v1230, %v1235
    %v1251 = vmul.f32 %v1231, %v1235
    %v1252 = vadd.f32 %v1184, %v1236
    %v1253 = vadd.f32 %v1185, %v1237
    %v1254 = vadd.f32 %v1186, %v1238
    %v1255 = vadd.f32 %v1187, %v1239
    %v1256 = vadd.f32 %v1188, %v1240
    %v1257 = vadd.f32 %v1189, %v1241
    %v1258 = vadd.f32 %v1190, %v1242
    %v1259 = vadd.f32 %v1191, %v1243
    %v1260 = vadd.f32 %v1192, %v1244
    %v1261 = vadd.f32 %v1193, %v1245
    %v1262 = vadd.f32 %v1194, %v1246
    %v1263 = vadd.f32 %v1195, %v1247
    %v1264 = vadd.f32 %v1196, %v1248
    %v1265 = vadd.f32 %v1197, %v1249
    %v1266 = vadd.f32 %v1198, %v1250
    %v1267 = vadd.f32 %v1199, %v1251
    %v1268 = vld [vmem:[%s1131 + $0x1] sm:$0xff]
    %v1269 = vld [vmem:[%s1131 + $0x11] sm:$0xff]
    %v1270 = vld [vmem:[%s1131 + $0x21] sm:$0xff]
    %v1271 = vld [vmem:[%s1131 + $0x31] sm:$0xff]
    %v1272 = vld [vmem:[%s1131 + $0x41] sm:$0xff]
    %v1273 = vld [vmem:[%s1131 + $0x51] sm:$0xff]
    %v1274 = vld [vmem:[%s1131 + $0x61] sm:$0xff]
    %v1275 = vld [vmem:[%s1131 + $0x71] sm:$0xff]
    %v1276 = vld [vmem:[%s1131 + $0xa1] sm:$0xff]
    %v1277 = vld [vmem:[%s1131 + $0xb1] sm:$0xff]
    %v1278 = vld [vmem:[%s1131 + $0xc1] sm:$0xff]
    %v1279 = vld [vmem:[%s1131 + $0xd1] sm:$0xff]
    %v1280 = vld [vmem:[%s1131 + $0xe1] sm:$0xff]
    %v1281 = vld [vmem:[%s1131 + $0xf1] sm:$0xff]
    %v1282 = vld [vmem:[%s1131 + $0x101] sm:$0xff]
    %v1283 = vld [vmem:[%s1131 + $0x111] sm:$0xff]
    %v1284 = vmax.f32 %v1268, 0.0
    %v1285 = vmax.f32 %v1269, 0.0
    %v1286 = vmax.f32 %v1270, 0.0
    %v1287 = vmax.f32 %v1271, 0.0
    %v1288 = vmax.f32 %v1272, 0.0
    %v1289 = vmax.f32 %v1273, 0.0
    %v1290 = vmax.f32 %v1274, 0.0
    %v1291 = vmax.f32 %v1275, 0.0
    %v1292 = vmax.f32 %v1276, 0.0
    %v1293 = vmax.f32 %v1277, 0.0
    %v1294 = vmax.f32 %v1278, 0.0
    %v1295 = vmax.f32 %v1279, 0.0
    %v1296 = vmax.f32 %v1280, 0.0
    %v1297 = vmax.f32 %v1281, 0.0
    %v1298 = vmax.f32 %v1282, 0.0
    %v1299 = vmax.f32 %v1283, 0.0
    %v1300 = vlaneseq
    %v1301 = vshrl.u32 %v1300, 7
    %v1302 = vsub.s32 2, %v1301
    %v1303 = vrot.slane %v35, %v1302
    %v1304 = vmul.f32 %v1284, %v1303
    %v1305 = vmul.f32 %v1285, %v1303
    %v1306 = vmul.f32 %v1286, %v1303
    %v1307 = vmul.f32 %v1287, %v1303
    %v1308 = vmul.f32 %v1288, %v1303
    %v1309 = vmul.f32 %v1289, %v1303
    %v1310 = vmul.f32 %v1290, %v1303
    %v1311 = vmul.f32 %v1291, %v1303
    %v1312 = vmul.f32 %v1292, %v1303
    %v1313 = vmul.f32 %v1293, %v1303
    %v1314 = vmul.f32 %v1294, %v1303
    %v1315 = vmul.f32 %v1295, %v1303
    %v1316 = vmul.f32 %v1296, %v1303
    %v1317 = vmul.f32 %v1297, %v1303
    %v1318 = vmul.f32 %v1298, %v1303
    %v1319 = vmul.f32 %v1299, %v1303
    %v1320 = vadd.f32 %v1252, %v1304
    %v1321 = vadd.f32 %v1253, %v1305
    %v1322 = vadd.f32 %v1254, %v1306
    %v1323 = vadd.f32 %v1255, %v1307
    %v1324 = vadd.f32 %v1256, %v1308
    %v1325 = vadd.f32 %v1257, %v1309
    %v1326 = vadd.f32 %v1258, %v1310
    %v1327 = vadd.f32 %v1259, %v1311
    %v1328 = vadd.f32 %v1260, %v1312
    %v1329 = vadd.f32 %v1261, %v1313
    %v1330 = vadd.f32 %v1262, %v1314
    %v1331 = vadd.f32 %v1263, %v1315
    %v1332 = vadd.f32 %v1264, %v1316
    %v1333 = vadd.f32 %v1265, %v1317
    %v1334 = vadd.f32 %v1266, %v1318
    %v1335 = vadd.f32 %v1267, %v1319
    %v1336 = vld [vmem:[%s1062 + $0x2] sm:$0xff]
    %v1337 = vld [vmem:[%s1062 + $0x12] sm:$0xff]
    %v1338 = vld [vmem:[%s1062 + $0x22] sm:$0xff]
    %v1339 = vld [vmem:[%s1062 + $0x32] sm:$0xff]
    %v1340 = vld [vmem:[%s1062 + $0x42] sm:$0xff]
    %v1341 = vld [vmem:[%s1062 + $0x52] sm:$0xff]
    %v1342 = vld [vmem:[%s1062 + $0x62] sm:$0xff]
    %v1343 = vld [vmem:[%s1062 + $0x72] sm:$0xff]
    %v1344 = vld [vmem:[%s1062 + $0xa2] sm:$0xff]
    %v1345 = vld [vmem:[%s1062 + $0xb2] sm:$0xff]
    %v1346 = vld [vmem:[%s1062 + $0xc2] sm:$0xff]
    %v1347 = vld [vmem:[%s1062 + $0xd2] sm:$0xff]
    %v1348 = vld [vmem:[%s1062 + $0xe2] sm:$0xff]
    %v1349 = vld [vmem:[%s1062 + $0xf2] sm:$0xff]
    %v1350 = vld [vmem:[%s1062 + $0x102] sm:$0xff]
    %v1351 = vld [vmem:[%s1062 + $0x112] sm:$0xff]
    %v1352 = vmax.f32 %v1336, 0.0
    %v1353 = vmax.f32 %v1337, 0.0
    %v1354 = vmax.f32 %v1338, 0.0
    %v1355 = vmax.f32 %v1339, 0.0
    %v1356 = vmax.f32 %v1340, 0.0
    %v1357 = vmax.f32 %v1341, 0.0
    %v1358 = vmax.f32 %v1342, 0.0
    %v1359 = vmax.f32 %v1343, 0.0
    %v1360 = vmax.f32 %v1344, 0.0
    %v1361 = vmax.f32 %v1345, 0.0
    %v1362 = vmax.f32 %v1346, 0.0
    %v1363 = vmax.f32 %v1347, 0.0
    %v1364 = vmax.f32 %v1348, 0.0
    %v1365 = vmax.f32 %v1349, 0.0
    %v1366 = vmax.f32 %v1350, 0.0
    %v1367 = vmax.f32 %v1351, 0.0
    %v1368 = vlaneseq
    %v1369 = vshrl.u32 %v1368, 7
    %v1370 = vsub.s32 3, %v1369
    %v1371 = vrot.slane %v35, %v1370
    %v1372 = vmul.f32 %v1352, %v1371
    %v1373 = vmul.f32 %v1353, %v1371
    %v1374 = vmul.f32 %v1354, %v1371
    %v1375 = vmul.f32 %v1355, %v1371
    %v1376 = vmul.f32 %v1356, %v1371
    %v1377 = vmul.f32 %v1357, %v1371
    %v1378 = vmul.f32 %v1358, %v1371
    %v1379 = vmul.f32 %v1359, %v1371
    %v1380 = vmul.f32 %v1360, %v1371
    %v1381 = vmul.f32 %v1361, %v1371
    %v1382 = vmul.f32 %v1362, %v1371
    %v1383 = vmul.f32 %v1363, %v1371
    %v1384 = vmul.f32 %v1364, %v1371
    %v1385 = vmul.f32 %v1365, %v1371
    %v1386 = vmul.f32 %v1366, %v1371
    %v1387 = vmul.f32 %v1367, %v1371
    %v1388 = vadd.f32 %v1320, %v1372
    %v1389 = vadd.f32 %v1321, %v1373
    %v1390 = vadd.f32 %v1322, %v1374
    %v1391 = vadd.f32 %v1323, %v1375
    %v1392 = vadd.f32 %v1324, %v1376
    %v1393 = vadd.f32 %v1325, %v1377
    %v1394 = vadd.f32 %v1326, %v1378
    %v1395 = vadd.f32 %v1327, %v1379
    %v1396 = vadd.f32 %v1328, %v1380
    %v1397 = vadd.f32 %v1329, %v1381
    %v1398 = vadd.f32 %v1330, %v1382
    %v1399 = vadd.f32 %v1331, %v1383
    %v1400 = vadd.f32 %v1332, %v1384
    %v1401 = vadd.f32 %v1333, %v1385
    %v1402 = vadd.f32 %v1334, %v1386
    %v1403 = vadd.f32 %v1335, %v1387
    %s1404 = scalar_lea.vmem %s0, 32
    %v1405 = vld [vmem:[%s1404] sm:$0xff]
    %v1406 = vld [vmem:[%s1404 + $0x10] sm:$0xff]
    %v1407 = vld [vmem:[%s1404 + $0x20] sm:$0xff]
    %v1408 = vld [vmem:[%s1404 + $0x30] sm:$0xff]
    %v1409 = vld [vmem:[%s1404 + $0x40] sm:$0xff]
    %v1410 = vld [vmem:[%s1404 + $0x50] sm:$0xff]
    %v1411 = vld [vmem:[%s1404 + $0x60] sm:$0xff]
    %v1412 = vld [vmem:[%s1404 + $0x70] sm:$0xff]
    %v1413 = vld [vmem:[%s1404 + $0xa0] sm:$0xff]
    %v1414 = vld [vmem:[%s1404 + $0xb0] sm:$0xff]
    %v1415 = vld [vmem:[%s1404 + $0xc0] sm:$0xff]
    %v1416 = vld [vmem:[%s1404 + $0xd0] sm:$0xff]
    %v1417 = vld [vmem:[%s1404 + $0xe0] sm:$0xff]
    %v1418 = vld [vmem:[%s1404 + $0xf0] sm:$0xff]
    %v1419 = vld [vmem:[%s1404 + $0x100] sm:$0xff]
    %v1420 = vld [vmem:[%s1404 + $0x110] sm:$0xff]
    %v1421 = vmax.f32 %v1405, 0.0
    %v1422 = vmax.f32 %v1406, 0.0
    %v1423 = vmax.f32 %v1407, 0.0
    %v1424 = vmax.f32 %v1408, 0.0
    %v1425 = vmax.f32 %v1409, 0.0
    %v1426 = vmax.f32 %v1410, 0.0
    %v1427 = vmax.f32 %v1411, 0.0
    %v1428 = vmax.f32 %v1412, 0.0
    %v1429 = vmax.f32 %v1413, 0.0
    %v1430 = vmax.f32 %v1414, 0.0
    %v1431 = vmax.f32 %v1415, 0.0
    %v1432 = vmax.f32 %v1416, 0.0
    %v1433 = vmax.f32 %v1417, 0.0
    %v1434 = vmax.f32 %v1418, 0.0
    %v1435 = vmax.f32 %v1419, 0.0
    %v1436 = vmax.f32 %v1420, 0.0
    %v1437 = vlaneseq
    %v1438 = vshrl.u32 %v1437, 7
    %v1439 = vsub.s32 4, %v1438
    %v1440 = vrot.slane %v35, %v1439
    %v1441 = vmul.f32 %v1421, %v1440
    %v1442 = vmul.f32 %v1422, %v1440
    %v1443 = vmul.f32 %v1423, %v1440
    %v1444 = vmul.f32 %v1424, %v1440
    %v1445 = vmul.f32 %v1425, %v1440
    %v1446 = vmul.f32 %v1426, %v1440
    %v1447 = vmul.f32 %v1427, %v1440
    %v1448 = vmul.f32 %v1428, %v1440
    %v1449 = vmul.f32 %v1429, %v1440
    %v1450 = vmul.f32 %v1430, %v1440
    %v1451 = vmul.f32 %v1431, %v1440
    %v1452 = vmul.f32 %v1432, %v1440
    %v1453 = vmul.f32 %v1433, %v1440
    %v1454 = vmul.f32 %v1434, %v1440
    %v1455 = vmul.f32 %v1435, %v1440
    %v1456 = vmul.f32 %v1436, %v1440
    %v1457 = vadd.f32 %v1388, %v1441
    %v1458 = vadd.f32 %v1389, %v1442
    %v1459 = vadd.f32 %v1390, %v1443
    %v1460 = vadd.f32 %v1391, %v1444
    %v1461 = vadd.f32 %v1392, %v1445
    %v1462 = vadd.f32 %v1393, %v1446
    %v1463 = vadd.f32 %v1394, %v1447
    %v1464 = vadd.f32 %v1395, %v1448
    %v1465 = vadd.f32 %v1396, %v1449
    %v1466 = vadd.f32 %v1397, %v1450
    %v1467 = vadd.f32 %v1398, %v1451
    %v1468 = vadd.f32 %v1399, %v1452
    %v1469 = vadd.f32 %v1400, %v1453
    %v1470 = vadd.f32 %v1401, %v1454
    %v1471 = vadd.f32 %v1402, %v1455
    %v1472 = vadd.f32 %v1403, %v1456
    %s1473 = scalar_lea.vmem %s0, 352
    %v1474 = vld [vmem:[%s1473] sm:$0xff]
    %v1475 = vld [vmem:[%s1473 + $0x10] sm:$0xff]
    %v1476 = vld [vmem:[%s1473 + $0x20] sm:$0xff]
    %v1477 = vld [vmem:[%s1473 + $0x30] sm:$0xff]
    %v1478 = vld [vmem:[%s1473 + $0x40] sm:$0xff]
    %v1479 = vld [vmem:[%s1473 + $0x50] sm:$0xff]
    %v1480 = vld [vmem:[%s1473 + $0x60] sm:$0xff]
    %v1481 = vld [vmem:[%s1473 + $0x70] sm:$0xff]
    %v1482 = vld [vmem:[%s1473 + $0xa0] sm:$0xff]
    %v1483 = vld [vmem:[%s1473 + $0xb0] sm:$0xff]
    %v1484 = vld [vmem:[%s1473 + $0xc0] sm:$0xff]
    %v1485 = vld [vmem:[%s1473 + $0xd0] sm:$0xff]
    %v1486 = vld [vmem:[%s1473 + $0xe0] sm:$0xff]
    %v1487 = vld [vmem:[%s1473 + $0xf0] sm:$0xff]
    %v1488 = vld [vmem:[%s1473 + $0x100] sm:$0xff]
    %v1489 = vld [vmem:[%s1473 + $0x110] sm:$0xff]
    %v1490 = vmax.f32 %v1474, 0.0
    %v1491 = vmax.f32 %v1475, 0.0
    %v1492 = vmax.f32 %v1476, 0.0
    %v1493 = vmax.f32 %v1477, 0.0
    %v1494 = vmax.f32 %v1478, 0.0
    %v1495 = vmax.f32 %v1479, 0.0
    %v1496 = vmax.f32 %v1480, 0.0
    %v1497 = vmax.f32 %v1481, 0.0
    %v1498 = vmax.f32 %v1482, 0.0
    %v1499 = vmax.f32 %v1483, 0.0
    %v1500 = vmax.f32 %v1484, 0.0
    %v1501 = vmax.f32 %v1485, 0.0
    %v1502 = vmax.f32 %v1486, 0.0
    %v1503 = vmax.f32 %v1487, 0.0
    %v1504 = vmax.f32 %v1488, 0.0
    %v1505 = vmax.f32 %v1489, 0.0
    %v1506 = vlaneseq
    %v1507 = vshrl.u32 %v1506, 7
    %v1508 = vsub.s32 5, %v1507
    %v1509 = vrot.slane %v35, %v1508
    %v1510 = vmul.f32 %v1490, %v1509
    %v1511 = vmul.f32 %v1491, %v1509
    %v1512 = vmul.f32 %v1492, %v1509
    %v1513 = vmul.f32 %v1493, %v1509
    %v1514 = vmul.f32 %v1494, %v1509
    %v1515 = vmul.f32 %v1495, %v1509
    %v1516 = vmul.f32 %v1496, %v1509
    %v1517 = vmul.f32 %v1497, %v1509
    %v1518 = vmul.f32 %v1498, %v1509
    %v1519 = vmul.f32 %v1499, %v1509
    %v1520 = vmul.f32 %v1500, %v1509
    %v1521 = vmul.f32 %v1501, %v1509
    %v1522 = vmul.f32 %v1502, %v1509
    %v1523 = vmul.f32 %v1503, %v1509
    %v1524 = vmul.f32 %v1504, %v1509
    %v1525 = vmul.f32 %v1505, %v1509
    %v1526 = vadd.f32 %v1457, %v1510
    %v1527 = vadd.f32 %v1458, %v1511
    %v1528 = vadd.f32 %v1459, %v1512
    %v1529 = vadd.f32 %v1460, %v1513
    %v1530 = vadd.f32 %v1461, %v1514
    %v1531 = vadd.f32 %v1462, %v1515
    %v1532 = vadd.f32 %v1463, %v1516
    %v1533 = vadd.f32 %v1464, %v1517
    %v1534 = vadd.f32 %v1465, %v1518
    %v1535 = vadd.f32 %v1466, %v1519
    %v1536 = vadd.f32 %v1467, %v1520
    %v1537 = vadd.f32 %v1468, %v1521
    %v1538 = vadd.f32 %v1469, %v1522
    %v1539 = vadd.f32 %v1470, %v1523
    %v1540 = vadd.f32 %v1471, %v1524
    %v1541 = vadd.f32 %v1472, %v1525
    %v1542 = vld [vmem:[%s1404 + $0x1] sm:$0xff]
    %v1543 = vld [vmem:[%s1404 + $0x11] sm:$0xff]
    %v1544 = vld [vmem:[%s1404 + $0x21] sm:$0xff]
    %v1545 = vld [vmem:[%s1404 + $0x31] sm:$0xff]
    %v1546 = vld [vmem:[%s1404 + $0x41] sm:$0xff]
    %v1547 = vld [vmem:[%s1404 + $0x51] sm:$0xff]
    %v1548 = vld [vmem:[%s1404 + $0x61] sm:$0xff]
    %v1549 = vld [vmem:[%s1404 + $0x71] sm:$0xff]
    %v1550 = vld [vmem:[%s1404 + $0xa1] sm:$0xff]
    %v1551 = vld [vmem:[%s1404 + $0xb1] sm:$0xff]
    %v1552 = vld [vmem:[%s1404 + $0xc1] sm:$0xff]
    %v1553 = vld [vmem:[%s1404 + $0xd1] sm:$0xff]
    %v1554 = vld [vmem:[%s1404 + $0xe1] sm:$0xff]
    %v1555 = vld [vmem:[%s1404 + $0xf1] sm:$0xff]
    %v1556 = vld [vmem:[%s1404 + $0x101] sm:$0xff]
    %v1557 = vld [vmem:[%s1404 + $0x111] sm:$0xff]
    %v1558 = vmax.f32 %v1542, 0.0
    %v1559 = vmax.f32 %v1543, 0.0
    %v1560 = vmax.f32 %v1544, 0.0
    %v1561 = vmax.f32 %v1545, 0.0
    %v1562 = vmax.f32 %v1546, 0.0
    %v1563 = vmax.f32 %v1547, 0.0
    %v1564 = vmax.f32 %v1548, 0.0
    %v1565 = vmax.f32 %v1549, 0.0
    %v1566 = vmax.f32 %v1550, 0.0
    %v1567 = vmax.f32 %v1551, 0.0
    %v1568 = vmax.f32 %v1552, 0.0
    %v1569 = vmax.f32 %v1553, 0.0
    %v1570 = vmax.f32 %v1554, 0.0
    %v1571 = vmax.f32 %v1555, 0.0
    %v1572 = vmax.f32 %v1556, 0.0
    %v1573 = vmax.f32 %v1557, 0.0
    %v1574 = vlaneseq
    %v1575 = vshrl.u32 %v1574, 7
    %v1576 = vsub.s32 6, %v1575
    %v1577 = vrot.slane %v35, %v1576
    %v1578 = vmul.f32 %v1558, %v1577
    %v1579 = vmul.f32 %v1559, %v1577
    %v1580 = vmul.f32 %v1560, %v1577
    %v1581 = vmul.f32 %v1561, %v1577
    %v1582 = vmul.f32 %v1562, %v1577
    %v1583 = vmul.f32 %v1563, %v1577
    %v1584 = vmul.f32 %v1564, %v1577
    %v1585 = vmul.f32 %v1565, %v1577
    %v1586 = vmul.f32 %v1566, %v1577
    %v1587 = vmul.f32 %v1567, %v1577
    %v1588 = vmul.f32 %v1568, %v1577
    %v1589 = vmul.f32 %v1569, %v1577
    %v1590 = vmul.f32 %v1570, %v1577
    %v1591 = vmul.f32 %v1571, %v1577
    %v1592 = vmul.f32 %v1572, %v1577
    %v1593 = vmul.f32 %v1573, %v1577
    %v1594 = vadd.f32 %v1526, %v1578
    %v1595 = vadd.f32 %v1527, %v1579
    %v1596 = vadd.f32 %v1528, %v1580
    %v1597 = vadd.f32 %v1529, %v1581
    %v1598 = vadd.f32 %v1530, %v1582
    %v1599 = vadd.f32 %v1531, %v1583
    %v1600 = vadd.f32 %v1532, %v1584
    %v1601 = vadd.f32 %v1533, %v1585
    %v1602 = vadd.f32 %v1534, %v1586
    %v1603 = vadd.f32 %v1535, %v1587
    %v1604 = vadd.f32 %v1536, %v1588
    %v1605 = vadd.f32 %v1537, %v1589
    %v1606 = vadd.f32 %v1538, %v1590
    %v1607 = vadd.f32 %v1539, %v1591
    %v1608 = vadd.f32 %v1540, %v1592
    %v1609 = vadd.f32 %v1541, %v1593
    %v1610 = vld [vmem:[%s1473 + $0x1] sm:$0xff]
    %v1611 = vld [vmem:[%s1473 + $0x11] sm:$0xff]
    %v1612 = vld [vmem:[%s1473 + $0x21] sm:$0xff]
    %v1613 = vld [vmem:[%s1473 + $0x31] sm:$0xff]
    %v1614 = vld [vmem:[%s1473 + $0x41] sm:$0xff]
    %v1615 = vld [vmem:[%s1473 + $0x51] sm:$0xff]
    %v1616 = vld [vmem:[%s1473 + $0x61] sm:$0xff]
    %v1617 = vld [vmem:[%s1473 + $0x71] sm:$0xff]
    %v1618 = vld [vmem:[%s1473 + $0xa1] sm:$0xff]
    %v1619 = vld [vmem:[%s1473 + $0xb1] sm:$0xff]
    %v1620 = vld [vmem:[%s1473 + $0xc1] sm:$0xff]
    %v1621 = vld [vmem:[%s1473 + $0xd1] sm:$0xff]
    %v1622 = vld [vmem:[%s1473 + $0xe1] sm:$0xff]
    %v1623 = vld [vmem:[%s1473 + $0xf1] sm:$0xff]
    %v1624 = vld [vmem:[%s1473 + $0x101] sm:$0xff]
    %v1625 = vld [vmem:[%s1473 + $0x111] sm:$0xff]
    %v1626 = vmax.f32 %v1610, 0.0
    %v1627 = vmax.f32 %v1611, 0.0
    %v1628 = vmax.f32 %v1612, 0.0
    %v1629 = vmax.f32 %v1613, 0.0
    %v1630 = vmax.f32 %v1614, 0.0
    %v1631 = vmax.f32 %v1615, 0.0
    %v1632 = vmax.f32 %v1616, 0.0
    %v1633 = vmax.f32 %v1617, 0.0
    %v1634 = vmax.f32 %v1618, 0.0
    %v1635 = vmax.f32 %v1619, 0.0
    %v1636 = vmax.f32 %v1620, 0.0
    %v1637 = vmax.f32 %v1621, 0.0
    %v1638 = vmax.f32 %v1622, 0.0
    %v1639 = vmax.f32 %v1623, 0.0
    %v1640 = vmax.f32 %v1624, 0.0
    %v1641 = vmax.f32 %v1625, 0.0
    %v1642 = vlaneseq
    %v1643 = vshrl.u32 %v1642, 7
    %v1644 = vsub.s32 7, %v1643
    %v1645 = vrot.slane %v35, %v1644
    %v1646 = vmul.f32 %v1626, %v1645
    %v1647 = vmul.f32 %v1627, %v1645
    %v1648 = vmul.f32 %v1628, %v1645
    %v1649 = vmul.f32 %v1629, %v1645
    %v1650 = vmul.f32 %v1630, %v1645
    %v1651 = vmul.f32 %v1631, %v1645
    %v1652 = vmul.f32 %v1632, %v1645
    %v1653 = vmul.f32 %v1633, %v1645
    %v1654 = vmul.f32 %v1634, %v1645
    %v1655 = vmul.f32 %v1635, %v1645
    %v1656 = vmul.f32 %v1636, %v1645
    %v1657 = vmul.f32 %v1637, %v1645
    %v1658 = vmul.f32 %v1638, %v1645
    %v1659 = vmul.f32 %v1639, %v1645
    %v1660 = vmul.f32 %v1640, %v1645
    %v1661 = vmul.f32 %v1641, %v1645
    %v1662 = vadd.f32 %v1594, %v1646
    %v1663 = vadd.f32 %v1595, %v1647
    %v1664 = vadd.f32 %v1596, %v1648
    %v1665 = vadd.f32 %v1597, %v1649
    %v1666 = vadd.f32 %v1598, %v1650
    %v1667 = vadd.f32 %v1599, %v1651
    %v1668 = vadd.f32 %v1600, %v1652
    %v1669 = vadd.f32 %v1601, %v1653
    %v1670 = vadd.f32 %v1602, %v1654
    %v1671 = vadd.f32 %v1603, %v1655
    %v1672 = vadd.f32 %v1604, %v1656
    %v1673 = vadd.f32 %v1605, %v1657
    %v1674 = vadd.f32 %v1606, %v1658
    %v1675 = vadd.f32 %v1607, %v1659
    %v1676 = vadd.f32 %v1608, %v1660
    %v1677 = vadd.f32 %v1609, %v1661
    %v1678 = vld [vmem:[%s1404 + $0x2] sm:$0xff]
    %v1679 = vld [vmem:[%s1404 + $0x12] sm:$0xff]
    %v1680 = vld [vmem:[%s1404 + $0x22] sm:$0xff]
    %v1681 = vld [vmem:[%s1404 + $0x32] sm:$0xff]
    %v1682 = vld [vmem:[%s1404 + $0x42] sm:$0xff]
    %v1683 = vld [vmem:[%s1404 + $0x52] sm:$0xff]
    %v1684 = vld [vmem:[%s1404 + $0x62] sm:$0xff]
    %v1685 = vld [vmem:[%s1404 + $0x72] sm:$0xff]
    %v1686 = vld [vmem:[%s1404 + $0xa2] sm:$0xff]
    %v1687 = vld [vmem:[%s1404 + $0xb2] sm:$0xff]
    %v1688 = vld [vmem:[%s1404 + $0xc2] sm:$0xff]
    %v1689 = vld [vmem:[%s1404 + $0xd2] sm:$0xff]
    %v1690 = vld [vmem:[%s1404 + $0xe2] sm:$0xff]
    %v1691 = vld [vmem:[%s1404 + $0xf2] sm:$0xff]
    %v1692 = vld [vmem:[%s1404 + $0x102] sm:$0xff]
    %v1693 = vld [vmem:[%s1404 + $0x112] sm:$0xff]
    %v1694 = vmax.f32 %v1678, 0.0
    %v1695 = vmax.f32 %v1679, 0.0
    %v1696 = vmax.f32 %v1680, 0.0
    %v1697 = vmax.f32 %v1681, 0.0
    %v1698 = vmax.f32 %v1682, 0.0
    %v1699 = vmax.f32 %v1683, 0.0
    %v1700 = vmax.f32 %v1684, 0.0
    %v1701 = vmax.f32 %v1685, 0.0
    %v1702 = vmax.f32 %v1686, 0.0
    %v1703 = vmax.f32 %v1687, 0.0
    %v1704 = vmax.f32 %v1688, 0.0
    %v1705 = vmax.f32 %v1689, 0.0
    %v1706 = vmax.f32 %v1690, 0.0
    %v1707 = vmax.f32 %v1691, 0.0
    %v1708 = vmax.f32 %v1692, 0.0
    %v1709 = vmax.f32 %v1693, 0.0
    %v1710 = vlaneseq
    %v1711 = vshrl.u32 %v1710, 7
    %v1712 = vsub.s32 0, %v1711
    %v1713 = vrot.slane %v36, %v1712
    %v1714 = vmul.f32 %v1694, %v1713
    %v1715 = vmul.f32 %v1695, %v1713
    %v1716 = vmul.f32 %v1696, %v1713
    %v1717 = vmul.f32 %v1697, %v1713
    %v1718 = vmul.f32 %v1698, %v1713
    %v1719 = vmul.f32 %v1699, %v1713
    %v1720 = vmul.f32 %v1700, %v1713
    %v1721 = vmul.f32 %v1701, %v1713
    %v1722 = vmul.f32 %v1702, %v1713
    %v1723 = vmul.f32 %v1703, %v1713
    %v1724 = vmul.f32 %v1704, %v1713
    %v1725 = vmul.f32 %v1705, %v1713
    %v1726 = vmul.f32 %v1706, %v1713
    %v1727 = vmul.f32 %v1707, %v1713
    %v1728 = vmul.f32 %v1708, %v1713
    %v1729 = vmul.f32 %v1709, %v1713
    %v1730 = vadd.f32 %v1662, %v1714
    %v1731 = vadd.f32 %v1663, %v1715
    %v1732 = vadd.f32 %v1664, %v1716
    %v1733 = vadd.f32 %v1665, %v1717
    %v1734 = vadd.f32 %v1666, %v1718
    %v1735 = vadd.f32 %v1667, %v1719
    %v1736 = vadd.f32 %v1668, %v1720
    %v1737 = vadd.f32 %v1669, %v1721
    %v1738 = vadd.f32 %v1670, %v1722
    %v1739 = vadd.f32 %v1671, %v1723
    %v1740 = vadd.f32 %v1672, %v1724
    %v1741 = vadd.f32 %v1673, %v1725
    %v1742 = vadd.f32 %v1674, %v1726
    %v1743 = vadd.f32 %v1675, %v1727
    %v1744 = vadd.f32 %v1676, %v1728
    %v1745 = vadd.f32 %v1677, %v1729
    %v1746 = vld [vmem:[%s2] sm:$0xff]
    %vm1747 = vcmask 64512
    %v1749 = vsel %vm1747, %v1730, 0
    %v1752 = vsel %vm1747, %v1731, 0
    %v1755 = vsel %vm1747, %v1732, 0
    %v1758 = vsel %vm1747, %v1733, 0
    %v1761 = vsel %vm1747, %v1734, 0
    %v1764 = vsel %vm1747, %v1735, 0
    %v1767 = vsel %vm1747, %v1736, 0
    %v1770 = vsel %vm1747, %v1737, 0
    %v1773 = vsel %vm1747, %v1738, 0
    %v1776 = vsel %vm1747, %v1739, 0
    %v1779 = vsel %vm1747, %v1740, 0
    %v1782 = vsel %vm1747, %v1741, 0
    %v1785 = vsel %vm1747, %v1742, 0
    %v1788 = vsel %vm1747, %v1743, 0
    %v1791 = vsel %vm1747, %v1744, 0
    %v1794 = vsel %vm1747, %v1745, 0
    %1796 = vmatprep.subr.mxu0 0.0
    %1797 = vmatpush1.msra.mxu0 0.0
    %1798 = vmatprep.subr.mxu0 0.0
    %1799 = vmatpush1.msra.mxu0 0.0
    %1800 = vmatprep.subr.mxu0 0.0
    %1801 = vmatpush1.msra.mxu0 0.0
    %1802 = vmatprep.subr.mxu0 0.0
    %1803 = vmatpush1.msra.mxu0 0.0
    %1804 = vmatprep.subr.mxu0 0.0
    %1805 = vmatpush1.msra.mxu0 0.0
    %1806 = vmatprep.subr.mxu0 0.0
    %1807 = vmatpush1.msra.mxu0 0.0
    %1808 = vmatprep.subr.mxu0 0.0
    %1809 = vmatpush1.msra.mxu0 0.0
    %1810 = vmatprep.subr.mxu0 0.0
    %1811 = vmatpush1.msra.mxu0 0.0
    %1812 = vmatprep.subr.mxu0 0.0
    %1813 = vmatpush1.msra.mxu0 0.0
    %1814 = vmatprep.subr.mxu0 0.0
    %1815 = vmatpush1.msra.mxu0 0.0
    %1816 = vmatprep.subr.mxu0 0.0
    %1817 = vmatpush1.msra.mxu0 0.0
    %1818 = vmatprep.subr.mxu0 0.0
    %1819 = vmatpush1.msra.mxu0 0.0
    %1820 = vmatprep.subr.mxu0 0.0
    %1821 = vmatpush1.msra.mxu0 0.0
    %1822 = vmatprep.subr.mxu0 0.0
    %1823 = vmatpush1.msra.mxu0 0.0
    %1824 = vmatprep.subr.mxu0 0.0
    %1825 = vmatpush1.msra.mxu0 0.0
    %1826 = vmatprep.subr.mxu0 0.0
    %1827 = vmatpush1.msra.mxu0 %v1746
    %1828 = vmatprep.subr.mxu0 0.0
    %1829 = vmatpush2.msra.mxu0 0.0
    %1830 = vmatprep.subr.mxu0 0.0
    %1831 = vmatpush2.msra.mxu0 0.0
    %1832 = vmatprep.subr.mxu0 0.0
    %1833 = vmatpush2.msra.mxu0 0.0
    %1834 = vmatprep.subr.mxu0 0.0
    %1835 = vmatpush2.msra.mxu0 0.0
    %1836 = vmatprep.subr.mxu0 0.0
    %1837 = vmatpush2.msra.mxu0 0.0
    %1838 = vmatprep.subr.mxu0 0.0
    %1839 = vmatpush2.msra.mxu0 0.0
    %1840 = vmatprep.subr.mxu0 0.0
    %1841 = vmatpush2.msra.mxu0 0.0
    %1842 = vmatprep.subr.mxu0 0.0
    %1843 = vmatpush2.msra.mxu0 0.0
    %1844 = vmatprep.subr.mxu0 0.0
    %1845 = vmatpush2.msra.mxu0 0.0
    %1846 = vmatprep.subr.mxu0 0.0
    %1847 = vmatpush2.msra.mxu0 0.0
    %1848 = vmatprep.subr.mxu0 0.0
    %1849 = vmatpush2.msra.mxu0 0.0
    %1850 = vmatprep.subr.mxu0 0.0
    %1851 = vmatpush2.msra.mxu0 0.0
    %1852 = vmatprep.subr.mxu0 0.0
    %1853 = vmatpush2.msra.mxu0 0.0
    %1854 = vmatprep.subr.mxu0 0.0
    %1855 = vmatpush2.msra.mxu0 0.0
    %1856 = vmatprep.subr.mxu0 0.0
    %1857 = vmatpush2.msra.mxu0 0.0
    %1858 = vmatprep.subr.mxu0 0.0
    %1859 = vmatpush2.msra.mxu0 0.0
    %1860 = vmatprep.mubr.f32.mxu0 0.0
    %1861 = vmatmul.mubr.f32.gmra.mxu0 %v1749
    %v1862 = vpop.f32.mrf.mxu0
    %v1863 = vadd.f32 0.0, %v1862
    %v1864 = vpop.f32.mrf.mxu0
    %1865 = vmatprep.mubr.f32.mxu0 0.0
    %1866 = vmatmul.mubr.f32.gmra.mxu0 %v1752
    %v1867 = vpop.f32.mrf.mxu0
    %v1868 = vadd.f32 0.0, %v1867
    %v1869 = vpop.f32.mrf.mxu0
    %1870 = vmatprep.mubr.f32.mxu0 0.0
    %1871 = vmatmul.mubr.f32.gmra.mxu0 %v1755
    %v1872 = vpop.f32.mrf.mxu0
    %v1873 = vadd.f32 0.0, %v1872
    %v1874 = vpop.f32.mrf.mxu0
    %1875 = vmatprep.mubr.f32.mxu0 0.0
    %1876 = vmatmul.mubr.f32.gmra.mxu0 %v1758
    %v1877 = vpop.f32.mrf.mxu0
    %v1878 = vadd.f32 0.0, %v1877
    %v1879 = vpop.f32.mrf.mxu0
    %1880 = vmatprep.mubr.f32.mxu0 0.0
    %1881 = vmatmul.mubr.f32.gmra.mxu0 %v1761
    %v1882 = vpop.f32.mrf.mxu0
    %v1883 = vadd.f32 0.0, %v1882
    %v1884 = vpop.f32.mrf.mxu0
    %1885 = vmatprep.mubr.f32.mxu0 0.0
    %1886 = vmatmul.mubr.f32.gmra.mxu0 %v1764
    %v1887 = vpop.f32.mrf.mxu0
    %v1888 = vadd.f32 0.0, %v1887
    %v1889 = vpop.f32.mrf.mxu0
    %1890 = vmatprep.mubr.f32.mxu0 0.0
    %1891 = vmatmul.mubr.f32.gmra.mxu0 %v1767
    %v1892 = vpop.f32.mrf.mxu0
    %v1893 = vadd.f32 0.0, %v1892
    %v1894 = vpop.f32.mrf.mxu0
    %1895 = vmatprep.mubr.f32.mxu0 0.0
    %1896 = vmatmul.mubr.f32.gmra.mxu0 %v1770
    %v1897 = vpop.f32.mrf.mxu0
    %v1898 = vadd.f32 0.0, %v1897
    %v1899 = vpop.f32.mrf.mxu0
    %1900 = vmatprep.mubr.f32.mxu0 0.0
    %1901 = vmatmul.mubr.f32.gmra.mxu0 %v1773
    %v1902 = vpop.f32.mrf.mxu0
    %v1903 = vadd.f32 0.0, %v1902
    %v1904 = vpop.f32.mrf.mxu0
    %1905 = vmatprep.mubr.f32.mxu0 0.0
    %1906 = vmatmul.mubr.f32.gmra.mxu0 %v1776
    %v1907 = vpop.f32.mrf.mxu0
    %v1908 = vadd.f32 0.0, %v1907
    %v1909 = vpop.f32.mrf.mxu0
    %1910 = vmatprep.mubr.f32.mxu0 0.0
    %1911 = vmatmul.mubr.f32.gmra.mxu0 %v1779
    %v1912 = vpop.f32.mrf.mxu0
    %v1913 = vadd.f32 0.0, %v1912
    %v1914 = vpop.f32.mrf.mxu0
    %1915 = vmatprep.mubr.f32.mxu0 0.0
    %1916 = vmatmul.mubr.f32.gmra.mxu0 %v1782
    %v1917 = vpop.f32.mrf.mxu0
    %v1918 = vadd.f32 0.0, %v1917
    %v1919 = vpop.f32.mrf.mxu0
    %1920 = vmatprep.mubr.f32.mxu0 0.0
    %1921 = vmatmul.mubr.f32.gmra.mxu0 %v1785
    %v1922 = vpop.f32.mrf.mxu0
    %v1923 = vadd.f32 0.0, %v1922
    %v1924 = vpop.f32.mrf.mxu0
    %1925 = vmatprep.mubr.f32.mxu0 0.0
    %1926 = vmatmul.mubr.f32.gmra.mxu0 %v1788
    %v1927 = vpop.f32.mrf.mxu0
    %v1928 = vadd.f32 0.0, %v1927
    %v1929 = vpop.f32.mrf.mxu0
    %1930 = vmatprep.mubr.f32.mxu0 0.0
    %1931 = vmatmul.mubr.f32.gmra.mxu0 %v1791
    %v1932 = vpop.f32.mrf.mxu0
    %v1933 = vadd.f32 0.0, %v1932
    %v1934 = vpop.f32.mrf.mxu0
    %1935 = vmatprep.mubr.f32.mxu0 0.0
    %1936 = vmatmul.mubr.f32.gmra.mxu0 %v1794
    %v1937 = vpop.f32.mrf.mxu0
    %v1938 = vadd.f32 0.0, %v1937
    %v1939 = vpop.f32.mrf.mxu0
    %1940 = vdwg.mxu0
    %v1941 = vsel %vm1747, %v1863, 0.0
    %v1942 = vsel %vm1747, %v1868, 0.0
    %v1943 = vadd.f32 %v1941, %v1942
    %v1944 = vsel %vm1747, %v1873, 0.0
    %v1945 = vadd.f32 %v1943, %v1944
    %v1946 = vsel %vm1747, %v1878, 0.0
    %v1947 = vadd.f32 %v1945, %v1946
    %v1948 = vsel %vm1747, %v1883, 0.0
    %v1949 = vadd.f32 %v1947, %v1948
    %v1950 = vsel %vm1747, %v1888, 0.0
    %v1951 = vadd.f32 %v1949, %v1950
    %v1952 = vsel %vm1747, %v1893, 0.0
    %v1953 = vadd.f32 %v1951, %v1952
    %v1954 = vsel %vm1747, %v1898, 0.0
    %v1955 = vadd.f32 %v1953, %v1954
    %v1956 = vsel %vm1747, %v1903, 0.0
    %v1957 = vadd.f32 %v1955, %v1956
    %v1958 = vsel %vm1747, %v1908, 0.0
    %v1959 = vadd.f32 %v1957, %v1958
    %v1960 = vsel %vm1747, %v1913, 0.0
    %v1961 = vadd.f32 %v1959, %v1960
    %v1962 = vsel %vm1747, %v1918, 0.0
    %v1963 = vadd.f32 %v1961, %v1962
    %v1964 = vsel %vm1747, %v1923, 0.0
    %v1965 = vadd.f32 %v1963, %v1964
    %v1966 = vsel %vm1747, %v1928, 0.0
    %v1967 = vadd.f32 %v1965, %v1966
    %v1968 = vsel %vm1747, %v1933, 0.0
    %v1969 = vadd.f32 %v1967, %v1968
    %v1970 = vsel %vm1747, %v1938, 0.0
    %v1971 = vadd.f32 %v1969, %v1970
    %v1972 = vrot.slane %v1971, 4
    %v1973 = vadd.f32 %v1971, %v1972
    %v1974 = vrot.slane %v1973, 2
    %v1975 = vadd.f32 %v1973, %v1974
    %v1976 = vrot.slane %v1975, 1
    %v1977 = vadd.f32 %v1975, %v1976
    %v1978 = vrcp.pop 128.0
    %v1979 = vmul.f32 %v1977, %v1978
    %v1980 = vmul.f32 %v1863, %v1863
    %v1981 = vmul.f32 %v1868, %v1868
    %v1982 = vmul.f32 %v1873, %v1873
    %v1983 = vmul.f32 %v1878, %v1878
    %v1984 = vmul.f32 %v1883, %v1883
    %v1985 = vmul.f32 %v1888, %v1888
    %v1986 = vmul.f32 %v1893, %v1893
    %v1987 = vmul.f32 %v1898, %v1898
    %v1988 = vmul.f32 %v1903, %v1903
    %v1989 = vmul.f32 %v1908, %v1908
    %v1990 = vmul.f32 %v1913, %v1913
    %v1991 = vmul.f32 %v1918, %v1918
    %v1992 = vmul.f32 %v1923, %v1923
    %v1993 = vmul.f32 %v1928, %v1928
    %v1994 = vmul.f32 %v1933, %v1933
    %v1995 = vmul.f32 %v1938, %v1938
    %v1996 = vsel %vm1747, %v1980, 0.0
    %v1997 = vsel %vm1747, %v1981, 0.0
    %v1998 = vadd.f32 %v1996, %v1997
    %v1999 = vsel %vm1747, %v1982, 0.0
    %v2000 = vadd.f32 %v1998, %v1999
    %v2001 = vsel %vm1747, %v1983, 0.0
    %v2002 = vadd.f32 %v2000, %v2001
    %v2003 = vsel %vm1747, %v1984, 0.0
    %v2004 = vadd.f32 %v2002, %v2003
    %v2005 = vsel %vm1747, %v1985, 0.0
    %v2006 = vadd.f32 %v2004, %v2005
    %v2007 = vsel %vm1747, %v1986, 0.0
    %v2008 = vadd.f32 %v2006, %v2007
    %v2009 = vsel %vm1747, %v1987, 0.0
    %v2010 = vadd.f32 %v2008, %v2009
    %v2011 = vsel %vm1747, %v1988, 0.0
    %v2012 = vadd.f32 %v2010, %v2011
    %v2013 = vsel %vm1747, %v1989, 0.0
    %v2014 = vadd.f32 %v2012, %v2013
    %v2015 = vsel %vm1747, %v1990, 0.0
    %v2016 = vadd.f32 %v2014, %v2015
    %v2017 = vsel %vm1747, %v1991, 0.0
    %v2018 = vadd.f32 %v2016, %v2017
    %v2019 = vsel %vm1747, %v1992, 0.0
    %v2020 = vadd.f32 %v2018, %v2019
    %v2021 = vsel %vm1747, %v1993, 0.0
    %v2022 = vadd.f32 %v2020, %v2021
    %v2023 = vsel %vm1747, %v1994, 0.0
    %v2024 = vadd.f32 %v2022, %v2023
    %v2025 = vsel %vm1747, %v1995, 0.0
    %v2026 = vadd.f32 %v2024, %v2025
    %v2027 = vrot.slane %v2026, 4
    %v2028 = vadd.f32 %v2026, %v2027
    %v2029 = vrot.slane %v2028, 2
    %v2030 = vadd.f32 %v2028, %v2029
    %v2031 = vrot.slane %v2030, 1
    %v2032 = vadd.f32 %v2030, %v2031
    %v2033 = vmul.f32 %v2032, %v1978
    %v2034 = vmul.f32 %v1979, %v1979
    %v2035 = vsub.f32 %v2033, %v2034
    %v2036 = vsub.f32 %v1863, %v1979
    %v2037 = vsub.f32 %v1868, %v1979
    %v2038 = vsub.f32 %v1873, %v1979
    %v2039 = vsub.f32 %v1878, %v1979
    %v2040 = vsub.f32 %v1883, %v1979
    %v2041 = vsub.f32 %v1888, %v1979
    %v2042 = vsub.f32 %v1893, %v1979
    %v2043 = vsub.f32 %v1898, %v1979
    %v2044 = vsub.f32 %v1903, %v1979
    %v2045 = vsub.f32 %v1908, %v1979
    %v2046 = vsub.f32 %v1913, %v1979
    %v2047 = vsub.f32 %v1918, %v1979
    %v2048 = vsub.f32 %v1923, %v1979
    %v2049 = vsub.f32 %v1928, %v1979
    %v2050 = vsub.f32 %v1933, %v1979
    %v2051 = vsub.f32 %v1938, %v1979
    %v2052 = vld [vmem:[%s3] sm:$0x1]
    %v2053 = vadd.f32 %v2035, 0.001
    %v2054 = vrsqrt.pop %v2053
    %v2055 = vmul.f32 %v2052, %v2054
    %v2057 = vlaneseq
    %v2058 = vshrl.u32 %v2057, 7
    %v2059 = vsub.s32 0, %v2058
    %v2060 = vrot.slane %v2055, %v2059
    %v2062 = vmul.f32 %v2036, %v2060
    %v2063 = vmul.f32 %v2037, %v2060
    %v2064 = vmul.f32 %v2038, %v2060
    %v2065 = vmul.f32 %v2039, %v2060
    %v2066 = vmul.f32 %v2040, %v2060
    %v2067 = vmul.f32 %v2041, %v2060
    %v2068 = vmul.f32 %v2042, %v2060
    %v2069 = vmul.f32 %v2043, %v2060
    %v2070 = vmul.f32 %v2044, %v2060
    %v2071 = vmul.f32 %v2045, %v2060
    %v2072 = vmul.f32 %v2046, %v2060
    %v2073 = vmul.f32 %v2047, %v2060
    %v2074 = vmul.f32 %v2048, %v2060
    %v2075 = vmul.f32 %v2049, %v2060
    %v2076 = vmul.f32 %v2050, %v2060
    %v2077 = vmul.f32 %v2051, %v2060
    %v2078 = vld [vmem:[%s4] sm:$0x1]
    %v2080 = vlaneseq
    %v2081 = vshrl.u32 %v2080, 7
    %v2082 = vsub.s32 0, %v2081
    %v2083 = vrot.slane %v2078, %v2082
    %v2085 = vadd.f32 %v2062, %v2083
    %v2086 = vadd.f32 %v2063, %v2083
    %v2087 = vadd.f32 %v2064, %v2083
    %v2088 = vadd.f32 %v2065, %v2083
    %v2089 = vadd.f32 %v2066, %v2083
    %v2090 = vadd.f32 %v2067, %v2083
    %v2091 = vadd.f32 %v2068, %v2083
    %v2092 = vadd.f32 %v2069, %v2083
    %v2093 = vadd.f32 %v2070, %v2083
    %v2094 = vadd.f32 %v2071, %v2083
    %v2095 = vadd.f32 %v2072, %v2083
    %v2096 = vadd.f32 %v2073, %v2083
    %v2097 = vadd.f32 %v2074, %v2083
    %v2098 = vadd.f32 %v2075, %v2083
    %v2099 = vadd.f32 %v2076, %v2083
    %v2100 = vadd.f32 %v2077, %v2083
    %v2101 = vmax.f32 %v2085, 0.0
    %v2102 = vmax.f32 %v2086, 0.0
    %v2103 = vmax.f32 %v2087, 0.0
    %v2104 = vmax.f32 %v2088, 0.0
    %v2105 = vmax.f32 %v2089, 0.0
    %v2106 = vmax.f32 %v2090, 0.0
    %v2107 = vmax.f32 %v2091, 0.0
    %v2108 = vmax.f32 %v2092, 0.0
    %v2109 = vmax.f32 %v2093, 0.0
    %v2110 = vmax.f32 %v2094, 0.0
    %v2111 = vmax.f32 %v2095, 0.0
    %v2112 = vmax.f32 %v2096, 0.0
    %v2113 = vmax.f32 %v2097, 0.0
    %v2114 = vmax.f32 %v2098, 0.0
    %v2115 = vmax.f32 %v2099, 0.0
    %v2116 = vmax.f32 %v2100, 0.0
    %2117 = vst.msk [vmem:[#allocation2] sm:$0xff] %vm1747, 0.0
    %vm2118 = vcmask 60416
    %2119 = vst.msk [vmem:[#allocation2 + $0x8] sm:$0xf] %vm2118, 0.0
    %2120 = vst.msk [vmem:[#allocation2 + $0x10] sm:$0xff] %vm1747, 0.0
    %2121 = vst.msk [vmem:[#allocation2 + $0x18] sm:$0xf] %vm2118, 0.0
    %2122 = vst.msk [vmem:[#allocation2 + $0x20] sm:$0xff] %vm1747, 0.0
    %2123 = vst.msk [vmem:[#allocation2 + $0x28] sm:$0xf] %vm2118, 0.0
    %2124 = vst.msk [vmem:[#allocation2 + $0x30] sm:$0xff] %vm1747, 0.0
    %2125 = vst.msk [vmem:[#allocation2 + $0x38] sm:$0xf] %vm2118, 0.0
    %2126 = vst.msk [vmem:[#allocation2 + $0x40] sm:$0xff] %vm1747, 0.0
    %2127 = vst.msk [vmem:[#allocation2 + $0x48] sm:$0xf] %vm2118, 0.0
    %2128 = vst.msk [vmem:[#allocation2 + $0x50] sm:$0xff] %vm1747, 0.0
    %2129 = vst.msk [vmem:[#allocation2 + $0x58] sm:$0xf] %vm2118, 0.0
    %2130 = vst.msk [vmem:[#allocation2 + $0x60] sm:$0xff] %vm1747, 0.0
    %2131 = vst.msk [vmem:[#allocation2 + $0x68] sm:$0xf] %vm2118, 0.0
    %2132 = vst.msk [vmem:[#allocation2 + $0x70] sm:$0xff] %vm1747, 0.0
    %2133 = vst.msk [vmem:[#allocation2 + $0x78] sm:$0xf] %vm2118, 0.0
    %2134 = vst.msk [vmem:[#allocation2 + $0x80] sm:$0xff] %vm1747, 0.0
    %2135 = vst.msk [vmem:[#allocation2 + $0x88] sm:$0xf] %vm2118, 0.0
    %2136 = vst.msk [vmem:[#allocation2 + $0x90] sm:$0xff] %vm1747, 0.0
    %2137 = vst.msk [vmem:[#allocation2 + $0x98] sm:$0xf] %vm2118, 0.0
    %2138 = vst.msk [vmem:[#allocation2 + $0xa0] sm:$0xff] %vm1747, 0.0
    %2139 = vst.msk [vmem:[#allocation2 + $0xa8] sm:$0xf] %vm2118, 0.0
    %2140 = vst.msk [vmem:[#allocation2 + $0xb0] sm:$0xff] %vm1747, 0.0
    %2141 = vst.msk [vmem:[#allocation2 + $0xb8] sm:$0xf] %vm2118, 0.0
    %2142 = vst.msk [vmem:[#allocation2 + $0xc0] sm:$0xff] %vm1747, 0.0
    %2143 = vst.msk [vmem:[#allocation2 + $0xc8] sm:$0xf] %vm2118, 0.0
    %2144 = vst.msk [vmem:[#allocation2 + $0xd0] sm:$0xff] %vm1747, 0.0
    %2145 = vst.msk [vmem:[#allocation2 + $0xd8] sm:$0xf] %vm2118, 0.0
    %2146 = vst.msk [vmem:[#allocation2 + $0xe0] sm:$0xff] %vm1747, 0.0
    %2147 = vst.msk [vmem:[#allocation2 + $0xe8] sm:$0xf] %vm2118, 0.0
    %2148 = vst.msk [vmem:[#allocation2 + $0xf0] sm:$0xff] %vm1747, 0.0
    %2149 = vst.msk [vmem:[#allocation2 + $0xf8] sm:$0xf] %vm2118, 0.0
    %2150 = vst.msk [vmem:[#allocation2 + $0x100] sm:$0xff] %vm1747, 0.0
    %2151 = vst.msk [vmem:[#allocation2 + $0x108] sm:$0xf] %vm2118, 0.0
    %2152 = vst.msk [vmem:[#allocation2 + $0x110] sm:$0xff] %vm1747, 0.0
    %2153 = vst.msk [vmem:[#allocation2 + $0x118] sm:$0xf] %vm2118, 0.0
    %2154 = vst.msk [vmem:[#allocation2 + $0x120] sm:$0xff] %vm1747, 0.0
    %2155 = vst.msk [vmem:[#allocation2 + $0x128] sm:$0xf] %vm2118, 0.0
    %2156 = vst.msk [vmem:[#allocation2 + $0x130] sm:$0xff] %vm1747, 0.0
    %2157 = vst.msk [vmem:[#allocation2 + $0x138] sm:$0xf] %vm2118, 0.0
    %2158 = vst.msk [vmem:[#allocation2 + $0x140] sm:$0xff] %vm1747, 0.0
    %2159 = vst.msk [vmem:[#allocation2 + $0x148] sm:$0xf] %vm2118, 0.0
    %2160 = vst.msk [vmem:[#allocation2 + $0x150] sm:$0xff] %vm1747, 0.0
    %2161 = vst.msk [vmem:[#allocation2 + $0x158] sm:$0xf] %vm2118, 0.0
    %2162 = vst.msk [vmem:[#allocation2 + $0x160] sm:$0xff] %vm1747, 0.0
    %2163 = vst.msk [vmem:[#allocation2 + $0x168] sm:$0xf] %vm2118, 0.0
    %2164 = vst.msk [vmem:[#allocation2 + $0x170] sm:$0xff] %vm1747, 0.0
    %2165 = vst.msk [vmem:[#allocation2 + $0x178] sm:$0xf] %vm2118, 0.0
    %s2166 = scalar_lea.vmem [#allocation2], 32
    %2167 = vst.msk [vmem:[%s2166 + $0x2] sm:$0xff] %vm1747, %v2101
    %2168 = vst.msk [vmem:[%s2166 + $0x12] sm:$0xff] %vm1747, %v2102
    %2169 = vst.msk [vmem:[%s2166 + $0x22] sm:$0xff] %vm1747, %v2103
    %2170 = vst.msk [vmem:[%s2166 + $0x32] sm:$0xff] %vm1747, %v2104
    %2171 = vst.msk [vmem:[%s2166 + $0x42] sm:$0xff] %vm1747, %v2105
    %2172 = vst.msk [vmem:[%s2166 + $0x52] sm:$0xff] %vm1747, %v2106
    %2173 = vst.msk [vmem:[%s2166 + $0x62] sm:$0xff] %vm1747, %v2107
    %2174 = vst.msk [vmem:[%s2166 + $0x72] sm:$0xff] %vm1747, %v2108
    %2175 = vst.msk [vmem:[%s2166 + $0xc2] sm:$0xff] %vm1747, %v2109
    %2176 = vst.msk [vmem:[%s2166 + $0xd2] sm:$0xff] %vm1747, %v2110
    %2177 = vst.msk [vmem:[%s2166 + $0xe2] sm:$0xff] %vm1747, %v2111
    %2178 = vst.msk [vmem:[%s2166 + $0xf2] sm:$0xff] %vm1747, %v2112
    %2179 = vst.msk [vmem:[%s2166 + $0x102] sm:$0xff] %vm1747, %v2113
    %2180 = vst.msk [vmem:[%s2166 + $0x112] sm:$0xff] %vm1747, %v2114
    %2181 = vst.msk [vmem:[%s2166 + $0x122] sm:$0xff] %vm1747, %v2115
    %2182 = vst.msk [vmem:[%s2166 + $0x132] sm:$0xff] %vm1747, %v2116
    %v2183 = vld [vmem:[%s5] sm:$0xff]
    %v2184 = vld [vmem:[%s5 + $0x8] sm:$0xff]
    %v2185 = vld [vmem:[%s5 + $0x10] sm:$0xff]
    %v2186 = vld [vmem:[%s5 + $0x18] sm:$0x1]
    %v2187 = vld [vmem:[#allocation2] sm:$0xff]
    %v2188 = vld [vmem:[#allocation2 + $0x10] sm:$0xff]
    %v2189 = vld [vmem:[#allocation2 + $0x20] sm:$0xff]
    %v2190 = vld [vmem:[#allocation2 + $0x30] sm:$0xff]
    %v2191 = vld [vmem:[#allocation2 + $0x40] sm:$0xff]
    %v2192 = vld [vmem:[#allocation2 + $0x50] sm:$0xff]
    %v2193 = vld [vmem:[#allocation2 + $0x60] sm:$0xff]
    %v2194 = vld [vmem:[#allocation2 + $0x70] sm:$0xff]
    %v2195 = vld [vmem:[#allocation2 + $0xc0] sm:$0xff]
    %v2196 = vld [vmem:[#allocation2 + $0xd0] sm:$0xff]
    %v2197 = vld [vmem:[#allocation2 + $0xe0] sm:$0xff]
    %v2198 = vld [vmem:[#allocation2 + $0xf0] sm:$0xff]
    %v2199 = vld [vmem:[#allocation2 + $0x100] sm:$0xff]
    %v2200 = vld [vmem:[#allocation2 + $0x110] sm:$0xff]
    %v2201 = vld [vmem:[#allocation2 + $0x120] sm:$0xff]
    %v2202 = vld [vmem:[#allocation2 + $0x130] sm:$0xff]
    %v2203 = vlaneseq
    %v2204 = vshrl.u32 %v2203, 7
    %v2205 = vsub.s32 0, %v2204
    %v2206 = vrot.slane %v2183, %v2205
    %v2207 = vmul.f32 %v2187, %v2206
    %v2208 = vmul.f32 %v2188, %v2206
    %v2209 = vmul.f32 %v2189, %v2206
    %v2210 = vmul.f32 %v2190, %v2206
    %v2211 = vmul.f32 %v2191, %v2206
    %v2212 = vmul.f32 %v2192, %v2206
    %v2213 = vmul.f32 %v2193, %v2206
    %v2214 = vmul.f32 %v2194, %v2206
    %v2215 = vmul.f32 %v2195, %v2206
    %v2216 = vmul.f32 %v2196, %v2206
    %v2217 = vmul.f32 %v2197, %v2206
    %v2218 = vmul.f32 %v2198, %v2206
    %v2219 = vmul.f32 %v2199, %v2206
    %v2220 = vmul.f32 %v2200, %v2206
    %v2221 = vmul.f32 %v2201, %v2206
    %v2222 = vmul.f32 %v2202, %v2206
    %v2223 = vadd.f32 %v2207, 0.0
    %v2224 = vadd.f32 %v2208, 0.0
    %v2225 = vadd.f32 %v2209, 0.0
    %v2226 = vadd.f32 %v2210, 0.0
    %v2227 = vadd.f32 %v2211, 0.0
    %v2228 = vadd.f32 %v2212, 0.0
    %v2229 = vadd.f32 %v2213, 0.0
    %v2230 = vadd.f32 %v2214, 0.0
    %v2231 = vadd.f32 %v2215, 0.0
    %v2232 = vadd.f32 %v2216, 0.0
    %v2233 = vadd.f32 %v2217, 0.0
    %v2234 = vadd.f32 %v2218, 0.0
    %v2235 = vadd.f32 %v2219, 0.0
    %v2236 = vadd.f32 %v2220, 0.0
    %v2237 = vadd.f32 %v2221, 0.0
    %v2238 = vadd.f32 %v2222, 0.0
    %v2239 = vld [vmem:[#allocation2 + $0x1] sm:$0xff]
    %v2240 = vld [vmem:[#allocation2 + $0x11] sm:$0xff]
    %v2241 = vld [vmem:[#allocation2 + $0x21] sm:$0xff]
    %v2242 = vld [vmem:[#allocation2 + $0x31] sm:$0xff]
    %v2243 = vld [vmem:[#allocation2 + $0x41] sm:$0xff]
    %v2244 = vld [vmem:[#allocation2 + $0x51] sm:$0xff]
    %v2245 = vld [vmem:[#allocation2 + $0x61] sm:$0xff]
    %v2246 = vld [vmem:[#allocation2 + $0x71] sm:$0xff]
    %v2247 = vld [vmem:[#allocation2 + $0xc1] sm:$0xff]
    %v2248 = vld [vmem:[#allocation2 + $0xd1] sm:$0xff]
    %v2249 = vld [vmem:[#allocation2 + $0xe1] sm:$0xff]
    %v2250 = vld [vmem:[#allocation2 + $0xf1] sm:$0xff]
    %v2251 = vld [vmem:[#allocation2 + $0x101] sm:$0xff]
    %v2252 = vld [vmem:[#allocation2 + $0x111] sm:$0xff]
    %v2253 = vld [vmem:[#allocation2 + $0x121] sm:$0xff]
    %v2254 = vld [vmem:[#allocation2 + $0x131] sm:$0xff]
    %v2255 = vlaneseq
    %v2256 = vshrl.u32 %v2255, 7
    %v2257 = vsub.s32 1, %v2256
    %v2258 = vrot.slane %v2183, %v2257
    %v2259 = vmul.f32 %v2239, %v2258
    %v2260 = vmul.f32 %v2240, %v2258
    %v2261 = vmul.f32 %v2241, %v2258
    %v2262 = vmul.f32 %v2242, %v2258
    %v2263 = vmul.f32 %v2243, %v2258
    %v2264 = vmul.f32 %v2244, %v2258
    %v2265 = vmul.f32 %v2245, %v2258
    %v2266 = vmul.f32 %v2246, %v2258
    %v2267 = vmul.f32 %v2247, %v2258
    %v2268 = vmul.f32 %v2248, %v2258
    %v2269 = vmul.f32 %v2249, %v2258
    %v2270 = vmul.f32 %v2250, %v2258
    %v2271 = vmul.f32 %v2251, %v2258
    %v2272 = vmul.f32 %v2252, %v2258
    %v2273 = vmul.f32 %v2253, %v2258
    %v2274 = vmul.f32 %v2254, %v2258
    %v2275 = vadd.f32 %v2223, %v2259
    %v2276 = vadd.f32 %v2224, %v2260
    %v2277 = vadd.f32 %v2225, %v2261
    %v2278 = vadd.f32 %v2226, %v2262
    %v2279 = vadd.f32 %v2227, %v2263
    %v2280 = vadd.f32 %v2228, %v2264
    %v2281 = vadd.f32 %v2229, %v2265
    %v2282 = vadd.f32 %v2230, %v2266
    %v2283 = vadd.f32 %v2231, %v2267
    %v2284 = vadd.f32 %v2232, %v2268
    %v2285 = vadd.f32 %v2233, %v2269
    %v2286 = vadd.f32 %v2234, %v2270
    %v2287 = vadd.f32 %v2235, %v2271
    %v2288 = vadd.f32 %v2236, %v2272
    %v2289 = vadd.f32 %v2237, %v2273
    %v2290 = vadd.f32 %v2238, %v2274
    %v2291 = vld [vmem:[#allocation2 + $0x2] sm:$0xff]
    %v2292 = vld [vmem:[#allocation2 + $0x12] sm:$0xff]
    %v2293 = vld [vmem:[#allocation2 + $0x22] sm:$0xff]
    %v2294 = vld [vmem:[#allocation2 + $0x32] sm:$0xff]
    %v2295 = vld [vmem:[#allocation2 + $0x42] sm:$0xff]
    %v2296 = vld [vmem:[#allocation2 + $0x52] sm:$0xff]
    %v2297 = vld [vmem:[#allocation2 + $0x62] sm:$0xff]
    %v2298 = vld [vmem:[#allocation2 + $0x72] sm:$0xff]
    %v2299 = vld [vmem:[#allocation2 + $0xc2] sm:$0xff]
    %v2300 = vld [vmem:[#allocation2 + $0xd2] sm:$0xff]
    %v2301 = vld [vmem:[#allocation2 + $0xe2] sm:$0xff]
    %v2302 = vld [vmem:[#allocation2 + $0xf2] sm:$0xff]
    %v2303 = vld [vmem:[#allocation2 + $0x102] sm:$0xff]
    %v2304 = vld [vmem:[#allocation2 + $0x112] sm:$0xff]
    %v2305 = vld [vmem:[#allocation2 + $0x122] sm:$0xff]
    %v2306 = vld [vmem:[#allocation2 + $0x132] sm:$0xff]
    %v2307 = vlaneseq
    %v2308 = vshrl.u32 %v2307, 7
    %v2309 = vsub.s32 2, %v2308
    %v2310 = vrot.slane %v2183, %v2309
    %v2311 = vmul.f32 %v2291, %v2310
    %v2312 = vmul.f32 %v2292, %v2310
    %v2313 = vmul.f32 %v2293, %v2310
    %v2314 = vmul.f32 %v2294, %v2310
    %v2315 = vmul.f32 %v2295, %v2310
    %v2316 = vmul.f32 %v2296, %v2310
    %v2317 = vmul.f32 %v2297, %v2310
    %v2318 = vmul.f32 %v2298, %v2310
    %v2319 = vmul.f32 %v2299, %v2310
    %v2320 = vmul.f32 %v2300, %v2310
    %v2321 = vmul.f32 %v2301, %v2310
    %v2322 = vmul.f32 %v2302, %v2310
    %v2323 = vmul.f32 %v2303, %v2310
    %v2324 = vmul.f32 %v2304, %v2310
    %v2325 = vmul.f32 %v2305, %v2310
    %v2326 = vmul.f32 %v2306, %v2310
    %v2327 = vadd.f32 %v2275, %v2311
    %v2328 = vadd.f32 %v2276, %v2312
    %v2329 = vadd.f32 %v2277, %v2313
    %v2330 = vadd.f32 %v2278, %v2314
    %v2331 = vadd.f32 %v2279, %v2315
    %v2332 = vadd.f32 %v2280, %v2316
    %v2333 = vadd.f32 %v2281, %v2317
    %v2334 = vadd.f32 %v2282, %v2318
    %v2335 = vadd.f32 %v2283, %v2319
    %v2336 = vadd.f32 %v2284, %v2320
    %v2337 = vadd.f32 %v2285, %v2321
    %v2338 = vadd.f32 %v2286, %v2322
    %v2339 = vadd.f32 %v2287, %v2323
    %v2340 = vadd.f32 %v2288, %v2324
    %v2341 = vadd.f32 %v2289, %v2325
    %v2342 = vadd.f32 %v2290, %v2326
    %v2343 = vld [vmem:[#allocation2 + $0x3] sm:$0xff]
    %v2344 = vld [vmem:[#allocation2 + $0x13] sm:$0xff]
    %v2345 = vld [vmem:[#allocation2 + $0x23] sm:$0xff]
    %v2346 = vld [vmem:[#allocation2 + $0x33] sm:$0xff]
    %v2347 = vld [vmem:[#allocation2 + $0x43] sm:$0xff]
    %v2348 = vld [vmem:[#allocation2 + $0x53] sm:$0xff]
    %v2349 = vld [vmem:[#allocation2 + $0x63] sm:$0xff]
    %v2350 = vld [vmem:[#allocation2 + $0x73] sm:$0xff]
    %v2351 = vld [vmem:[#allocation2 + $0xc3] sm:$0xff]
    %v2352 = vld [vmem:[#allocation2 + $0xd3] sm:$0xff]
    %v2353 = vld [vmem:[#allocation2 + $0xe3] sm:$0xff]
    %v2354 = vld [vmem:[#allocation2 + $0xf3] sm:$0xff]
    %v2355 = vld [vmem:[#allocation2 + $0x103] sm:$0xff]
    %v2356 = vld [vmem:[#allocation2 + $0x113] sm:$0xff]
    %v2357 = vld [vmem:[#allocation2 + $0x123] sm:$0xff]
    %v2358 = vld [vmem:[#allocation2 + $0x133] sm:$0xff]
    %v2359 = vlaneseq
    %v2360 = vshrl.u32 %v2359, 7
    %v2361 = vsub.s32 3, %v2360
    %v2362 = vrot.slane %v2183, %v2361
    %v2363 = vmul.f32 %v2343, %v2362
    %v2364 = vmul.f32 %v2344, %v2362
    %v2365 = vmul.f32 %v2345, %v2362
    %v2366 = vmul.f32 %v2346, %v2362
    %v2367 = vmul.f32 %v2347, %v2362
    %v2368 = vmul.f32 %v2348, %v2362
    %v2369 = vmul.f32 %v2349, %v2362
    %v2370 = vmul.f32 %v2350, %v2362
    %v2371 = vmul.f32 %v2351, %v2362
    %v2372 = vmul.f32 %v2352, %v2362
    %v2373 = vmul.f32 %v2353, %v2362
    %v2374 = vmul.f32 %v2354, %v2362
    %v2375 = vmul.f32 %v2355, %v2362
    %v2376 = vmul.f32 %v2356, %v2362
    %v2377 = vmul.f32 %v2357, %v2362
    %v2378 = vmul.f32 %v2358, %v2362
    %v2379 = vadd.f32 %v2327, %v2363
    %v2380 = vadd.f32 %v2328, %v2364
    %v2381 = vadd.f32 %v2329, %v2365
    %v2382 = vadd.f32 %v2330, %v2366
    %v2383 = vadd.f32 %v2331, %v2367
    %v2384 = vadd.f32 %v2332, %v2368
    %v2385 = vadd.f32 %v2333, %v2369
    %v2386 = vadd.f32 %v2334, %v2370
    %v2387 = vadd.f32 %v2335, %v2371
    %v2388 = vadd.f32 %v2336, %v2372
    %v2389 = vadd.f32 %v2337, %v2373
    %v2390 = vadd.f32 %v2338, %v2374
    %v2391 = vadd.f32 %v2339, %v2375
    %v2392 = vadd.f32 %v2340, %v2376
    %v2393 = vadd.f32 %v2341, %v2377
    %v2394 = vadd.f32 %v2342, %v2378
    %v2395 = vld [vmem:[#allocation2 + $0x4] sm:$0xff]
    %v2396 = vld [vmem:[#allocation2 + $0x14] sm:$0xff]
    %v2397 = vld [vmem:[#allocation2 + $0x24] sm:$0xff]
    %v2398 = vld [vmem:[#allocation2 + $0x34] sm:$0xff]
    %v2399 = vld [vmem:[#allocation2 + $0x44] sm:$0xff]
    %v2400 = vld [vmem:[#allocation2 + $0x54] sm:$0xff]
    %v2401 = vld [vmem:[#allocation2 + $0x64] sm:$0xff]
    %v2402 = vld [vmem:[#allocation2 + $0x74] sm:$0xff]
    %v2403 = vld [vmem:[#allocation2 + $0xc4] sm:$0xff]
    %v2404 = vld [vmem:[#allocation2 + $0xd4] sm:$0xff]
    %v2405 = vld [vmem:[#allocation2 + $0xe4] sm:$0xff]
    %v2406 = vld [vmem:[#allocation2 + $0xf4] sm:$0xff]
    %v2407 = vld [vmem:[#allocation2 + $0x104] sm:$0xff]
    %v2408 = vld [vmem:[#allocation2 + $0x114] sm:$0xff]
    %v2409 = vld [vmem:[#allocation2 + $0x124] sm:$0xff]
    %v2410 = vld [vmem:[#allocation2 + $0x134] sm:$0xff]
    %v2411 = vlaneseq
    %v2412 = vshrl.u32 %v2411, 7
    %v2413 = vsub.s32 4, %v2412
    %v2414 = vrot.slane %v2183, %v2413
    %v2415 = vmul.f32 %v2395, %v2414
    %v2416 = vmul.f32 %v2396, %v2414
    %v2417 = vmul.f32 %v2397, %v2414
    %v2418 = vmul.f32 %v2398, %v2414
    %v2419 = vmul.f32 %v2399, %v2414
    %v2420 = vmul.f32 %v2400, %v2414
    %v2421 = vmul.f32 %v2401, %v2414
    %v2422 = vmul.f32 %v2402, %v2414
    %v2423 = vmul.f32 %v2403, %v2414
    %v2424 = vmul.f32 %v2404, %v2414
    %v2425 = vmul.f32 %v2405, %v2414
    %v2426 = vmul.f32 %v2406, %v2414
    %v2427 = vmul.f32 %v2407, %v2414
    %v2428 = vmul.f32 %v2408, %v2414
    %v2429 = vmul.f32 %v2409, %v2414
    %v2430 = vmul.f32 %v2410, %v2414
    %v2431 = vadd.f32 %v2379, %v2415
    %v2432 = vadd.f32 %v2380, %v2416
    %v2433 = vadd.f32 %v2381, %v2417
    %v2434 = vadd.f32 %v2382, %v2418
    %v2435 = vadd.f32 %v2383, %v2419
    %v2436 = vadd.f32 %v2384, %v2420
    %v2437 = vadd.f32 %v2385, %v2421
    %v2438 = vadd.f32 %v2386, %v2422
    %v2439 = vadd.f32 %v2387, %v2423
    %v2440 = vadd.f32 %v2388, %v2424
    %v2441 = vadd.f32 %v2389, %v2425
    %v2442 = vadd.f32 %v2390, %v2426
    %v2443 = vadd.f32 %v2391, %v2427
    %v2444 = vadd.f32 %v2392, %v2428
    %v2445 = vadd.f32 %v2393, %v2429
    %v2446 = vadd.f32 %v2394, %v2430
    %s2447 = scalar_lea.vmem [#allocation2], 16
    %v2448 = vld [vmem:[%s2447] sm:$0xff]
    %v2449 = vld [vmem:[%s2447 + $0x10] sm:$0xff]
    %v2450 = vld [vmem:[%s2447 + $0x20] sm:$0xff]
    %v2451 = vld [vmem:[%s2447 + $0x30] sm:$0xff]
    %v2452 = vld [vmem:[%s2447 + $0x40] sm:$0xff]
    %v2453 = vld [vmem:[%s2447 + $0x50] sm:$0xff]
    %v2454 = vld [vmem:[%s2447 + $0x60] sm:$0xff]
    %v2455 = vld [vmem:[%s2447 + $0x70] sm:$0xff]
    %v2456 = vld [vmem:[%s2447 + $0xc0] sm:$0xff]
    %v2457 = vld [vmem:[%s2447 + $0xd0] sm:$0xff]
    %v2458 = vld [vmem:[%s2447 + $0xe0] sm:$0xff]
    %v2459 = vld [vmem:[%s2447 + $0xf0] sm:$0xff]
    %v2460 = vld [vmem:[%s2447 + $0x100] sm:$0xff]
    %v2461 = vld [vmem:[%s2447 + $0x110] sm:$0xff]
    %v2462 = vld [vmem:[%s2447 + $0x120] sm:$0xff]
    %v2463 = vld [vmem:[%s2447 + $0x130] sm:$0xff]
    %v2464 = vlaneseq
    %v2465 = vshrl.u32 %v2464, 7
    %v2466 = vsub.s32 5, %v2465
    %v2467 = vrot.slane %v2183, %v2466
    %v2468 = vmul.f32 %v2448, %v2467
    %v2469 = vmul.f32 %v2449, %v2467
    %v2470 = vmul.f32 %v2450, %v2467
    %v2471 = vmul.f32 %v2451, %v2467
    %v2472 = vmul.f32 %v2452, %v2467
    %v2473 = vmul.f32 %v2453, %v2467
    %v2474 = vmul.f32 %v2454, %v2467
    %v2475 = vmul.f32 %v2455, %v2467
    %v2476 = vmul.f32 %v2456, %v2467
    %v2477 = vmul.f32 %v2457, %v2467
    %v2478 = vmul.f32 %v2458, %v2467
    %v2479 = vmul.f32 %v2459, %v2467
    %v2480 = vmul.f32 %v2460, %v2467
    %v2481 = vmul.f32 %v2461, %v2467
    %v2482 = vmul.f32 %v2462, %v2467
    %v2483 = vmul.f32 %v2463, %v2467
    %v2484 = vadd.f32 %v2431, %v2468
    %v2485 = vadd.f32 %v2432, %v2469
    %v2486 = vadd.f32 %v2433, %v2470
    %v2487 = vadd.f32 %v2434, %v2471
    %v2488 = vadd.f32 %v2435, %v2472
    %v2489 = vadd.f32 %v2436, %v2473
    %v2490 = vadd.f32 %v2437, %v2474
    %v2491 = vadd.f32 %v2438, %v2475
    %v2492 = vadd.f32 %v2439, %v2476
    %v2493 = vadd.f32 %v2440, %v2477
    %v2494 = vadd.f32 %v2441, %v2478
    %v2495 = vadd.f32 %v2442, %v2479
    %v2496 = vadd.f32 %v2443, %v2480
    %v2497 = vadd.f32 %v2444, %v2481
    %v2498 = vadd.f32 %v2445, %v2482
    %v2499 = vadd.f32 %v2446, %v2483
    %v2500 = vld [vmem:[%s2447 + $0x1] sm:$0xff]
    %v2501 = vld [vmem:[%s2447 + $0x11] sm:$0xff]
    %v2502 = vld [vmem:[%s2447 + $0x21] sm:$0xff]
    %v2503 = vld [vmem:[%s2447 + $0x31] sm:$0xff]
    %v2504 = vld [vmem:[%s2447 + $0x41] sm:$0xff]
    %v2505 = vld [vmem:[%s2447 + $0x51] sm:$0xff]
    %v2506 = vld [vmem:[%s2447 + $0x61] sm:$0xff]
    %v2507 = vld [vmem:[%s2447 + $0x71] sm:$0xff]
    %v2508 = vld [vmem:[%s2447 + $0xc1] sm:$0xff]
    %v2509 = vld [vmem:[%s2447 + $0xd1] sm:$0xff]
    %v2510 = vld [vmem:[%s2447 + $0xe1] sm:$0xff]
    %v2511 = vld [vmem:[%s2447 + $0xf1] sm:$0xff]
    %v2512 = vld [vmem:[%s2447 + $0x101] sm:$0xff]
    %v2513 = vld [vmem:[%s2447 + $0x111] sm:$0xff]
    %v2514 = vld [vmem:[%s2447 + $0x121] sm:$0xff]
    %v2515 = vld [vmem:[%s2447 + $0x131] sm:$0xff]
    %v2516 = vlaneseq
    %v2517 = vshrl.u32 %v2516, 7
    %v2518 = vsub.s32 6, %v2517
    %v2519 = vrot.slane %v2183, %v2518
    %v2520 = vmul.f32 %v2500, %v2519
    %v2521 = vmul.f32 %v2501, %v2519
    %v2522 = vmul.f32 %v2502, %v2519
    %v2523 = vmul.f32 %v2503, %v2519
    %v2524 = vmul.f32 %v2504, %v2519
    %v2525 = vmul.f32 %v2505, %v2519
    %v2526 = vmul.f32 %v2506, %v2519
    %v2527 = vmul.f32 %v2507, %v2519
    %v2528 = vmul.f32 %v2508, %v2519
    %v2529 = vmul.f32 %v2509, %v2519
    %v2530 = vmul.f32 %v2510, %v2519
    %v2531 = vmul.f32 %v2511, %v2519
    %v2532 = vmul.f32 %v2512, %v2519
    %v2533 = vmul.f32 %v2513, %v2519
    %v2534 = vmul.f32 %v2514, %v2519
    %v2535 = vmul.f32 %v2515, %v2519
    %v2536 = vadd.f32 %v2484, %v2520
    %v2537 = vadd.f32 %v2485, %v2521
    %v2538 = vadd.f32 %v2486, %v2522
    %v2539 = vadd.f32 %v2487, %v2523
    %v2540 = vadd.f32 %v2488, %v2524
    %v2541 = vadd.f32 %v2489, %v2525
    %v2542 = vadd.f32 %v2490, %v2526
    %v2543 = vadd.f32 %v2491, %v2527
    %v2544 = vadd.f32 %v2492, %v2528
    %v2545 = vadd.f32 %v2493, %v2529
    %v2546 = vadd.f32 %v2494, %v2530
    %v2547 = vadd.f32 %v2495, %v2531
    %v2548 = vadd.f32 %v2496, %v2532
    %v2549 = vadd.f32 %v2497, %v2533
    %v2550 = vadd.f32 %v2498, %v2534
    %v2551 = vadd.f32 %v2499, %v2535
    %v2552 = vld [vmem:[%s2447 + $0x2] sm:$0xff]
    %v2553 = vld [vmem:[%s2447 + $0x12] sm:$0xff]
    %v2554 = vld [vmem:[%s2447 + $0x22] sm:$0xff]
    %v2555 = vld [vmem:[%s2447 + $0x32] sm:$0xff]
    %v2556 = vld [vmem:[%s2447 + $0x42] sm:$0xff]
    %v2557 = vld [vmem:[%s2447 + $0x52] sm:$0xff]
    %v2558 = vld [vmem:[%s2447 + $0x62] sm:$0xff]
    %v2559 = vld [vmem:[%s2447 + $0x72] sm:$0xff]
    %v2560 = vld [vmem:[%s2447 + $0xc2] sm:$0xff]
    %v2561 = vld [vmem:[%s2447 + $0xd2] sm:$0xff]
    %v2562 = vld [vmem:[%s2447 + $0xe2] sm:$0xff]
    %v2563 = vld [vmem:[%s2447 + $0xf2] sm:$0xff]
    %v2564 = vld [vmem:[%s2447 + $0x102] sm:$0xff]
    %v2565 = vld [vmem:[%s2447 + $0x112] sm:$0xff]
    %v2566 = vld [vmem:[%s2447 + $0x122] sm:$0xff]
    %v2567 = vld [vmem:[%s2447 + $0x132] sm:$0xff]
    %v2568 = vlaneseq
    %v2569 = vshrl.u32 %v2568, 7
    %v2570 = vsub.s32 7, %v2569
    %v2571 = vrot.slane %v2183, %v2570
    %v2572 = vmul.f32 %v2552, %v2571
    %v2573 = vmul.f32 %v2553, %v2571
    %v2574 = vmul.f32 %v2554, %v2571
    %v2575 = vmul.f32 %v2555, %v2571
    %v2576 = vmul.f32 %v2556, %v2571
    %v2577 = vmul.f32 %v2557, %v2571
    %v2578 = vmul.f32 %v2558, %v2571
    %v2579 = vmul.f32 %v2559, %v2571
    %v2580 = vmul.f32 %v2560, %v2571
    %v2581 = vmul.f32 %v2561, %v2571
    %v2582 = vmul.f32 %v2562, %v2571
    %v2583 = vmul.f32 %v2563, %v2571
    %v2584 = vmul.f32 %v2564, %v2571
    %v2585 = vmul.f32 %v2565, %v2571
    %v2586 = vmul.f32 %v2566, %v2571
    %v2587 = vmul.f32 %v2567, %v2571
    %v2588 = vadd.f32 %v2536, %v2572
    %v2589 = vadd.f32 %v2537, %v2573
    %v2590 = vadd.f32 %v2538, %v2574
    %v2591 = vadd.f32 %v2539, %v2575
    %v2592 = vadd.f32 %v2540, %v2576
    %v2593 = vadd.f32 %v2541, %v2577
    %v2594 = vadd.f32 %v2542, %v2578
    %v2595 = vadd.f32 %v2543, %v2579
    %v2596 = vadd.f32 %v2544, %v2580
    %v2597 = vadd.f32 %v2545, %v2581
    %v2598 = vadd.f32 %v2546, %v2582
    %v2599 = vadd.f32 %v2547, %v2583
    %v2600 = vadd.f32 %v2548, %v2584
    %v2601 = vadd.f32 %v2549, %v2585
    %v2602 = vadd.f32 %v2550, %v2586
    %v2603 = vadd.f32 %v2551, %v2587
    %v2604 = vld [vmem:[%s2447 + $0x3] sm:$0xff]
    %v2605 = vld [vmem:[%s2447 + $0x13] sm:$0xff]
    %v2606 = vld [vmem:[%s2447 + $0x23] sm:$0xff]
    %v2607 = vld [vmem:[%s2447 + $0x33] sm:$0xff]
    %v2608 = vld [vmem:[%s2447 + $0x43] sm:$0xff]
    %v2609 = vld [vmem:[%s2447 + $0x53] sm:$0xff]
    %v2610 = vld [vmem:[%s2447 + $0x63] sm:$0xff]
    %v2611 = vld [vmem:[%s2447 + $0x73] sm:$0xff]
    %v2612 = vld [vmem:[%s2447 + $0xc3] sm:$0xff]
    %v2613 = vld [vmem:[%s2447 + $0xd3] sm:$0xff]
    %v2614 = vld [vmem:[%s2447 + $0xe3] sm:$0xff]
    %v2615 = vld [vmem:[%s2447 + $0xf3] sm:$0xff]
    %v2616 = vld [vmem:[%s2447 + $0x103] sm:$0xff]
    %v2617 = vld [vmem:[%s2447 + $0x113] sm:$0xff]
    %v2618 = vld [vmem:[%s2447 + $0x123] sm:$0xff]
    %v2619 = vld [vmem:[%s2447 + $0x133] sm:$0xff]
    %v2620 = vlaneseq
    %v2621 = vshrl.u32 %v2620, 7
    %v2622 = vsub.s32 0, %v2621
    %v2623 = vrot.slane %v2184, %v2622
    %v2624 = vmul.f32 %v2604, %v2623
    %v2625 = vmul.f32 %v2605, %v2623
    %v2626 = vmul.f32 %v2606, %v2623
    %v2627 = vmul.f32 %v2607, %v2623
    %v2628 = vmul.f32 %v2608, %v2623
    %v2629 = vmul.f32 %v2609, %v2623
    %v2630 = vmul.f32 %v2610, %v2623
    %v2631 = vmul.f32 %v2611, %v2623
    %v2632 = vmul.f32 %v2612, %v2623
    %v2633 = vmul.f32 %v2613, %v2623
    %v2634 = vmul.f32 %v2614, %v2623
    %v2635 = vmul.f32 %v2615, %v2623
    %v2636 = vmul.f32 %v2616, %v2623
    %v2637 = vmul.f32 %v2617, %v2623
    %v2638 = vmul.f32 %v2618, %v2623
    %v2639 = vmul.f32 %v2619, %v2623
    %v2640 = vadd.f32 %v2588, %v2624
    %v2641 = vadd.f32 %v2589, %v2625
    %v2642 = vadd.f32 %v2590, %v2626
    %v2643 = vadd.f32 %v2591, %v2627
    %v2644 = vadd.f32 %v2592, %v2628
    %v2645 = vadd.f32 %v2593, %v2629
    %v2646 = vadd.f32 %v2594, %v2630
    %v2647 = vadd.f32 %v2595, %v2631
    %v2648 = vadd.f32 %v2596, %v2632
    %v2649 = vadd.f32 %v2597, %v2633
    %v2650 = vadd.f32 %v2598, %v2634
    %v2651 = vadd.f32 %v2599, %v2635
    %v2652 = vadd.f32 %v2600, %v2636
    %v2653 = vadd.f32 %v2601, %v2637
    %v2654 = vadd.f32 %v2602, %v2638
    %v2655 = vadd.f32 %v2603, %v2639
    %v2656 = vld [vmem:[%s2447 + $0x4] sm:$0xff]
    %v2657 = vld [vmem:[%s2447 + $0x14] sm:$0xff]
    %v2658 = vld [vmem:[%s2447 + $0x24] sm:$0xff]
    %v2659 = vld [vmem:[%s2447 + $0x34] sm:$0xff]
    %v2660 = vld [vmem:[%s2447 + $0x44] sm:$0xff]
    %v2661 = vld [vmem:[%s2447 + $0x54] sm:$0xff]
    %v2662 = vld [vmem:[%s2447 + $0x64] sm:$0xff]
    %v2663 = vld [vmem:[%s2447 + $0x74] sm:$0xff]
    %v2664 = vld [vmem:[%s2447 + $0xc4] sm:$0xff]
    %v2665 = vld [vmem:[%s2447 + $0xd4] sm:$0xff]
    %v2666 = vld [vmem:[%s2447 + $0xe4] sm:$0xff]
    %v2667 = vld [vmem:[%s2447 + $0xf4] sm:$0xff]
    %v2668 = vld [vmem:[%s2447 + $0x104] sm:$0xff]
    %v2669 = vld [vmem:[%s2447 + $0x114] sm:$0xff]
    %v2670 = vld [vmem:[%s2447 + $0x124] sm:$0xff]
    %v2671 = vld [vmem:[%s2447 + $0x134] sm:$0xff]
    %v2672 = vlaneseq
    %v2673 = vshrl.u32 %v2672, 7
    %v2674 = vsub.s32 1, %v2673
    %v2675 = vrot.slane %v2184, %v2674
    %v2676 = vmul.f32 %v2656, %v2675
    %v2677 = vmul.f32 %v2657, %v2675
    %v2678 = vmul.f32 %v2658, %v2675
    %v2679 = vmul.f32 %v2659, %v2675
    %v2680 = vmul.f32 %v2660, %v2675
    %v2681 = vmul.f32 %v2661, %v2675
    %v2682 = vmul.f32 %v2662, %v2675
    %v2683 = vmul.f32 %v2663, %v2675
    %v2684 = vmul.f32 %v2664, %v2675
    %v2685 = vmul.f32 %v2665, %v2675
    %v2686 = vmul.f32 %v2666, %v2675
    %v2687 = vmul.f32 %v2667, %v2675
    %v2688 = vmul.f32 %v2668, %v2675
    %v2689 = vmul.f32 %v2669, %v2675
    %v2690 = vmul.f32 %v2670, %v2675
    %v2691 = vmul.f32 %v2671, %v2675
    %v2692 = vadd.f32 %v2640, %v2676
    %v2693 = vadd.f32 %v2641, %v2677
    %v2694 = vadd.f32 %v2642, %v2678
    %v2695 = vadd.f32 %v2643, %v2679
    %v2696 = vadd.f32 %v2644, %v2680
    %v2697 = vadd.f32 %v2645, %v2681
    %v2698 = vadd.f32 %v2646, %v2682
    %v2699 = vadd.f32 %v2647, %v2683
    %v2700 = vadd.f32 %v2648, %v2684
    %v2701 = vadd.f32 %v2649, %v2685
    %v2702 = vadd.f32 %v2650, %v2686
    %v2703 = vadd.f32 %v2651, %v2687
    %v2704 = vadd.f32 %v2652, %v2688
    %v2705 = vadd.f32 %v2653, %v2689
    %v2706 = vadd.f32 %v2654, %v2690
    %v2707 = vadd.f32 %v2655, %v2691
    %v2708 = vld [vmem:[%s2166] sm:$0xff]
    %v2709 = vld [vmem:[%s2166 + $0x10] sm:$0xff]
    %v2710 = vld [vmem:[%s2166 + $0x20] sm:$0xff]
    %v2711 = vld [vmem:[%s2166 + $0x30] sm:$0xff]
    %v2712 = vld [vmem:[%s2166 + $0x40] sm:$0xff]
    %v2713 = vld [vmem:[%s2166 + $0x50] sm:$0xff]
    %v2714 = vld [vmem:[%s2166 + $0x60] sm:$0xff]
    %v2715 = vld [vmem:[%s2166 + $0x70] sm:$0xff]
    %v2716 = vld [vmem:[%s2166 + $0xc0] sm:$0xff]
    %v2717 = vld [vmem:[%s2166 + $0xd0] sm:$0xff]
    %v2718 = vld [vmem:[%s2166 + $0xe0] sm:$0xff]
    %v2719 = vld [vmem:[%s2166 + $0xf0] sm:$0xff]
    %v2720 = vld [vmem:[%s2166 + $0x100] sm:$0xff]
    %v2721 = vld [vmem:[%s2166 + $0x110] sm:$0xff]
    %v2722 = vld [vmem:[%s2166 + $0x120] sm:$0xff]
    %v2723 = vld [vmem:[%s2166 + $0x130] sm:$0xff]
    %v2724 = vlaneseq
    %v2725 = vshrl.u32 %v2724, 7
    %v2726 = vsub.s32 2, %v2725
    %v2727 = vrot.slane %v2184, %v2726
    %v2728 = vmul.f32 %v2708, %v2727
    %v2729 = vmul.f32 %v2709, %v2727
    %v2730 = vmul.f32 %v2710, %v2727
    %v2731 = vmul.f32 %v2711, %v2727
    %v2732 = vmul.f32 %v2712, %v2727
    %v2733 = vmul.f32 %v2713, %v2727
    %v2734 = vmul.f32 %v2714, %v2727
    %v2735 = vmul.f32 %v2715, %v2727
    %v2736 = vmul.f32 %v2716, %v2727
    %v2737 = vmul.f32 %v2717, %v2727
    %v2738 = vmul.f32 %v2718, %v2727
    %v2739 = vmul.f32 %v2719, %v2727
    %v2740 = vmul.f32 %v2720, %v2727
    %v2741 = vmul.f32 %v2721, %v2727
    %v2742 = vmul.f32 %v2722, %v2727
    %v2743 = vmul.f32 %v2723, %v2727
    %v2744 = vadd.f32 %v2692, %v2728
    %v2745 = vadd.f32 %v2693, %v2729
    %v2746 = vadd.f32 %v2694, %v2730
    %v2747 = vadd.f32 %v2695, %v2731
    %v2748 = vadd.f32 %v2696, %v2732
    %v2749 = vadd.f32 %v2697, %v2733
    %v2750 = vadd.f32 %v2698, %v2734
    %v2751 = vadd.f32 %v2699, %v2735
    %v2752 = vadd.f32 %v2700, %v2736
    %v2753 = vadd.f32 %v2701, %v2737
    %v2754 = vadd.f32 %v2702, %v2738
    %v2755 = vadd.f32 %v2703, %v2739
    %v2756 = vadd.f32 %v2704, %v2740
    %v2757 = vadd.f32 %v2705, %v2741
    %v2758 = vadd.f32 %v2706, %v2742
    %v2759 = vadd.f32 %v2707, %v2743
    %v2760 = vld [vmem:[%s2166 + $0x1] sm:$0xff]
    %v2761 = vld [vmem:[%s2166 + $0x11] sm:$0xff]
    %v2762 = vld [vmem:[%s2166 + $0x21] sm:$0xff]
    %v2763 = vld [vmem:[%s2166 + $0x31] sm:$0xff]
    %v2764 = vld [vmem:[%s2166 + $0x41] sm:$0xff]
    %v2765 = vld [vmem:[%s2166 + $0x51] sm:$0xff]
    %v2766 = vld [vmem:[%s2166 + $0x61] sm:$0xff]
    %v2767 = vld [vmem:[%s2166 + $0x71] sm:$0xff]
    %v2768 = vld [vmem:[%s2166 + $0xc1] sm:$0xff]
    %v2769 = vld [vmem:[%s2166 + $0xd1] sm:$0xff]
    %v2770 = vld [vmem:[%s2166 + $0xe1] sm:$0xff]
    %v2771 = vld [vmem:[%s2166 + $0xf1] sm:$0xff]
    %v2772 = vld [vmem:[%s2166 + $0x101] sm:$0xff]
    %v2773 = vld [vmem:[%s2166 + $0x111] sm:$0xff]
    %v2774 = vld [vmem:[%s2166 + $0x121] sm:$0xff]
    %v2775 = vld [vmem:[%s2166 + $0x131] sm:$0xff]
    %v2776 = vlaneseq
    %v2777 = vshrl.u32 %v2776, 7
    %v2778 = vsub.s32 3, %v2777
    %v2779 = vrot.slane %v2184, %v2778
    %v2780 = vmul.f32 %v2760, %v2779
    %v2781 = vmul.f32 %v2761, %v2779
    %v2782 = vmul.f32 %v2762, %v2779
    %v2783 = vmul.f32 %v2763, %v2779
    %v2784 = vmul.f32 %v2764, %v2779
    %v2785 = vmul.f32 %v2765, %v2779
    %v2786 = vmul.f32 %v2766, %v2779
    %v2787 = vmul.f32 %v2767, %v2779
    %v2788 = vmul.f32 %v2768, %v2779
    %v2789 = vmul.f32 %v2769, %v2779
    %v2790 = vmul.f32 %v2770, %v2779
    %v2791 = vmul.f32 %v2771, %v2779
    %v2792 = vmul.f32 %v2772, %v2779
    %v2793 = vmul.f32 %v2773, %v2779
    %v2794 = vmul.f32 %v2774, %v2779
    %v2795 = vmul.f32 %v2775, %v2779
    %v2796 = vadd.f32 %v2744, %v2780
    %v2797 = vadd.f32 %v2745, %v2781
    %v2798 = vadd.f32 %v2746, %v2782
    %v2799 = vadd.f32 %v2747, %v2783
    %v2800 = vadd.f32 %v2748, %v2784
    %v2801 = vadd.f32 %v2749, %v2785
    %v2802 = vadd.f32 %v2750, %v2786
    %v2803 = vadd.f32 %v2751, %v2787
    %v2804 = vadd.f32 %v2752, %v2788
    %v2805 = vadd.f32 %v2753, %v2789
    %v2806 = vadd.f32 %v2754, %v2790
    %v2807 = vadd.f32 %v2755, %v2791
    %v2808 = vadd.f32 %v2756, %v2792
    %v2809 = vadd.f32 %v2757, %v2793
    %v2810 = vadd.f32 %v2758, %v2794
    %v2811 = vadd.f32 %v2759, %v2795
    %v2812 = vld [vmem:[%s2166 + $0x2] sm:$0xff]
    %v2813 = vld [vmem:[%s2166 + $0x12] sm:$0xff]
    %v2814 = vld [vmem:[%s2166 + $0x22] sm:$0xff]
    %v2815 = vld [vmem:[%s2166 + $0x32] sm:$0xff]
    %v2816 = vld [vmem:[%s2166 + $0x42] sm:$0xff]
    %v2817 = vld [vmem:[%s2166 + $0x52] sm:$0xff]
    %v2818 = vld [vmem:[%s2166 + $0x62] sm:$0xff]
    %v2819 = vld [vmem:[%s2166 + $0x72] sm:$0xff]
    %v2820 = vld [vmem:[%s2166 + $0xc2] sm:$0xff]
    %v2821 = vld [vmem:[%s2166 + $0xd2] sm:$0xff]
    %v2822 = vld [vmem:[%s2166 + $0xe2] sm:$0xff]
    %v2823 = vld [vmem:[%s2166 + $0xf2] sm:$0xff]
    %v2824 = vld [vmem:[%s2166 + $0x102] sm:$0xff]
    %v2825 = vld [vmem:[%s2166 + $0x112] sm:$0xff]
    %v2826 = vld [vmem:[%s2166 + $0x122] sm:$0xff]
    %v2827 = vld [vmem:[%s2166 + $0x132] sm:$0xff]
    %v2828 = vlaneseq
    %v2829 = vshrl.u32 %v2828, 7
    %v2830 = vsub.s32 4, %v2829
    %v2831 = vrot.slane %v2184, %v2830
    %v2832 = vmul.f32 %v2812, %v2831
    %v2833 = vmul.f32 %v2813, %v2831
    %v2834 = vmul.f32 %v2814, %v2831
    %v2835 = vmul.f32 %v2815, %v2831
    %v2836 = vmul.f32 %v2816, %v2831
    %v2837 = vmul.f32 %v2817, %v2831
    %v2838 = vmul.f32 %v2818, %v2831
    %v2839 = vmul.f32 %v2819, %v2831
    %v2840 = vmul.f32 %v2820, %v2831
    %v2841 = vmul.f32 %v2821, %v2831
    %v2842 = vmul.f32 %v2822, %v2831
    %v2843 = vmul.f32 %v2823, %v2831
    %v2844 = vmul.f32 %v2824, %v2831
    %v2845 = vmul.f32 %v2825, %v2831
    %v2846 = vmul.f32 %v2826, %v2831
    %v2847 = vmul.f32 %v2827, %v2831
    %v2848 = vadd.f32 %v2796, %v2832
    %v2849 = vadd.f32 %v2797, %v2833
    %v2850 = vadd.f32 %v2798, %v2834
    %v2851 = vadd.f32 %v2799, %v2835
    %v2852 = vadd.f32 %v2800, %v2836
    %v2853 = vadd.f32 %v2801, %v2837
    %v2854 = vadd.f32 %v2802, %v2838
    %v2855 = vadd.f32 %v2803, %v2839
    %v2856 = vadd.f32 %v2804, %v2840
    %v2857 = vadd.f32 %v2805, %v2841
    %v2858 = vadd.f32 %v2806, %v2842
    %v2859 = vadd.f32 %v2807, %v2843
    %v2860 = vadd.f32 %v2808, %v2844
    %v2861 = vadd.f32 %v2809, %v2845
    %v2862 = vadd.f32 %v2810, %v2846
    %v2863 = vadd.f32 %v2811, %v2847
    %v2864 = vld [vmem:[%s2166 + $0x3] sm:$0xff]
    %v2865 = vld [vmem:[%s2166 + $0x13] sm:$0xff]
    %v2866 = vld [vmem:[%s2166 + $0x23] sm:$0xff]
    %v2867 = vld [vmem:[%s2166 + $0x33] sm:$0xff]
    %v2868 = vld [vmem:[%s2166 + $0x43] sm:$0xff]
    %v2869 = vld [vmem:[%s2166 + $0x53] sm:$0xff]
    %v2870 = vld [vmem:[%s2166 + $0x63] sm:$0xff]
    %v2871 = vld [vmem:[%s2166 + $0x73] sm:$0xff]
    %v2872 = vld [vmem:[%s2166 + $0xc3] sm:$0xff]
    %v2873 = vld [vmem:[%s2166 + $0xd3] sm:$0xff]
    %v2874 = vld [vmem:[%s2166 + $0xe3] sm:$0xff]
    %v2875 = vld [vmem:[%s2166 + $0xf3] sm:$0xff]
    %v2876 = vld [vmem:[%s2166 + $0x103] sm:$0xff]
    %v2877 = vld [vmem:[%s2166 + $0x113] sm:$0xff]
    %v2878 = vld [vmem:[%s2166 + $0x123] sm:$0xff]
    %v2879 = vld [vmem:[%s2166 + $0x133] sm:$0xff]
    %v2880 = vlaneseq
    %v2881 = vshrl.u32 %v2880, 7
    %v2882 = vsub.s32 5, %v2881
    %v2883 = vrot.slane %v2184, %v2882
    %v2884 = vmul.f32 %v2864, %v2883
    %v2885 = vmul.f32 %v2865, %v2883
    %v2886 = vmul.f32 %v2866, %v2883
    %v2887 = vmul.f32 %v2867, %v2883
    %v2888 = vmul.f32 %v2868, %v2883
    %v2889 = vmul.f32 %v2869, %v2883
    %v2890 = vmul.f32 %v2870, %v2883
    %v2891 = vmul.f32 %v2871, %v2883
    %v2892 = vmul.f32 %v2872, %v2883
    %v2893 = vmul.f32 %v2873, %v2883
    %v2894 = vmul.f32 %v2874, %v2883
    %v2895 = vmul.f32 %v2875, %v2883
    %v2896 = vmul.f32 %v2876, %v2883
    %v2897 = vmul.f32 %v2877, %v2883
    %v2898 = vmul.f32 %v2878, %v2883
    %v2899 = vmul.f32 %v2879, %v2883
    %v2900 = vadd.f32 %v2848, %v2884
    %v2901 = vadd.f32 %v2849, %v2885
    %v2902 = vadd.f32 %v2850, %v2886
    %v2903 = vadd.f32 %v2851, %v2887
    %v2904 = vadd.f32 %v2852, %v2888
    %v2905 = vadd.f32 %v2853, %v2889
    %v2906 = vadd.f32 %v2854, %v2890
    %v2907 = vadd.f32 %v2855, %v2891
    %v2908 = vadd.f32 %v2856, %v2892
    %v2909 = vadd.f32 %v2857, %v2893
    %v2910 = vadd.f32 %v2858, %v2894
    %v2911 = vadd.f32 %v2859, %v2895
    %v2912 = vadd.f32 %v2860, %v2896
    %v2913 = vadd.f32 %v2861, %v2897
    %v2914 = vadd.f32 %v2862, %v2898
    %v2915 = vadd.f32 %v2863, %v2899
    %v2916 = vld [vmem:[%s2166 + $0x4] sm:$0xff]
    %v2917 = vld [vmem:[%s2166 + $0x14] sm:$0xff]
    %v2918 = vld [vmem:[%s2166 + $0x24] sm:$0xff]
    %v2919 = vld [vmem:[%s2166 + $0x34] sm:$0xff]
    %v2920 = vld [vmem:[%s2166 + $0x44] sm:$0xff]
    %v2921 = vld [vmem:[%s2166 + $0x54] sm:$0xff]
    %v2922 = vld [vmem:[%s2166 + $0x64] sm:$0xff]
    %v2923 = vld [vmem:[%s2166 + $0x74] sm:$0xff]
    %v2924 = vld [vmem:[%s2166 + $0xc4] sm:$0xff]
    %v2925 = vld [vmem:[%s2166 + $0xd4] sm:$0xff]
    %v2926 = vld [vmem:[%s2166 + $0xe4] sm:$0xff]
    %v2927 = vld [vmem:[%s2166 + $0xf4] sm:$0xff]
    %v2928 = vld [vmem:[%s2166 + $0x104] sm:$0xff]
    %v2929 = vld [vmem:[%s2166 + $0x114] sm:$0xff]
    %v2930 = vld [vmem:[%s2166 + $0x124] sm:$0xff]
    %v2931 = vld [vmem:[%s2166 + $0x134] sm:$0xff]
    %v2932 = vlaneseq
    %v2933 = vshrl.u32 %v2932, 7
    %v2934 = vsub.s32 6, %v2933
    %v2935 = vrot.slane %v2184, %v2934
    %v2936 = vmul.f32 %v2916, %v2935
    %v2937 = vmul.f32 %v2917, %v2935
    %v2938 = vmul.f32 %v2918, %v2935
    %v2939 = vmul.f32 %v2919, %v2935
    %v2940 = vmul.f32 %v2920, %v2935
    %v2941 = vmul.f32 %v2921, %v2935
    %v2942 = vmul.f32 %v2922, %v2935
    %v2943 = vmul.f32 %v2923, %v2935
    %v2944 = vmul.f32 %v2924, %v2935
    %v2945 = vmul.f32 %v2925, %v2935
    %v2946 = vmul.f32 %v2926, %v2935
    %v2947 = vmul.f32 %v2927, %v2935
    %v2948 = vmul.f32 %v2928, %v2935
    %v2949 = vmul.f32 %v2929, %v2935
    %v2950 = vmul.f32 %v2930, %v2935
    %v2951 = vmul.f32 %v2931, %v2935
    %v2952 = vadd.f32 %v2900, %v2936
    %v2953 = vadd.f32 %v2901, %v2937
    %v2954 = vadd.f32 %v2902, %v2938
    %v2955 = vadd.f32 %v2903, %v2939
    %v2956 = vadd.f32 %v2904, %v2940
    %v2957 = vadd.f32 %v2905, %v2941
    %v2958 = vadd.f32 %v2906, %v2942
    %v2959 = vadd.f32 %v2907, %v2943
    %v2960 = vadd.f32 %v2908, %v2944
    %v2961 = vadd.f32 %v2909, %v2945
    %v2962 = vadd.f32 %v2910, %v2946
    %v2963 = vadd.f32 %v2911, %v2947
    %v2964 = vadd.f32 %v2912, %v2948
    %v2965 = vadd.f32 %v2913, %v2949
    %v2966 = vadd.f32 %v2914, %v2950
    %v2967 = vadd.f32 %v2915, %v2951
    %s2968 = scalar_lea.vmem [#allocation2], 48
    %v2969 = vld [vmem:[%s2968] sm:$0xff]
    %v2970 = vld [vmem:[%s2968 + $0x10] sm:$0xff]
    %v2971 = vld [vmem:[%s2968 + $0x20] sm:$0xff]
    %v2972 = vld [vmem:[%s2968 + $0x30] sm:$0xff]
    %v2973 = vld [vmem:[%s2968 + $0x40] sm:$0xff]
    %v2974 = vld [vmem:[%s2968 + $0x50] sm:$0xff]
    %v2975 = vld [vmem:[%s2968 + $0x60] sm:$0xff]
    %v2976 = vld [vmem:[%s2968 + $0x70] sm:$0xff]
    %v2977 = vld [vmem:[%s2968 + $0xc0] sm:$0xff]
    %v2978 = vld [vmem:[%s2968 + $0xd0] sm:$0xff]
    %v2979 = vld [vmem:[%s2968 + $0xe0] sm:$0xff]
    %v2980 = vld [vmem:[%s2968 + $0xf0] sm:$0xff]
    %v2981 = vld [vmem:[%s2968 + $0x100] sm:$0xff]
    %v2982 = vld [vmem:[%s2968 + $0x110] sm:$0xff]
    %v2983 = vld [vmem:[%s2968 + $0x120] sm:$0xff]
    %v2984 = vld [vmem:[%s2968 + $0x130] sm:$0xff]
    %v2985 = vlaneseq
    %v2986 = vshrl.u32 %v2985, 7
    %v2987 = vsub.s32 7, %v2986
    %v2988 = vrot.slane %v2184, %v2987
    %v2989 = vmul.f32 %v2969, %v2988
    %v2990 = vmul.f32 %v2970, %v2988
    %v2991 = vmul.f32 %v2971, %v2988
    %v2992 = vmul.f32 %v2972, %v2988
    %v2993 = vmul.f32 %v2973, %v2988
    %v2994 = vmul.f32 %v2974, %v2988
    %v2995 = vmul.f32 %v2975, %v2988
    %v2996 = vmul.f32 %v2976, %v2988
    %v2997 = vmul.f32 %v2977, %v2988
    %v2998 = vmul.f32 %v2978, %v2988
    %v2999 = vmul.f32 %v2979, %v2988
    %v3000 = vmul.f32 %v2980, %v2988
    %v3001 = vmul.f32 %v2981, %v2988
    %v3002 = vmul.f32 %v2982, %v2988
    %v3003 = vmul.f32 %v2983, %v2988
    %v3004 = vmul.f32 %v2984, %v2988
    %v3005 = vadd.f32 %v2952, %v2989
    %v3006 = vadd.f32 %v2953, %v2990
    %v3007 = vadd.f32 %v2954, %v2991
    %v3008 = vadd.f32 %v2955, %v2992
    %v3009 = vadd.f32 %v2956, %v2993
    %v3010 = vadd.f32 %v2957, %v2994
    %v3011 = vadd.f32 %v2958, %v2995
    %v3012 = vadd.f32 %v2959, %v2996
    %v3013 = vadd.f32 %v2960, %v2997
    %v3014 = vadd.f32 %v2961, %v2998
    %v3015 = vadd.f32 %v2962, %v2999
    %v3016 = vadd.f32 %v2963, %v3000
    %v3017 = vadd.f32 %v2964, %v3001
    %v3018 = vadd.f32 %v2965, %v3002
    %v3019 = vadd.f32 %v2966, %v3003
    %v3020 = vadd.f32 %v2967, %v3004
    %v3021 = vld [vmem:[%s2968 + $0x1] sm:$0xff]
    %v3022 = vld [vmem:[%s2968 + $0x11] sm:$0xff]
    %v3023 = vld [vmem:[%s2968 + $0x21] sm:$0xff]
    %v3024 = vld [vmem:[%s2968 + $0x31] sm:$0xff]
    %v3025 = vld [vmem:[%s2968 + $0x41] sm:$0xff]
    %v3026 = vld [vmem:[%s2968 + $0x51] sm:$0xff]
    %v3027 = vld [vmem:[%s2968 + $0x61] sm:$0xff]
    %v3028 = vld [vmem:[%s2968 + $0x71] sm:$0xff]
    %v3029 = vld [vmem:[%s2968 + $0xc1] sm:$0xff]
    %v3030 = vld [vmem:[%s2968 + $0xd1] sm:$0xff]
    %v3031 = vld [vmem:[%s2968 + $0xe1] sm:$0xff]
    %v3032 = vld [vmem:[%s2968 + $0xf1] sm:$0xff]
    %v3033 = vld [vmem:[%s2968 + $0x101] sm:$0xff]
    %v3034 = vld [vmem:[%s2968 + $0x111] sm:$0xff]
    %v3035 = vld [vmem:[%s2968 + $0x121] sm:$0xff]
    %v3036 = vld [vmem:[%s2968 + $0x131] sm:$0xff]
    %v3037 = vlaneseq
    %v3038 = vshrl.u32 %v3037, 7
    %v3039 = vsub.s32 0, %v3038
    %v3040 = vrot.slane %v2185, %v3039
    %v3041 = vmul.f32 %v3021, %v3040
    %v3042 = vmul.f32 %v3022, %v3040
    %v3043 = vmul.f32 %v3023, %v3040
    %v3044 = vmul.f32 %v3024, %v3040
    %v3045 = vmul.f32 %v3025, %v3040
    %v3046 = vmul.f32 %v3026, %v3040
    %v3047 = vmul.f32 %v3027, %v3040
    %v3048 = vmul.f32 %v3028, %v3040
    %v3049 = vmul.f32 %v3029, %v3040
    %v3050 = vmul.f32 %v3030, %v3040
    %v3051 = vmul.f32 %v3031, %v3040
    %v3052 = vmul.f32 %v3032, %v3040
    %v3053 = vmul.f32 %v3033, %v3040
    %v3054 = vmul.f32 %v3034, %v3040
    %v3055 = vmul.f32 %v3035, %v3040
    %v3056 = vmul.f32 %v3036, %v3040
    %v3057 = vadd.f32 %v3005, %v3041
    %v3058 = vadd.f32 %v3006, %v3042
    %v3059 = vadd.f32 %v3007, %v3043
    %v3060 = vadd.f32 %v3008, %v3044
    %v3061 = vadd.f32 %v3009, %v3045
    %v3062 = vadd.f32 %v3010, %v3046
    %v3063 = vadd.f32 %v3011, %v3047
    %v3064 = vadd.f32 %v3012, %v3048
    %v3065 = vadd.f32 %v3013, %v3049
    %v3066 = vadd.f32 %v3014, %v3050
    %v3067 = vadd.f32 %v3015, %v3051
    %v3068 = vadd.f32 %v3016, %v3052
    %v3069 = vadd.f32 %v3017, %v3053
    %v3070 = vadd.f32 %v3018, %v3054
    %v3071 = vadd.f32 %v3019, %v3055
    %v3072 = vadd.f32 %v3020, %v3056
    %v3073 = vld [vmem:[%s2968 + $0x2] sm:$0xff]
    %v3074 = vld [vmem:[%s2968 + $0x12] sm:$0xff]
    %v3075 = vld [vmem:[%s2968 + $0x22] sm:$0xff]
    %v3076 = vld [vmem:[%s2968 + $0x32] sm:$0xff]
    %v3077 = vld [vmem:[%s2968 + $0x42] sm:$0xff]
    %v3078 = vld [vmem:[%s2968 + $0x52] sm:$0xff]
    %v3079 = vld [vmem:[%s2968 + $0x62] sm:$0xff]
    %v3080 = vld [vmem:[%s2968 + $0x72] sm:$0xff]
    %v3081 = vld [vmem:[%s2968 + $0xc2] sm:$0xff]
    %v3082 = vld [vmem:[%s2968 + $0xd2] sm:$0xff]
    %v3083 = vld [vmem:[%s2968 + $0xe2] sm:$0xff]
    %v3084 = vld [vmem:[%s2968 + $0xf2] sm:$0xff]
    %v3085 = vld [vmem:[%s2968 + $0x102] sm:$0xff]
    %v3086 = vld [vmem:[%s2968 + $0x112] sm:$0xff]
    %v3087 = vld [vmem:[%s2968 + $0x122] sm:$0xff]
    %v3088 = vld [vmem:[%s2968 + $0x132] sm:$0xff]
    %v3089 = vlaneseq
    %v3090 = vshrl.u32 %v3089, 7
    %v3091 = vsub.s32 1, %v3090
    %v3092 = vrot.slane %v2185, %v3091
    %v3093 = vmul.f32 %v3073, %v3092
    %v3094 = vmul.f32 %v3074, %v3092
    %v3095 = vmul.f32 %v3075, %v3092
    %v3096 = vmul.f32 %v3076, %v3092
    %v3097 = vmul.f32 %v3077, %v3092
    %v3098 = vmul.f32 %v3078, %v3092
    %v3099 = vmul.f32 %v3079, %v3092
    %v3100 = vmul.f32 %v3080, %v3092
    %v3101 = vmul.f32 %v3081, %v3092
    %v3102 = vmul.f32 %v3082, %v3092
    %v3103 = vmul.f32 %v3083, %v3092
    %v3104 = vmul.f32 %v3084, %v3092
    %v3105 = vmul.f32 %v3085, %v3092
    %v3106 = vmul.f32 %v3086, %v3092
    %v3107 = vmul.f32 %v3087, %v3092
    %v3108 = vmul.f32 %v3088, %v3092
    %v3109 = vadd.f32 %v3057, %v3093
    %v3110 = vadd.f32 %v3058, %v3094
    %v3111 = vadd.f32 %v3059, %v3095
    %v3112 = vadd.f32 %v3060, %v3096
    %v3113 = vadd.f32 %v3061, %v3097
    %v3114 = vadd.f32 %v3062, %v3098
    %v3115 = vadd.f32 %v3063, %v3099
    %v3116 = vadd.f32 %v3064, %v3100
    %v3117 = vadd.f32 %v3065, %v3101
    %v3118 = vadd.f32 %v3066, %v3102
    %v3119 = vadd.f32 %v3067, %v3103
    %v3120 = vadd.f32 %v3068, %v3104
    %v3121 = vadd.f32 %v3069, %v3105
    %v3122 = vadd.f32 %v3070, %v3106
    %v3123 = vadd.f32 %v3071, %v3107
    %v3124 = vadd.f32 %v3072, %v3108
    %v3125 = vld [vmem:[%s2968 + $0x3] sm:$0xff]
    %v3126 = vld [vmem:[%s2968 + $0x13] sm:$0xff]
    %v3127 = vld [vmem:[%s2968 + $0x23] sm:$0xff]
    %v3128 = vld [vmem:[%s2968 + $0x33] sm:$0xff]
    %v3129 = vld [vmem:[%s2968 + $0x43] sm:$0xff]
    %v3130 = vld [vmem:[%s2968 + $0x53] sm:$0xff]
    %v3131 = vld [vmem:[%s2968 + $0x63] sm:$0xff]
    %v3132 = vld [vmem:[%s2968 + $0x73] sm:$0xff]
    %v3133 = vld [vmem:[%s2968 + $0xc3] sm:$0xff]
    %v3134 = vld [vmem:[%s2968 + $0xd3] sm:$0xff]
    %v3135 = vld [vmem:[%s2968 + $0xe3] sm:$0xff]
    %v3136 = vld [vmem:[%s2968 + $0xf3] sm:$0xff]
    %v3137 = vld [vmem:[%s2968 + $0x103] sm:$0xff]
    %v3138 = vld [vmem:[%s2968 + $0x113] sm:$0xff]
    %v3139 = vld [vmem:[%s2968 + $0x123] sm:$0xff]
    %v3140 = vld [vmem:[%s2968 + $0x133] sm:$0xff]
    %v3141 = vlaneseq
    %v3142 = vshrl.u32 %v3141, 7
    %v3143 = vsub.s32 2, %v3142
    %v3144 = vrot.slane %v2185, %v3143
    %v3145 = vmul.f32 %v3125, %v3144
    %v3146 = vmul.f32 %v3126, %v3144
    %v3147 = vmul.f32 %v3127, %v3144
    %v3148 = vmul.f32 %v3128, %v3144
    %v3149 = vmul.f32 %v3129, %v3144
    %v3150 = vmul.f32 %v3130, %v3144
    %v3151 = vmul.f32 %v3131, %v3144
    %v3152 = vmul.f32 %v3132, %v3144
    %v3153 = vmul.f32 %v3133, %v3144
    %v3154 = vmul.f32 %v3134, %v3144
    %v3155 = vmul.f32 %v3135, %v3144
    %v3156 = vmul.f32 %v3136, %v3144
    %v3157 = vmul.f32 %v3137, %v3144
    %v3158 = vmul.f32 %v3138, %v3144
    %v3159 = vmul.f32 %v3139, %v3144
    %v3160 = vmul.f32 %v3140, %v3144
    %v3161 = vadd.f32 %v3109, %v3145
    %v3162 = vadd.f32 %v3110, %v3146
    %v3163 = vadd.f32 %v3111, %v3147
    %v3164 = vadd.f32 %v3112, %v3148
    %v3165 = vadd.f32 %v3113, %v3149
    %v3166 = vadd.f32 %v3114, %v3150
    %v3167 = vadd.f32 %v3115, %v3151
    %v3168 = vadd.f32 %v3116, %v3152
    %v3169 = vadd.f32 %v3117, %v3153
    %v3170 = vadd.f32 %v3118, %v3154
    %v3171 = vadd.f32 %v3119, %v3155
    %v3172 = vadd.f32 %v3120, %v3156
    %v3173 = vadd.f32 %v3121, %v3157
    %v3174 = vadd.f32 %v3122, %v3158
    %v3175 = vadd.f32 %v3123, %v3159
    %v3176 = vadd.f32 %v3124, %v3160
    %v3177 = vld [vmem:[%s2968 + $0x4] sm:$0xff]
    %v3178 = vld [vmem:[%s2968 + $0x14] sm:$0xff]
    %v3179 = vld [vmem:[%s2968 + $0x24] sm:$0xff]
    %v3180 = vld [vmem:[%s2968 + $0x34] sm:$0xff]
    %v3181 = vld [vmem:[%s2968 + $0x44] sm:$0xff]
    %v3182 = vld [vmem:[%s2968 + $0x54] sm:$0xff]
    %v3183 = vld [vmem:[%s2968 + $0x64] sm:$0xff]
    %v3184 = vld [vmem:[%s2968 + $0x74] sm:$0xff]
    %v3185 = vld [vmem:[%s2968 + $0xc4] sm:$0xff]
    %v3186 = vld [vmem:[%s2968 + $0xd4] sm:$0xff]
    %v3187 = vld [vmem:[%s2968 + $0xe4] sm:$0xff]
    %v3188 = vld [vmem:[%s2968 + $0xf4] sm:$0xff]
    %v3189 = vld [vmem:[%s2968 + $0x104] sm:$0xff]
    %v3190 = vld [vmem:[%s2968 + $0x114] sm:$0xff]
    %v3191 = vld [vmem:[%s2968 + $0x124] sm:$0xff]
    %v3192 = vld [vmem:[%s2968 + $0x134] sm:$0xff]
    %v3193 = vlaneseq
    %v3194 = vshrl.u32 %v3193, 7
    %v3195 = vsub.s32 3, %v3194
    %v3196 = vrot.slane %v2185, %v3195
    %v3197 = vmul.f32 %v3177, %v3196
    %v3198 = vmul.f32 %v3178, %v3196
    %v3199 = vmul.f32 %v3179, %v3196
    %v3200 = vmul.f32 %v3180, %v3196
    %v3201 = vmul.f32 %v3181, %v3196
    %v3202 = vmul.f32 %v3182, %v3196
    %v3203 = vmul.f32 %v3183, %v3196
    %v3204 = vmul.f32 %v3184, %v3196
    %v3205 = vmul.f32 %v3185, %v3196
    %v3206 = vmul.f32 %v3186, %v3196
    %v3207 = vmul.f32 %v3187, %v3196
    %v3208 = vmul.f32 %v3188, %v3196
    %v3209 = vmul.f32 %v3189, %v3196
    %v3210 = vmul.f32 %v3190, %v3196
    %v3211 = vmul.f32 %v3191, %v3196
    %v3212 = vmul.f32 %v3192, %v3196
    %v3213 = vadd.f32 %v3161, %v3197
    %v3214 = vadd.f32 %v3162, %v3198
    %v3215 = vadd.f32 %v3163, %v3199
    %v3216 = vadd.f32 %v3164, %v3200
    %v3217 = vadd.f32 %v3165, %v3201
    %v3218 = vadd.f32 %v3166, %v3202
    %v3219 = vadd.f32 %v3167, %v3203
    %v3220 = vadd.f32 %v3168, %v3204
    %v3221 = vadd.f32 %v3169, %v3205
    %v3222 = vadd.f32 %v3170, %v3206
    %v3223 = vadd.f32 %v3171, %v3207
    %v3224 = vadd.f32 %v3172, %v3208
    %v3225 = vadd.f32 %v3173, %v3209
    %v3226 = vadd.f32 %v3174, %v3210
    %v3227 = vadd.f32 %v3175, %v3211
    %v3228 = vadd.f32 %v3176, %v3212
    %s3229 = scalar_lea.vmem [#allocation2], 64
    %v3230 = vld [vmem:[%s3229] sm:$0xff]
    %v3231 = vld [vmem:[%s3229 + $0x10] sm:$0xff]
    %v3232 = vld [vmem:[%s3229 + $0x20] sm:$0xff]
    %v3233 = vld [vmem:[%s3229 + $0x30] sm:$0xff]
    %v3234 = vld [vmem:[%s3229 + $0x40] sm:$0xff]
    %v3235 = vld [vmem:[%s3229 + $0x50] sm:$0xff]
    %v3236 = vld [vmem:[%s3229 + $0x60] sm:$0xff]
    %v3237 = vld [vmem:[%s3229 + $0x70] sm:$0xff]
    %v3238 = vld [vmem:[%s3229 + $0xc0] sm:$0xff]
    %v3239 = vld [vmem:[%s3229 + $0xd0] sm:$0xff]
    %v3240 = vld [vmem:[%s3229 + $0xe0] sm:$0xff]
    %v3241 = vld [vmem:[%s3229 + $0xf0] sm:$0xff]
    %v3242 = vld [vmem:[%s3229 + $0x100] sm:$0xff]
    %v3243 = vld [vmem:[%s3229 + $0x110] sm:$0xff]
    %v3244 = vld [vmem:[%s3229 + $0x120] sm:$0xff]
    %v3245 = vld [vmem:[%s3229 + $0x130] sm:$0xff]
    %v3246 = vlaneseq
    %v3247 = vshrl.u32 %v3246, 7
    %v3248 = vsub.s32 4, %v3247
    %v3249 = vrot.slane %v2185, %v3248
    %v3250 = vmul.f32 %v3230, %v3249
    %v3251 = vmul.f32 %v3231, %v3249
    %v3252 = vmul.f32 %v3232, %v3249
    %v3253 = vmul.f32 %v3233, %v3249
    %v3254 = vmul.f32 %v3234, %v3249
    %v3255 = vmul.f32 %v3235, %v3249
    %v3256 = vmul.f32 %v3236, %v3249
    %v3257 = vmul.f32 %v3237, %v3249
    %v3258 = vmul.f32 %v3238, %v3249
    %v3259 = vmul.f32 %v3239, %v3249
    %v3260 = vmul.f32 %v3240, %v3249
    %v3261 = vmul.f32 %v3241, %v3249
    %v3262 = vmul.f32 %v3242, %v3249
    %v3263 = vmul.f32 %v3243, %v3249
    %v3264 = vmul.f32 %v3244, %v3249
    %v3265 = vmul.f32 %v3245, %v3249
    %v3266 = vadd.f32 %v3213, %v3250
    %v3267 = vadd.f32 %v3214, %v3251
    %v3268 = vadd.f32 %v3215, %v3252
    %v3269 = vadd.f32 %v3216, %v3253
    %v3270 = vadd.f32 %v3217, %v3254
    %v3271 = vadd.f32 %v3218, %v3255
    %v3272 = vadd.f32 %v3219, %v3256
    %v3273 = vadd.f32 %v3220, %v3257
    %v3274 = vadd.f32 %v3221, %v3258
    %v3275 = vadd.f32 %v3222, %v3259
    %v3276 = vadd.f32 %v3223, %v3260
    %v3277 = vadd.f32 %v3224, %v3261
    %v3278 = vadd.f32 %v3225, %v3262
    %v3279 = vadd.f32 %v3226, %v3263
    %v3280 = vadd.f32 %v3227, %v3264
    %v3281 = vadd.f32 %v3228, %v3265
    %v3282 = vld [vmem:[%s3229 + $0x1] sm:$0xff]
    %v3283 = vld [vmem:[%s3229 + $0x11] sm:$0xff]
    %v3284 = vld [vmem:[%s3229 + $0x21] sm:$0xff]
    %v3285 = vld [vmem:[%s3229 + $0x31] sm:$0xff]
    %v3286 = vld [vmem:[%s3229 + $0x41] sm:$0xff]
    %v3287 = vld [vmem:[%s3229 + $0x51] sm:$0xff]
    %v3288 = vld [vmem:[%s3229 + $0x61] sm:$0xff]
    %v3289 = vld [vmem:[%s3229 + $0x71] sm:$0xff]
    %v3290 = vld [vmem:[%s3229 + $0xc1] sm:$0xff]
    %v3291 = vld [vmem:[%s3229 + $0xd1] sm:$0xff]
    %v3292 = vld [vmem:[%s3229 + $0xe1] sm:$0xff]
    %v3293 = vld [vmem:[%s3229 + $0xf1] sm:$0xff]
    %v3294 = vld [vmem:[%s3229 + $0x101] sm:$0xff]
    %v3295 = vld [vmem:[%s3229 + $0x111] sm:$0xff]
    %v3296 = vld [vmem:[%s3229 + $0x121] sm:$0xff]
    %v3297 = vld [vmem:[%s3229 + $0x131] sm:$0xff]
    %v3298 = vlaneseq
    %v3299 = vshrl.u32 %v3298, 7
    %v3300 = vsub.s32 5, %v3299
    %v3301 = vrot.slane %v2185, %v3300
    %v3302 = vmul.f32 %v3282, %v3301
    %v3303 = vmul.f32 %v3283, %v3301
    %v3304 = vmul.f32 %v3284, %v3301
    %v3305 = vmul.f32 %v3285, %v3301
    %v3306 = vmul.f32 %v3286, %v3301
    %v3307 = vmul.f32 %v3287, %v3301
    %v3308 = vmul.f32 %v3288, %v3301
    %v3309 = vmul.f32 %v3289, %v3301
    %v3310 = vmul.f32 %v3290, %v3301
    %v3311 = vmul.f32 %v3291, %v3301
    %v3312 = vmul.f32 %v3292, %v3301
    %v3313 = vmul.f32 %v3293, %v3301
    %v3314 = vmul.f32 %v3294, %v3301
    %v3315 = vmul.f32 %v3295, %v3301
    %v3316 = vmul.f32 %v3296, %v3301
    %v3317 = vmul.f32 %v3297, %v3301
    %v3318 = vadd.f32 %v3266, %v3302
    %v3319 = vadd.f32 %v3267, %v3303
    %v3320 = vadd.f32 %v3268, %v3304
    %v3321 = vadd.f32 %v3269, %v3305
    %v3322 = vadd.f32 %v3270, %v3306
    %v3323 = vadd.f32 %v3271, %v3307
    %v3324 = vadd.f32 %v3272, %v3308
    %v3325 = vadd.f32 %v3273, %v3309
    %v3326 = vadd.f32 %v3274, %v3310
    %v3327 = vadd.f32 %v3275, %v3311
    %v3328 = vadd.f32 %v3276, %v3312
    %v3329 = vadd.f32 %v3277, %v3313
    %v3330 = vadd.f32 %v3278, %v3314
    %v3331 = vadd.f32 %v3279, %v3315
    %v3332 = vadd.f32 %v3280, %v3316
    %v3333 = vadd.f32 %v3281, %v3317
    %v3334 = vld [vmem:[%s3229 + $0x2] sm:$0xff]
    %v3335 = vld [vmem:[%s3229 + $0x12] sm:$0xff]
    %v3336 = vld [vmem:[%s3229 + $0x22] sm:$0xff]
    %v3337 = vld [vmem:[%s3229 + $0x32] sm:$0xff]
    %v3338 = vld [vmem:[%s3229 + $0x42] sm:$0xff]
    %v3339 = vld [vmem:[%s3229 + $0x52] sm:$0xff]
    %v3340 = vld [vmem:[%s3229 + $0x62] sm:$0xff]
    %v3341 = vld [vmem:[%s3229 + $0x72] sm:$0xff]
    %v3342 = vld [vmem:[%s3229 + $0xc2] sm:$0xff]
    %v3343 = vld [vmem:[%s3229 + $0xd2] sm:$0xff]
    %v3344 = vld [vmem:[%s3229 + $0xe2] sm:$0xff]
    %v3345 = vld [vmem:[%s3229 + $0xf2] sm:$0xff]
    %v3346 = vld [vmem:[%s3229 + $0x102] sm:$0xff]
    %v3347 = vld [vmem:[%s3229 + $0x112] sm:$0xff]
    %v3348 = vld [vmem:[%s3229 + $0x122] sm:$0xff]
    %v3349 = vld [vmem:[%s3229 + $0x132] sm:$0xff]
    %v3350 = vlaneseq
    %v3351 = vshrl.u32 %v3350, 7
    %v3352 = vsub.s32 6, %v3351
    %v3353 = vrot.slane %v2185, %v3352
    %v3354 = vmul.f32 %v3334, %v3353
    %v3355 = vmul.f32 %v3335, %v3353
    %v3356 = vmul.f32 %v3336, %v3353
    %v3357 = vmul.f32 %v3337, %v3353
    %v3358 = vmul.f32 %v3338, %v3353
    %v3359 = vmul.f32 %v3339, %v3353
    %v3360 = vmul.f32 %v3340, %v3353
    %v3361 = vmul.f32 %v3341, %v3353
    %v3362 = vmul.f32 %v3342, %v3353
    %v3363 = vmul.f32 %v3343, %v3353
    %v3364 = vmul.f32 %v3344, %v3353
    %v3365 = vmul.f32 %v3345, %v3353
    %v3366 = vmul.f32 %v3346, %v3353
    %v3367 = vmul.f32 %v3347, %v3353
    %v3368 = vmul.f32 %v3348, %v3353
    %v3369 = vmul.f32 %v3349, %v3353
    %v3370 = vadd.f32 %v3318, %v3354
    %v3371 = vadd.f32 %v3319, %v3355
    %v3372 = vadd.f32 %v3320, %v3356
    %v3373 = vadd.f32 %v3321, %v3357
    %v3374 = vadd.f32 %v3322, %v3358
    %v3375 = vadd.f32 %v3323, %v3359
    %v3376 = vadd.f32 %v3324, %v3360
    %v3377 = vadd.f32 %v3325, %v3361
    %v3378 = vadd.f32 %v3326, %v3362
    %v3379 = vadd.f32 %v3327, %v3363
    %v3380 = vadd.f32 %v3328, %v3364
    %v3381 = vadd.f32 %v3329, %v3365
    %v3382 = vadd.f32 %v3330, %v3366
    %v3383 = vadd.f32 %v3331, %v3367
    %v3384 = vadd.f32 %v3332, %v3368
    %v3385 = vadd.f32 %v3333, %v3369
    %v3386 = vld [vmem:[%s3229 + $0x3] sm:$0xff]
    %v3387 = vld [vmem:[%s3229 + $0x13] sm:$0xff]
    %v3388 = vld [vmem:[%s3229 + $0x23] sm:$0xff]
    %v3389 = vld [vmem:[%s3229 + $0x33] sm:$0xff]
    %v3390 = vld [vmem:[%s3229 + $0x43] sm:$0xff]
    %v3391 = vld [vmem:[%s3229 + $0x53] sm:$0xff]
    %v3392 = vld [vmem:[%s3229 + $0x63] sm:$0xff]
    %v3393 = vld [vmem:[%s3229 + $0x73] sm:$0xff]
    %v3394 = vld [vmem:[%s3229 + $0xc3] sm:$0xff]
    %v3395 = vld [vmem:[%s3229 + $0xd3] sm:$0xff]
    %v3396 = vld [vmem:[%s3229 + $0xe3] sm:$0xff]
    %v3397 = vld [vmem:[%s3229 + $0xf3] sm:$0xff]
    %v3398 = vld [vmem:[%s3229 + $0x103] sm:$0xff]
    %v3399 = vld [vmem:[%s3229 + $0x113] sm:$0xff]
    %v3400 = vld [vmem:[%s3229 + $0x123] sm:$0xff]
    %v3401 = vld [vmem:[%s3229 + $0x133] sm:$0xff]
    %v3402 = vlaneseq
    %v3403 = vshrl.u32 %v3402, 7
    %v3404 = vsub.s32 7, %v3403
    %v3405 = vrot.slane %v2185, %v3404
    %v3406 = vmul.f32 %v3386, %v3405
    %v3407 = vmul.f32 %v3387, %v3405
    %v3408 = vmul.f32 %v3388, %v3405
    %v3409 = vmul.f32 %v3389, %v3405
    %v3410 = vmul.f32 %v3390, %v3405
    %v3411 = vmul.f32 %v3391, %v3405
    %v3412 = vmul.f32 %v3392, %v3405
    %v3413 = vmul.f32 %v3393, %v3405
    %v3414 = vmul.f32 %v3394, %v3405
    %v3415 = vmul.f32 %v3395, %v3405
    %v3416 = vmul.f32 %v3396, %v3405
    %v3417 = vmul.f32 %v3397, %v3405
    %v3418 = vmul.f32 %v3398, %v3405
    %v3419 = vmul.f32 %v3399, %v3405
    %v3420 = vmul.f32 %v3400, %v3405
    %v3421 = vmul.f32 %v3401, %v3405
    %v3422 = vadd.f32 %v3370, %v3406
    %v3423 = vadd.f32 %v3371, %v3407
    %v3424 = vadd.f32 %v3372, %v3408
    %v3425 = vadd.f32 %v3373, %v3409
    %v3426 = vadd.f32 %v3374, %v3410
    %v3427 = vadd.f32 %v3375, %v3411
    %v3428 = vadd.f32 %v3376, %v3412
    %v3429 = vadd.f32 %v3377, %v3413
    %v3430 = vadd.f32 %v3378, %v3414
    %v3431 = vadd.f32 %v3379, %v3415
    %v3432 = vadd.f32 %v3380, %v3416
    %v3433 = vadd.f32 %v3381, %v3417
    %v3434 = vadd.f32 %v3382, %v3418
    %v3435 = vadd.f32 %v3383, %v3419
    %v3436 = vadd.f32 %v3384, %v3420
    %v3437 = vadd.f32 %v3385, %v3421
    %v3438 = vld [vmem:[%s3229 + $0x4] sm:$0xff]
    %v3439 = vld [vmem:[%s3229 + $0x14] sm:$0xff]
    %v3440 = vld [vmem:[%s3229 + $0x24] sm:$0xff]
    %v3441 = vld [vmem:[%s3229 + $0x34] sm:$0xff]
    %v3442 = vld [vmem:[%s3229 + $0x44] sm:$0xff]
    %v3443 = vld [vmem:[%s3229 + $0x54] sm:$0xff]
    %v3444 = vld [vmem:[%s3229 + $0x64] sm:$0xff]
    %v3445 = vld [vmem:[%s3229 + $0x74] sm:$0xff]
    %v3446 = vld [vmem:[%s3229 + $0xc4] sm:$0xff]
    %v3447 = vld [vmem:[%s3229 + $0xd4] sm:$0xff]
    %v3448 = vld [vmem:[%s3229 + $0xe4] sm:$0xff]
    %v3449 = vld [vmem:[%s3229 + $0xf4] sm:$0xff]
    %v3450 = vld [vmem:[%s3229 + $0x104] sm:$0xff]
    %v3451 = vld [vmem:[%s3229 + $0x114] sm:$0xff]
    %v3452 = vld [vmem:[%s3229 + $0x124] sm:$0xff]
    %v3453 = vld [vmem:[%s3229 + $0x134] sm:$0xff]
    %v3454 = vlaneseq
    %v3455 = vshrl.u32 %v3454, 7
    %v3456 = vsub.s32 0, %v3455
    %v3457 = vrot.slane %v2186, %v3456
    %v3458 = vmul.f32 %v3438, %v3457
    %v3459 = vmul.f32 %v3439, %v3457
    %v3460 = vmul.f32 %v3440, %v3457
    %v3461 = vmul.f32 %v3441, %v3457
    %v3462 = vmul.f32 %v3442, %v3457
    %v3463 = vmul.f32 %v3443, %v3457
    %v3464 = vmul.f32 %v3444, %v3457
    %v3465 = vmul.f32 %v3445, %v3457
    %v3466 = vmul.f32 %v3446, %v3457
    %v3467 = vmul.f32 %v3447, %v3457
    %v3468 = vmul.f32 %v3448, %v3457
    %v3469 = vmul.f32 %v3449, %v3457
    %v3470 = vmul.f32 %v3450, %v3457
    %v3471 = vmul.f32 %v3451, %v3457
    %v3472 = vmul.f32 %v3452, %v3457
    %v3473 = vmul.f32 %v3453, %v3457
    %v3474 = vadd.f32 %v3422, %v3458
    %v3475 = vadd.f32 %v3423, %v3459
    %v3476 = vadd.f32 %v3424, %v3460
    %v3477 = vadd.f32 %v3425, %v3461
    %v3478 = vadd.f32 %v3426, %v3462
    %v3479 = vadd.f32 %v3427, %v3463
    %v3480 = vadd.f32 %v3428, %v3464
    %v3481 = vadd.f32 %v3429, %v3465
    %v3482 = vadd.f32 %v3430, %v3466
    %v3483 = vadd.f32 %v3431, %v3467
    %v3484 = vadd.f32 %v3432, %v3468
    %v3485 = vadd.f32 %v3433, %v3469
    %v3486 = vadd.f32 %v3434, %v3470
    %v3487 = vadd.f32 %v3435, %v3471
    %v3488 = vadd.f32 %v3436, %v3472
    %v3489 = vadd.f32 %v3437, %v3473
    %v3490 = vld [vmem:[%s6] sm:$0xff]
    %v3492 = vsel %vm1747, %v3474, 0
    %v3495 = vsel %vm1747, %v3475, 0
    %v3498 = vsel %vm1747, %v3476, 0
    %v3501 = vsel %vm1747, %v3477, 0
    %v3504 = vsel %vm1747, %v3478, 0
    %v3507 = vsel %vm1747, %v3479, 0
    %v3510 = vsel %vm1747, %v3480, 0
    %v3513 = vsel %vm1747, %v3481, 0
    %v3516 = vsel %vm1747, %v3482, 0
    %v3519 = vsel %vm1747, %v3483, 0
    %v3522 = vsel %vm1747, %v3484, 0
    %v3525 = vsel %vm1747, %v3485, 0
    %v3528 = vsel %vm1747, %v3486, 0
    %v3531 = vsel %vm1747, %v3487, 0
    %v3534 = vsel %vm1747, %v3488, 0
    %v3537 = vsel %vm1747, %v3489, 0
    %3539 = vmatprep.subr.mxu0 0.0
    %3540 = vmatpush1.msra.mxu0 0.0
    %3541 = vmatprep.subr.mxu0 0.0
    %3542 = vmatpush1.msra.mxu0 0.0
    %3543 = vmatprep.subr.mxu0 0.0
    %3544 = vmatpush1.msra.mxu0 0.0
    %3545 = vmatprep.subr.mxu0 0.0
    %3546 = vmatpush1.msra.mxu0 0.0
    %3547 = vmatprep.subr.mxu0 0.0
    %3548 = vmatpush1.msra.mxu0 0.0
    %3549 = vmatprep.subr.mxu0 0.0
    %3550 = vmatpush1.msra.mxu0 0.0
    %3551 = vmatprep.subr.mxu0 0.0
    %3552 = vmatpush1.msra.mxu0 0.0
    %3553 = vmatprep.subr.mxu0 0.0
    %3554 = vmatpush1.msra.mxu0 0.0
    %3555 = vmatprep.subr.mxu0 0.0
    %3556 = vmatpush1.msra.mxu0 0.0
    %3557 = vmatprep.subr.mxu0 0.0
    %3558 = vmatpush1.msra.mxu0 0.0
    %3559 = vmatprep.subr.mxu0 0.0
    %3560 = vmatpush1.msra.mxu0 0.0
    %3561 = vmatprep.subr.mxu0 0.0
    %3562 = vmatpush1.msra.mxu0 0.0
    %3563 = vmatprep.subr.mxu0 0.0
    %3564 = vmatpush1.msra.mxu0 0.0
    %3565 = vmatprep.subr.mxu0 0.0
    %3566 = vmatpush1.msra.mxu0 0.0
    %3567 = vmatprep.subr.mxu0 0.0
    %3568 = vmatpush1.msra.mxu0 0.0
    %3569 = vmatprep.subr.mxu0 0.0
    %3570 = vmatpush1.msra.mxu0 %v3490
    %3571 = vmatprep.subr.mxu0 0.0
    %3572 = vmatpush2.msra.mxu0 0.0
    %3573 = vmatprep.subr.mxu0 0.0
    %3574 = vmatpush2.msra.mxu0 0.0
    %3575 = vmatprep.subr.mxu0 0.0
    %3576 = vmatpush2.msra.mxu0 0.0
    %3577 = vmatprep.subr.mxu0 0.0
    %3578 = vmatpush2.msra.mxu0 0.0
    %3579 = vmatprep.subr.mxu0 0.0
    %3580 = vmatpush2.msra.mxu0 0.0
    %3581 = vmatprep.subr.mxu0 0.0
    %3582 = vmatpush2.msra.mxu0 0.0
    %3583 = vmatprep.subr.mxu0 0.0
    %3584 = vmatpush2.msra.mxu0 0.0
    %3585 = vmatprep.subr.mxu0 0.0
    %3586 = vmatpush2.msra.mxu0 0.0
    %3587 = vmatprep.subr.mxu0 0.0
    %3588 = vmatpush2.msra.mxu0 0.0
    %3589 = vmatprep.subr.mxu0 0.0
    %3590 = vmatpush2.msra.mxu0 0.0
    %3591 = vmatprep.subr.mxu0 0.0
    %3592 = vmatpush2.msra.mxu0 0.0
    %3593 = vmatprep.subr.mxu0 0.0
    %3594 = vmatpush2.msra.mxu0 0.0
    %3595 = vmatprep.subr.mxu0 0.0
    %3596 = vmatpush2.msra.mxu0 0.0
    %3597 = vmatprep.subr.mxu0 0.0
    %3598 = vmatpush2.msra.mxu0 0.0
    %3599 = vmatprep.subr.mxu0 0.0
    %3600 = vmatpush2.msra.mxu0 0.0
    %3601 = vmatprep.subr.mxu0 0.0
    %3602 = vmatpush2.msra.mxu0 0.0
    %3603 = vmatprep.mubr.f32.mxu0 0.0
    %3604 = vmatmul.mubr.f32.gmra.mxu0 %v3492
    %v3605 = vpop.f32.mrf.mxu0
    %v3606 = vadd.f32 0.0, %v3605
    %v3607 = vpop.f32.mrf.mxu0
    %3608 = vmatprep.mubr.f32.mxu0 0.0
    %3609 = vmatmul.mubr.f32.gmra.mxu0 %v3495
    %v3610 = vpop.f32.mrf.mxu0
    %v3611 = vadd.f32 0.0, %v3610
    %v3612 = vpop.f32.mrf.mxu0
    %3613 = vmatprep.mubr.f32.mxu0 0.0
    %3614 = vmatmul.mubr.f32.gmra.mxu0 %v3498
    %v3615 = vpop.f32.mrf.mxu0
    %v3616 = vadd.f32 0.0, %v3615
    %v3617 = vpop.f32.mrf.mxu0
    %3618 = vmatprep.mubr.f32.mxu0 0.0
    %3619 = vmatmul.mubr.f32.gmra.mxu0 %v3501
    %v3620 = vpop.f32.mrf.mxu0
    %v3621 = vadd.f32 0.0, %v3620
    %v3622 = vpop.f32.mrf.mxu0
    %3623 = vmatprep.mubr.f32.mxu0 0.0
    %3624 = vmatmul.mubr.f32.gmra.mxu0 %v3504
    %v3625 = vpop.f32.mrf.mxu0
    %v3626 = vadd.f32 0.0, %v3625
    %v3627 = vpop.f32.mrf.mxu0
    %3628 = vmatprep.mubr.f32.mxu0 0.0
    %3629 = vmatmul.mubr.f32.gmra.mxu0 %v3507
    %v3630 = vpop.f32.mrf.mxu0
    %v3631 = vadd.f32 0.0, %v3630
    %v3632 = vpop.f32.mrf.mxu0
    %3633 = vmatprep.mubr.f32.mxu0 0.0
    %3634 = vmatmul.mubr.f32.gmra.mxu0 %v3510
    %v3635 = vpop.f32.mrf.mxu0
    %v3636 = vadd.f32 0.0, %v3635
    %v3637 = vpop.f32.mrf.mxu0
    %3638 = vmatprep.mubr.f32.mxu0 0.0
    %3639 = vmatmul.mubr.f32.gmra.mxu0 %v3513
    %v3640 = vpop.f32.mrf.mxu0
    %v3641 = vadd.f32 0.0, %v3640
    %v3642 = vpop.f32.mrf.mxu0
    %3643 = vmatprep.mubr.f32.mxu0 0.0
    %3644 = vmatmul.mubr.f32.gmra.mxu0 %v3516
    %v3645 = vpop.f32.mrf.mxu0
    %v3646 = vadd.f32 0.0, %v3645
    %v3647 = vpop.f32.mrf.mxu0
    %3648 = vmatprep.mubr.f32.mxu0 0.0
    %3649 = vmatmul.mubr.f32.gmra.mxu0 %v3519
    %v3650 = vpop.f32.mrf.mxu0
    %v3651 = vadd.f32 0.0, %v3650
    %v3652 = vpop.f32.mrf.mxu0
    %3653 = vmatprep.mubr.f32.mxu0 0.0
    %3654 = vmatmul.mubr.f32.gmra.mxu0 %v3522
    %v3655 = vpop.f32.mrf.mxu0
    %v3656 = vadd.f32 0.0, %v3655
    %v3657 = vpop.f32.mrf.mxu0
    %3658 = vmatprep.mubr.f32.mxu0 0.0
    %3659 = vmatmul.mubr.f32.gmra.mxu0 %v3525
    %v3660 = vpop.f32.mrf.mxu0
    %v3661 = vadd.f32 0.0, %v3660
    %v3662 = vpop.f32.mrf.mxu0
    %3663 = vmatprep.mubr.f32.mxu0 0.0
    %3664 = vmatmul.mubr.f32.gmra.mxu0 %v3528
    %v3665 = vpop.f32.mrf.mxu0
    %v3666 = vadd.f32 0.0, %v3665
    %v3667 = vpop.f32.mrf.mxu0
    %3668 = vmatprep.mubr.f32.mxu0 0.0
    %3669 = vmatmul.mubr.f32.gmra.mxu0 %v3531
    %v3670 = vpop.f32.mrf.mxu0
    %v3671 = vadd.f32 0.0, %v3670
    %v3672 = vpop.f32.mrf.mxu0
    %3673 = vmatprep.mubr.f32.mxu0 0.0
    %3674 = vmatmul.mubr.f32.gmra.mxu0 %v3534
    %v3675 = vpop.f32.mrf.mxu0
    %v3676 = vadd.f32 0.0, %v3675
    %v3677 = vpop.f32.mrf.mxu0
    %3678 = vmatprep.mubr.f32.mxu0 0.0
    %3679 = vmatmul.mubr.f32.gmra.mxu0 %v3537
    %v3680 = vpop.f32.mrf.mxu0
    %v3681 = vadd.f32 0.0, %v3680
    %v3682 = vpop.f32.mrf.mxu0
    %3683 = vdwg.mxu0
    %v3684 = vsel %vm1747, %v3606, 0.0
    %v3685 = vsel %vm1747, %v3611, 0.0
    %v3686 = vadd.f32 %v3684, %v3685
    %v3687 = vsel %vm1747, %v3616, 0.0
    %v3688 = vadd.f32 %v3686, %v3687
    %v3689 = vsel %vm1747, %v3621, 0.0
    %v3690 = vadd.f32 %v3688, %v3689
    %v3691 = vsel %vm1747, %v3626, 0.0
    %v3692 = vadd.f32 %v3690, %v3691
    %v3693 = vsel %vm1747, %v3631, 0.0
    %v3694 = vadd.f32 %v3692, %v3693
    %v3695 = vsel %vm1747, %v3636, 0.0
    %v3696 = vadd.f32 %v3694, %v3695
    %v3697 = vsel %vm1747, %v3641, 0.0
    %v3698 = vadd.f32 %v3696, %v3697
    %v3699 = vsel %vm1747, %v3646, 0.0
    %v3700 = vadd.f32 %v3698, %v3699
    %v3701 = vsel %vm1747, %v3651, 0.0
    %v3702 = vadd.f32 %v3700, %v3701
    %v3703 = vsel %vm1747, %v3656, 0.0
    %v3704 = vadd.f32 %v3702, %v3703
    %v3705 = vsel %vm1747, %v3661, 0.0
    %v3706 = vadd.f32 %v3704, %v3705
    %v3707 = vsel %vm1747, %v3666, 0.0
    %v3708 = vadd.f32 %v3706, %v3707
    %v3709 = vsel %vm1747, %v3671, 0.0
    %v3710 = vadd.f32 %v3708, %v3709
    %v3711 = vsel %vm1747, %v3676, 0.0
    %v3712 = vadd.f32 %v3710, %v3711
    %v3713 = vsel %vm1747, %v3681, 0.0
    %v3714 = vadd.f32 %v3712, %v3713
    %v3715 = vrot.slane %v3714, 4
    %v3716 = vadd.f32 %v3714, %v3715
    %v3717 = vrot.slane %v3716, 2
    %v3718 = vadd.f32 %v3716, %v3717
    %v3719 = vrot.slane %v3718, 1
    %v3720 = vadd.f32 %v3718, %v3719
    %v3721 = vmul.f32 %v3720, %v1978
    %v3722 = vmul.f32 %v3606, %v3606
    %v3723 = vmul.f32 %v3611, %v3611
    %v3724 = vmul.f32 %v3616, %v3616
    %v3725 = vmul.f32 %v3621, %v3621
    %v3726 = vmul.f32 %v3626, %v3626
    %v3727 = vmul.f32 %v3631, %v3631
    %v3728 = vmul.f32 %v3636, %v3636
    %v3729 = vmul.f32 %v3641, %v3641
    %v3730 = vmul.f32 %v3646, %v3646
    %v3731 = vmul.f32 %v3651, %v3651
    %v3732 = vmul.f32 %v3656, %v3656
    %v3733 = vmul.f32 %v3661, %v3661
    %v3734 = vmul.f32 %v3666, %v3666
    %v3735 = vmul.f32 %v3671, %v3671
    %v3736 = vmul.f32 %v3676, %v3676
    %v3737 = vmul.f32 %v3681, %v3681
    %v3738 = vsel %vm1747, %v3722, 0.0
    %v3739 = vsel %vm1747, %v3723, 0.0
    %v3740 = vadd.f32 %v3738, %v3739
    %v3741 = vsel %vm1747, %v3724, 0.0
    %v3742 = vadd.f32 %v3740, %v3741
    %v3743 = vsel %vm1747, %v3725, 0.0
    %v3744 = vadd.f32 %v3742, %v3743
    %v3745 = vsel %vm1747, %v3726, 0.0
    %v3746 = vadd.f32 %v3744, %v3745
    %v3747 = vsel %vm1747, %v3727, 0.0
    %v3748 = vadd.f32 %v3746, %v3747
    %v3749 = vsel %vm1747, %v3728, 0.0
    %v3750 = vadd.f32 %v3748, %v3749
    %v3751 = vsel %vm1747, %v3729, 0.0
    %v3752 = vadd.f32 %v3750, %v3751
    %v3753 = vsel %vm1747, %v3730, 0.0
    %v3754 = vadd.f32 %v3752, %v3753
    %v3755 = vsel %vm1747, %v3731, 0.0
    %v3756 = vadd.f32 %v3754, %v3755
    %v3757 = vsel %vm1747, %v3732, 0.0
    %v3758 = vadd.f32 %v3756, %v3757
    %v3759 = vsel %vm1747, %v3733, 0.0
    %v3760 = vadd.f32 %v3758, %v3759
    %v3761 = vsel %vm1747, %v3734, 0.0
    %v3762 = vadd.f32 %v3760, %v3761
    %v3763 = vsel %vm1747, %v3735, 0.0
    %v3764 = vadd.f32 %v3762, %v3763
    %v3765 = vsel %vm1747, %v3736, 0.0
    %v3766 = vadd.f32 %v3764, %v3765
    %v3767 = vsel %vm1747, %v3737, 0.0
    %v3768 = vadd.f32 %v3766, %v3767
    %v3769 = vrot.slane %v3768, 4
    %v3770 = vadd.f32 %v3768, %v3769
    %v3771 = vrot.slane %v3770, 2
    %v3772 = vadd.f32 %v3770, %v3771
    %v3773 = vrot.slane %v3772, 1
    %v3774 = vadd.f32 %v3772, %v3773
    %v3775 = vmul.f32 %v3774, %v1978
    %v3776 = vmul.f32 %v3721, %v3721
    %v3777 = vsub.f32 %v3775, %v3776
    %v3778 = vsub.f32 %v3606, %v3721
    %v3779 = vsub.f32 %v3611, %v3721
    %v3780 = vsub.f32 %v3616, %v3721
    %v3781 = vsub.f32 %v3621, %v3721
    %v3782 = vsub.f32 %v3626, %v3721
    %v3783 = vsub.f32 %v3631, %v3721
    %v3784 = vsub.f32 %v3636, %v3721
    %v3785 = vsub.f32 %v3641, %v3721
    %v3786 = vsub.f32 %v3646, %v3721
    %v3787 = vsub.f32 %v3651, %v3721
    %v3788 = vsub.f32 %v3656, %v3721
    %v3789 = vsub.f32 %v3661, %v3721
    %v3790 = vsub.f32 %v3666, %v3721
    %v3791 = vsub.f32 %v3671, %v3721
    %v3792 = vsub.f32 %v3676, %v3721
    %v3793 = vsub.f32 %v3681, %v3721
    %v3794 = vld [vmem:[%s7] sm:$0x1]
    %v3795 = vadd.f32 %v3777, 0.001
    %v3796 = vrsqrt.pop %v3795
    %v3797 = vmul.f32 %v3794, %v3796
    %v3799 = vlaneseq
    %v3800 = vshrl.u32 %v3799, 7
    %v3801 = vsub.s32 0, %v3800
    %v3802 = vrot.slane %v3797, %v3801
    %v3804 = vmul.f32 %v3778, %v3802
    %v3805 = vmul.f32 %v3779, %v3802
    %v3806 = vmul.f32 %v3780, %v3802
    %v3807 = vmul.f32 %v3781, %v3802
    %v3808 = vmul.f32 %v3782, %v3802
    %v3809 = vmul.f32 %v3783, %v3802
    %v3810 = vmul.f32 %v3784, %v3802
    %v3811 = vmul.f32 %v3785, %v3802
    %v3812 = vmul.f32 %v3786, %v3802
    %v3813 = vmul.f32 %v3787, %v3802
    %v3814 = vmul.f32 %v3788, %v3802
    %v3815 = vmul.f32 %v3789, %v3802
    %v3816 = vmul.f32 %v3790, %v3802
    %v3817 = vmul.f32 %v3791, %v3802
    %v3818 = vmul.f32 %v3792, %v3802
    %v3819 = vmul.f32 %v3793, %v3802
    %v3820 = vld [vmem:[%s8] sm:$0x1]
    %v3822 = vlaneseq
    %v3823 = vshrl.u32 %v3822, 7
    %v3824 = vsub.s32 0, %v3823
    %v3825 = vrot.slane %v3820, %v3824
    %v3827 = vadd.f32 %v3804, %v3825
    %v3828 = vadd.f32 %v3805, %v3825
    %v3829 = vadd.f32 %v3806, %v3825
    %v3830 = vadd.f32 %v3807, %v3825
    %v3831 = vadd.f32 %v3808, %v3825
    %v3832 = vadd.f32 %v3809, %v3825
    %v3833 = vadd.f32 %v3810, %v3825
    %v3834 = vadd.f32 %v3811, %v3825
    %v3835 = vadd.f32 %v3812, %v3825
    %v3836 = vadd.f32 %v3813, %v3825
    %v3837 = vadd.f32 %v3814, %v3825
    %v3838 = vadd.f32 %v3815, %v3825
    %v3839 = vadd.f32 %v3816, %v3825
    %v3840 = vadd.f32 %v3817, %v3825
    %v3841 = vadd.f32 %v3818, %v3825
    %v3842 = vadd.f32 %v3819, %v3825
    %3843 = vst.msk [vmem:[#allocation3] sm:$0xff] %vm1747, %v3827
    %3844 = vst.msk [vmem:[#allocation3 + $0x8] sm:$0xff] %vm1747, %v3828
    %3845 = vst.msk [vmem:[#allocation3 + $0x10] sm:$0xff] %vm1747, %v3829
    %3846 = vst.msk [vmem:[#allocation3 + $0x18] sm:$0xff] %vm1747, %v3830
    %3847 = vst.msk [vmem:[#allocation3 + $0x20] sm:$0xff] %vm1747, %v3831
    %3848 = vst.msk [vmem:[#allocation3 + $0x28] sm:$0xff] %vm1747, %v3832
    %3849 = vst.msk [vmem:[#allocation3 + $0x30] sm:$0xff] %vm1747, %v3833
    %3850 = vst.msk [vmem:[#allocation3 + $0x38] sm:$0xff] %vm1747, %v3834
    %3851 = vst.msk [vmem:[#allocation3 + $0x40] sm:$0xff] %vm1747, %v3835
    %3852 = vst.msk [vmem:[#allocation3 + $0x48] sm:$0xff] %vm1747, %v3836
    %3853 = vst.msk [vmem:[#allocation3 + $0x50] sm:$0xff] %vm1747, %v3837
    %3854 = vst.msk [vmem:[#allocation3 + $0x58] sm:$0xff] %vm1747, %v3838
    %3855 = vst.msk [vmem:[#allocation3 + $0x60] sm:$0xff] %vm1747, %v3839
    %3856 = vst.msk [vmem:[#allocation3 + $0x68] sm:$0xff] %vm1747, %v3840
    %3857 = vst.msk [vmem:[#allocation3 + $0x70] sm:$0xff] %vm1747, %v3841
    %3858 = vst.msk [vmem:[#allocation3 + $0x78] sm:$0xff] %vm1747, %v3842
    // Predicated region
    $region38: #{branch_separables.1} parent=1 // pred_check
      _
    $region39: #{branch_separables.1} parent=1 // pred_check_branch
      %3860 = sbr.rel (0) target = $region41
    $region40: #{branch_separables.1} parent=1 // pred_region
      %s3862 = ssub.s32 2048, 2048
      %3863 = vsyncadd [#allocation4], %s3862
      %s3864 = sshll.u32 [#allocation3], 4
      %s3865 = int_to_ptr.vmem [resolvable:$true] %s3864
      %3870 = dma.vmem_to_hbm [thread:$0]  %s3865, 2048, %s9, [#allocation4], 128, 128, 8
    $region41: #{branch_separables.1} parent=1 // pred_fallthru
      _
    // Predicated region
    $region42: #{branch_separables.1} parent=1 // pred_check
      _
    $region43: #{branch_separables.1} parent=1 // pred_check_branch
      %3872 = sbr.rel (0) target = $region45
    $region44: #{branch_separables.1} parent=1 // pred_region
      %3873 = dma.done [#allocation4], 2048
    $region45: #{branch_separables.1} parent=1 // pred_fallthru
      _
    %3874 = vsyncpa [#allocation4], 1

</llo_original>
